<compile_context>
chip_gen: v6e
topology: v6e:2x2x1
jax: 0.10.0
libtpu: 0.0.40
codegen_flags: <defaults>
</compile_context>

<pallas_src>
import math

import numpy as np

import jax
import jax.numpy as jnp
from jax import lax
from jax.experimental import pallas as pl
from jax.experimental.pallas import tpu as pltpu

NEG_SLOPE = 0.01                   # F.leaky_relu / nn.LeakyReLU default
MATMUL_IN_DTYPE = jnp.float32      # set to jnp.bfloat16 for native-MXU inputs


def _leaky(x):
    return jnp.where(x > 0, x, NEG_SLOPE * x)


def _mm(x):
    """Cast a matmul operand to the MXU input dtype (accumulation stays f32)."""
    return x.astype(MATMUL_IN_DTYPE)


# ----------------------------------------------------------------------------
# In-kernel building blocks (operate on values already loaded from VMEM refs)
# ----------------------------------------------------------------------------
def _gcn(pre, cur, adj, w):
    """GraphConvolution: leaky(adj @ (cur @ W)), leaky(adj.T @ (pre @ W))."""
    pre_w = jnp.dot(_mm(pre), _mm(w), preferred_element_type=jnp.float32)        # (Np, D)
    cur_w = jnp.dot(_mm(cur), _mm(w), preferred_element_type=jnp.float32)        # (Nc, D)
    new_pre = jnp.dot(_mm(adj), _mm(cur_w), preferred_element_type=jnp.float32)  # (Np, D)
    # adj.T @ pre_w without materialising the transpose: contract adj's axis 0.
    new_cur = lax.dot_general(_mm(adj), _mm(pre_w), (((0,), (0,)), ((), ())),
                              preferred_element_type=jnp.float32)                # (Nc, D)
    return _leaky(new_pre), _leaky(new_cur)


def _pairwise_mlp(pre, cur, w1, b1, w2, b2, w3, b3_col, w3_row1, b3_1):
    """Vectorised fuckupGCN.MLP: score for every (pre_i - cur_j) pair + new adjacency.

    Returns:
      score_t : (2, Np*Nc) lane-dense scores; column i*Nc + j = pair (i, j) (PyTorch order)
      adj_new : (Np, Nc)   = score channel 1 per pair
    """
    npre, ncur = pre.shape[0], cur.shape[0]
    h1w, h2w = w1.shape[1], w2.shape[1]

    # Layer 1, factored through the pairwise difference (linearity of the Linear):
    #   leaky((pre_i - cur_j) @ W1 + b1) == leaky((pre_i @ W1 + b1) - cur_j @ W1)
    pre_h = jnp.dot(_mm(pre), _mm(w1), preferred_element_type=jnp.float32) + b1  # (Np, H1)
    cur_h = jnp.dot(_mm(cur), _mm(w1), preferred_element_type=jnp.float32)       # (Nc, H1)
    h1 = _leaky(pre_h[:, None, :] - cur_h[None, :, :])                           # (Np, Nc, H1)

    # Layer 2 as a batched matmul, keeping the (Np, Nc) pair structure (needed for adj).
    w2b = jnp.broadcast_to(_mm(w2), (npre, h1w, h2w))
    h2 = jnp.einsum("ijk,ikl->ijl", _mm(h1), w2b,
                    preferred_element_type=jnp.float32) + b2
    h2 = _leaky(h2)                                                              # (Np, Nc, H2)

    # Adjacency = score channel 1 = <h2, W3[1, :]> + b3[1]  (lane reduction; no
    # column gather / transpose / flat->2-D reshape between the GCN layers).
    adj_new = jnp.sum(h2 * w3_row1, axis=-1) + b3_1                              # (Np, Nc)

    # Full score, lane-dense (2, Np*Nc). W3 stays in its PyTorch (out, in) layout so
    # this is a plain rhs-transposed contraction on the MXU.
    h2_flat = h2.reshape(npre * ncur, h2w)                                       # (Np*Nc, H2)
    score_t = lax.dot_general(_mm(w3), _mm(h2_flat), (((1,), (1,)), ((), ())),
                              preferred_element_type=jnp.float32) + b3_col       # (2, Np*Nc)
    return score_t, adj_new


# ----------------------------------------------------------------------------
# The single fused kernel: gc1 -> MLP(fc1) -> gc2 -> MLP(fc2)
# ----------------------------------------------------------------------------
_N_FC_PARAMS = 8   # per fc branch: w1, b1, w2, b2, w3, b3_col, w3_row1, b3_1


def _fused_forward_kernel(pre_ref, cur_ref, adj_ref, gc1_w_ref, gc2_w_ref, *rest):
    fc1 = tuple(r[...] for r in rest[:_N_FC_PARAMS])
    fc2 = tuple(r[...] for r in rest[_N_FC_PARAMS:2 * _N_FC_PARAMS])
    score1_ref, score2_ref, adj2_ref = rest[2 * _N_FC_PARAMS:]

    pre0, cur0, adj0 = pre_ref[...], cur_ref[...], adj_ref[...]

    pre1, cur1 = _gcn(pre0, cur0, adj0, gc1_w_ref[...])
    score1_t, adj1 = _pairwise_mlp(pre1, cur1, *fc1)

    pre2, cur2 = _gcn(pre1, cur1, adj1, gc2_w_ref[...])
    score2_t, adj2 = _pairwise_mlp(pre2, cur2, *fc2)

    score1_ref[...] = score1_t
    score2_ref[...] = score2_t
    adj2_ref[...] = adj2


def fuckup_gcn_forward(params, pre, cur, adj):
    """Returns (score1 (Np*Nc, 2), score2 (Np*Nc, 2), adj (Np, Nc)) like the PyTorch module."""
    npre, ncur = pre.shape[0], cur.shape[0]
    inputs = (pre, cur, adj, params["gc1_w"], params["gc2_w"]) \
        + params["fc1"] + params["fc2"]

    vmem = pl.BlockSpec(memory_space=pltpu.MemorySpace.VMEM)
    score1_t, score2_t, adj_out = pl.pallas_call(
        _fused_forward_kernel,
        out_shape=(
            jax.ShapeDtypeStruct((2, npre * ncur), jnp.float32),
            jax.ShapeDtypeStruct((2, npre * ncur), jnp.float32),
            jax.ShapeDtypeStruct((npre, ncur), jnp.float32),
        ),
        in_specs=[vmem] * len(inputs),
        out_specs=(vmem, vmem, vmem),
    )(*inputs)

    # PyTorch API shape for the scores is (Np*Nc, 2); the kernel emits them lane-dense
    # as (2, Np*Nc), so transpose the tiny result once, outside the kernel.
    return score1_t.T, score2_t.T, adj_out


# ----------------------------------------------------------------------------
# Parameter initialisation + one-time layout prep (hoisted out of the forward)
# ----------------------------------------------------------------------------
def _prep_fc(w1, b1, w2, b2, w3, b3):
    return (
        w1.T,                    # (144, 72)  (in, out) for pre/cur @ W1
        b1.reshape(1, -1),       # (1, 72)
        w2.T,                    # (72, 36)
        b2.reshape(1, -1),       # (1, 36)
        w3,                      # (2, 36)    PyTorch (out, in) == ready for the trans-rhs dot
        b3.reshape(-1, 1),       # (2, 1)
        w3[1:2, :],              # (1, 36)    row producing score[:, 1] -> adjacency
        b3[1].reshape(1, 1),     # (1, 1)
    )


def init_params(key, planes):
    keys = jax.random.split(key, 14)
    k = iter(keys)

    def gc_weight(kk):
        stdv = 1.0 / math.sqrt(planes)
        return jax.random.uniform(kk, (planes, planes), jnp.float32, -stdv, stdv)

    def linear(kk_w, kk_b, in_f, out_f):
        bound = 1.0 / math.sqrt(in_f)
        w = jax.random.uniform(kk_w, (out_f, in_f), jnp.float32, -bound, bound)
        b = jax.random.uniform(kk_b, (out_f,), jnp.float32, -bound, bound)
        return w, b

    params = {"gc1_w": gc_weight(next(k)), "gc2_w": gc_weight(next(k))}
    for name in ("fc1", "fc2"):
        w1, b1 = linear(next(k), next(k), planes, 72)
        w2, b2 = linear(next(k), next(k), 72, 36)
        w3, b3 = linear(next(k), next(k), 36, 2)
        params[name] = _prep_fc(w1, b1, w2, b2, w3, b3)
    return params


# ----------------------------------------------------------------------------
# Pure-JAX transcription of the PyTorch forward (numerical sanity check only)
# ----------------------------------------------------------------------------
def _reference_forward(params, pre, cur, adj):
    def gcn(p, c, a, w):
        return _leaky(a @ (c @ w)), _leaky(a.T @ (p @ w))

    def mlp(fc, p, c):
        w1, b1, w2, b2, w3, b3_col = fc[:6]
        n_p, n_c = p.shape[0], c.shape[0]
        diff = (p[:, None, :] - c[None, :, :]).reshape(n_p * n_c, -1)
        h = _leaky(diff @ w1 + b1)
        h = _leaky(h @ w2 + b2)
        score = h @ w3.T + b3_col.T                       # (Np*Nc, 2)
        return score, score[:, 1].reshape(n_p, n_c)

    pre1, cur1 = gcn(pre, cur, adj, params["gc1_w"])
    s1, adj1 = mlp(params["fc1"], pre1, cur1)
    pre2, cur2 = gcn(pre1, cur1, adj1, params["gc2_w"])
    s2, adj2 = mlp(params["fc2"], pre2, cur2)
    return s1, s2, adj2


if __name__ == "__main__":
    planes = 144          # forced by nn.Linear(144, 72) in fc1/fc2
    Np, Nc = 8, 8         # small number of graph nodes per frame

    key = jax.random.PRNGKey(0)
    k_params, k_pre, k_cur, k_adj = jax.random.split(key, 4)

    params = init_params(k_params, planes)
    pre = jax.random.normal(k_pre, (Np, planes), jnp.float32)
    cur = jax.random.normal(k_cur, (Nc, planes), jnp.float32)
    adj = jax.random.uniform(k_adj, (Np, Nc), jnp.float32)

    score1, score2, adj_out = jax.jit(fuckup_gcn_forward)(params, pre, cur, adj)
    jax.block_until_ready((score1, score2, adj_out))

    assert score1.shape == (Np * Nc, 2)
    assert score2.shape == (Np * Nc, 2)
    assert adj_out.shape == (Np, Nc)

    # Numerical sanity check vs. a pure-JAX transcription of the PyTorch module.
    with jax.default_matmul_precision("highest"):
        ref1, ref2, ref_adj = _reference_forward(params, pre, cur, adj)
    np.testing.assert_allclose(np.asarray(score1), np.asarray(ref1), rtol=2e-2, atol=2e-2)
    np.testing.assert_allclose(np.asarray(score2), np.asarray(ref2), rtol=2e-2, atol=2e-2)
    np.testing.assert_allclose(np.asarray(adj_out), np.asarray(ref_adj), rtol=2e-2, atol=2e-2)

    print("KERNEL_OK")
</pallas_src>

<mosaic_0001>
module attributes {stable_mosaic.version = 11 : i64} {
  func.func @_fused_forward_kernel(%arg0: memref<8x144xf32, #tpu.memory_space<vmem>>, %arg1: memref<8x144xf32, #tpu.memory_space<vmem>>, %arg2: memref<8x8xf32, #tpu.memory_space<vmem>>, %arg3: memref<144x144xf32, #tpu.memory_space<vmem>>, %arg4: memref<144x144xf32, #tpu.memory_space<vmem>>, %arg5: memref<144x72xf32, #tpu.memory_space<vmem>>, %arg6: memref<1x72xf32, #tpu.memory_space<vmem>>, %arg7: memref<72x36xf32, #tpu.memory_space<vmem>>, %arg8: memref<1x36xf32, #tpu.memory_space<vmem>>, %arg9: memref<2x36xf32, #tpu.memory_space<vmem>>, %arg10: memref<2x1xf32, #tpu.memory_space<vmem>>, %arg11: memref<1x36xf32, #tpu.memory_space<vmem>>, %arg12: memref<1x1xf32, #tpu.memory_space<vmem>>, %arg13: memref<144x72xf32, #tpu.memory_space<vmem>>, %arg14: memref<1x72xf32, #tpu.memory_space<vmem>>, %arg15: memref<72x36xf32, #tpu.memory_space<vmem>>, %arg16: memref<1x36xf32, #tpu.memory_space<vmem>>, %arg17: memref<2x36xf32, #tpu.memory_space<vmem>>, %arg18: memref<2x1xf32, #tpu.memory_space<vmem>>, %arg19: memref<1x36xf32, #tpu.memory_space<vmem>>, %arg20: memref<1x1xf32, #tpu.memory_space<vmem>>, %arg21: memref<2x64xf32, #tpu.memory_space<vmem>>, %arg22: memref<2x64xf32, #tpu.memory_space<vmem>>, %arg23: memref<8x8xf32, #tpu.memory_space<vmem>>) attributes {dimension_semantics = [], scalar_prefetch = 0 : i64, scratch_operands = 0 : i64, tpu.core_type = #tpu.core_type<tc>} {
    %c0 = arith.constant 0 : index
    %c0_0 = arith.constant 0 : index
    %0 = vector.load %arg5[%c0, %c0_0] : memref<144x72xf32, #tpu.memory_space<vmem>>, vector<144x72xf32>
    %c0_1 = arith.constant 0 : index
    %c0_2 = arith.constant 0 : index
    %1 = vector.load %arg6[%c0_1, %c0_2] : memref<1x72xf32, #tpu.memory_space<vmem>>, vector<1x72xf32>
    %c0_3 = arith.constant 0 : index
    %c0_4 = arith.constant 0 : index
    %2 = vector.load %arg7[%c0_3, %c0_4] : memref<72x36xf32, #tpu.memory_space<vmem>>, vector<72x36xf32>
    %c0_5 = arith.constant 0 : index
    %c0_6 = arith.constant 0 : index
    %3 = vector.load %arg8[%c0_5, %c0_6] : memref<1x36xf32, #tpu.memory_space<vmem>>, vector<1x36xf32>
    %c0_7 = arith.constant 0 : index
    %c0_8 = arith.constant 0 : index
    %4 = vector.load %arg9[%c0_7, %c0_8] : memref<2x36xf32, #tpu.memory_space<vmem>>, vector<2x36xf32>
    %c0_9 = arith.constant 0 : index
    %c0_10 = arith.constant 0 : index
    %5 = vector.load %arg10[%c0_9, %c0_10] : memref<2x1xf32, #tpu.memory_space<vmem>>, vector<2x1xf32>
    %c0_11 = arith.constant 0 : index
    %c0_12 = arith.constant 0 : index
    %6 = vector.load %arg11[%c0_11, %c0_12] : memref<1x36xf32, #tpu.memory_space<vmem>>, vector<1x36xf32>
    %c0_13 = arith.constant 0 : index
    %c0_14 = arith.constant 0 : index
    %7 = vector.load %arg12[%c0_13, %c0_14] : memref<1x1xf32, #tpu.memory_space<vmem>>, vector<1x1xf32>
    %c0_15 = arith.constant 0 : index
    %c0_16 = arith.constant 0 : index
    %8 = vector.load %arg13[%c0_15, %c0_16] : memref<144x72xf32, #tpu.memory_space<vmem>>, vector<144x72xf32>
    %c0_17 = arith.constant 0 : index
    %c0_18 = arith.constant 0 : index
    %9 = vector.load %arg14[%c0_17, %c0_18] : memref<1x72xf32, #tpu.memory_space<vmem>>, vector<1x72xf32>
    %c0_19 = arith.constant 0 : index
    %c0_20 = arith.constant 0 : index
    %10 = vector.load %arg15[%c0_19, %c0_20] : memref<72x36xf32, #tpu.memory_space<vmem>>, vector<72x36xf32>
    %c0_21 = arith.constant 0 : index
    %c0_22 = arith.constant 0 : index
    %11 = vector.load %arg16[%c0_21, %c0_22] : memref<1x36xf32, #tpu.memory_space<vmem>>, vector<1x36xf32>
    %c0_23 = arith.constant 0 : index
    %c0_24 = arith.constant 0 : index
    %12 = vector.load %arg17[%c0_23, %c0_24] : memref<2x36xf32, #tpu.memory_space<vmem>>, vector<2x36xf32>
    %c0_25 = arith.constant 0 : index
    %c0_26 = arith.constant 0 : index
    %13 = vector.load %arg18[%c0_25, %c0_26] : memref<2x1xf32, #tpu.memory_space<vmem>>, vector<2x1xf32>
    %c0_27 = arith.constant 0 : index
    %c0_28 = arith.constant 0 : index
    %14 = vector.load %arg19[%c0_27, %c0_28] : memref<1x36xf32, #tpu.memory_space<vmem>>, vector<1x36xf32>
    %c0_29 = arith.constant 0 : index
    %c0_30 = arith.constant 0 : index
    %15 = vector.load %arg20[%c0_29, %c0_30] : memref<1x1xf32, #tpu.memory_space<vmem>>, vector<1x1xf32>
    %c0_31 = arith.constant 0 : index
    %c0_32 = arith.constant 0 : index
    %16 = vector.load %arg0[%c0_31, %c0_32] : memref<8x144xf32, #tpu.memory_space<vmem>>, vector<8x144xf32>
    %c0_33 = arith.constant 0 : index
    %c0_34 = arith.constant 0 : index
    %17 = vector.load %arg1[%c0_33, %c0_34] : memref<8x144xf32, #tpu.memory_space<vmem>>, vector<8x144xf32>
    %c0_35 = arith.constant 0 : index
    %c0_36 = arith.constant 0 : index
    %18 = vector.load %arg2[%c0_35, %c0_36] : memref<8x8xf32, #tpu.memory_space<vmem>>, vector<8x8xf32>
    %c0_37 = arith.constant 0 : index
    %c0_38 = arith.constant 0 : index
    %19 = vector.load %arg3[%c0_37, %c0_38] : memref<144x144xf32, #tpu.memory_space<vmem>>, vector<144x144xf32>
    %cst = arith.constant dense<0.000000e+00> : vector<8x144xf32>
    %20 = tpu.matmul %16, %19, %cst {dimension_numbers = #tpu.dot_dimension_numbers<[1], [0], [0], [1], [0, 0, 1, 1], [], []>} : vector<8x144xf32>, vector<144x144xf32>, vector<8x144xf32> -> vector<8x144xf32>
    %cst_39 = arith.constant dense<0.000000e+00> : vector<8x144xf32>
    %21 = tpu.matmul %17, %19, %cst_39 {dimension_numbers = #tpu.dot_dimension_numbers<[1], [0], [0], [1], [0, 0, 1, 1], [], []>} : vector<8x144xf32>, vector<144x144xf32>, vector<8x144xf32> -> vector<8x144xf32>
    %cst_40 = arith.constant dense<0.000000e+00> : vector<8x144xf32>
    %22 = tpu.matmul %18, %21, %cst_40 {dimension_numbers = #tpu.dot_dimension_numbers<[1], [0], [0], [1], [0, 0, 1, 1], [], []>} : vector<8x8xf32>, vector<8x144xf32>, vector<8x144xf32> -> vector<8x144xf32>
    %cst_41 = arith.constant dense<0.000000e+00> : vector<8x144xf32>
    %23 = tpu.matmul %18, %20, %cst_41 {dimension_numbers = #tpu.dot_dimension_numbers<[0], [0], [1], [1], [0, 1, 1, 1], [], []>} : vector<8x8xf32>, vector<8x144xf32>, vector<8x144xf32> -> vector<8x144xf32>
    %cst_42 = arith.constant 0.000000e+00 : f32
    %24 = vector.broadcast %cst_42 : f32 to vector<8x144xf32>
    %25 = arith.cmpf ogt, %22, %24 : vector<8x144xf32>
    %cst_43 = arith.constant 0.00999999977 : f32
    %26 = vector.broadcast %cst_43 : f32 to vector<8x144xf32>
    %27 = arith.mulf %26, %22 : vector<8x144xf32>
    %28 = arith.select %25, %22, %27 : vector<8x144xi1>, vector<8x144xf32>
    %cst_44 = arith.constant 0.000000e+00 : f32
    %29 = vector.broadcast %cst_44 : f32 to vector<8x144xf32>
    %30 = arith.cmpf ogt, %23, %29 : vector<8x144xf32>
    %cst_45 = arith.constant 0.00999999977 : f32
    %31 = vector.broadcast %cst_45 : f32 to vector<8x144xf32>
    %32 = arith.mulf %31, %23 : vector<8x144xf32>
    %33 = arith.select %30, %23, %32 : vector<8x144xi1>, vector<8x144xf32>
    %cst_46 = arith.constant dense<0.000000e+00> : vector<8x72xf32>
    %34 = tpu.matmul %28, %0, %cst_46 {dimension_numbers = #tpu.dot_dimension_numbers<[1], [0], [0], [1], [0, 0, 1, 1], [], []>} : vector<8x144xf32>, vector<144x72xf32>, vector<8x72xf32> -> vector<8x72xf32>
    %35 = vector.broadcast %1 : vector<1x72xf32> to vector<8x72xf32>
    %36 = arith.addf %34, %35 : vector<8x72xf32>
    %cst_47 = arith.constant dense<0.000000e+00> : vector<8x72xf32>
    %37 = tpu.matmul %33, %0, %cst_47 {dimension_numbers = #tpu.dot_dimension_numbers<[1], [0], [0], [1], [0, 0, 1, 1], [], []>} : vector<8x144xf32>, vector<144x72xf32>, vector<8x72xf32> -> vector<8x72xf32>
    %38 = vector.shape_cast %36 : vector<8x72xf32> to vector<8x1x72xf32>
    %39 = vector.shape_cast %37 : vector<8x72xf32> to vector<1x8x72xf32>
    %40 = vector.broadcast %38 : vector<8x1x72xf32> to vector<8x8x72xf32>
    %41 = vector.broadcast %39 : vector<1x8x72xf32> to vector<8x8x72xf32>
    %42 = arith.subf %40, %41 : vector<8x8x72xf32>
    %cst_48 = arith.constant 0.000000e+00 : f32
    %43 = vector.broadcast %cst_48 : f32 to vector<8x8x72xf32>
    %44 = arith.cmpf ogt, %42, %43 : vector<8x8x72xf32>
    %cst_49 = arith.constant 0.00999999977 : f32
    %45 = vector.broadcast %cst_49 : f32 to vector<8x8x72xf32>
    %46 = arith.mulf %45, %42 : vector<8x8x72xf32>
    %47 = arith.select %44, %42, %46 : vector<8x8x72xi1>, vector<8x8x72xf32>
    %48 = vector.shape_cast %2 : vector<72x36xf32> to vector<1x72x36xf32>
    %49 = vector.broadcast %48 : vector<1x72x36xf32> to vector<8x72x36xf32>
    "tpu.trace_start"() <{level = 10 : i32, message = "ijk,ikl->ijl"}> : () -> ()
    %cst_50 = arith.constant dense<0.000000e+00> : vector<8x8x36xf32>
    %50 = tpu.matmul %47, %49, %cst_50 {dimension_numbers = #tpu.dot_dimension_numbers<[2], [1], [1], [2], [0, 0, 0, 1, 1, 2], [0], [0]>} : vector<8x8x72xf32>, vector<8x72x36xf32>, vector<8x8x36xf32> -> vector<8x8x36xf32>
    "tpu.trace_stop"() : () -> ()
    %51 = vector.shape_cast %3 : vector<1x36xf32> to vector<1x1x36xf32>
    %52 = vector.broadcast %51 : vector<1x1x36xf32> to vector<8x8x36xf32>
    %53 = arith.addf %50, %52 : vector<8x8x36xf32>
    %cst_51 = arith.constant 0.000000e+00 : f32
    %54 = vector.broadcast %cst_51 : f32 to vector<8x8x36xf32>
    %55 = arith.cmpf ogt, %53, %54 : vector<8x8x36xf32>
    %cst_52 = arith.constant 0.00999999977 : f32
    %56 = vector.broadcast %cst_52 : f32 to vector<8x8x36xf32>
    %57 = arith.mulf %56, %53 : vector<8x8x36xf32>
    %58 = arith.select %55, %53, %57 : vector<8x8x36xi1>, vector<8x8x36xf32>
    %59 = vector.shape_cast %6 : vector<1x36xf32> to vector<1x1x36xf32>
    %60 = vector.broadcast %59 : vector<1x1x36xf32> to vector<8x8x36xf32>
    %61 = arith.mulf %58, %60 : vector<8x8x36xf32>
    %cst_53 = arith.constant dense<0.000000e+00> : vector<8x8xf32>
    %62 = vector.multi_reduction <add>, %61, %cst_53 [2] : vector<8x8x36xf32> to vector<8x8xf32>
    %63 = vector.broadcast %7 : vector<1x1xf32> to vector<8x8xf32>
    %64 = arith.addf %62, %63 : vector<8x8xf32>
    %65 = vector.shape_cast %58 : vector<8x8x36xf32> to vector<64x36xf32>
    %cst_54 = arith.constant dense<0.000000e+00> : vector<2x64xf32>
    %66 = tpu.matmul %4, %65, %cst_54 {dimension_numbers = #tpu.dot_dimension_numbers<[1], [1], [0], [0], [0, 0, 1, 0], [], []>} : vector<2x36xf32>, vector<64x36xf32>, vector<2x64xf32> -> vector<2x64xf32>
    %67 = vector.broadcast %5 : vector<2x1xf32> to vector<2x64xf32>
    %68 = arith.addf %66, %67 : vector<2x64xf32>
    %c0_55 = arith.constant 0 : index
    %c0_56 = arith.constant 0 : index
    %69 = vector.load %arg4[%c0_55, %c0_56] : memref<144x144xf32, #tpu.memory_space<vmem>>, vector<144x144xf32>
    %cst_57 = arith.constant dense<0.000000e+00> : vector<8x144xf32>
    %70 = tpu.matmul %28, %69, %cst_57 {dimension_numbers = #tpu.dot_dimension_numbers<[1], [0], [0], [1], [0, 0, 1, 1], [], []>} : vector<8x144xf32>, vector<144x144xf32>, vector<8x144xf32> -> vector<8x144xf32>
    %cst_58 = arith.constant dense<0.000000e+00> : vector<8x144xf32>
    %71 = tpu.matmul %33, %69, %cst_58 {dimension_numbers = #tpu.dot_dimension_numbers<[1], [0], [0], [1], [0, 0, 1, 1], [], []>} : vector<8x144xf32>, vector<144x144xf32>, vector<8x144xf32> -> vector<8x144xf32>
    %cst_59 = arith.constant dense<0.000000e+00> : vector<8x144xf32>
    %72 = tpu.matmul %64, %71, %cst_59 {dimension_numbers = #tpu.dot_dimension_numbers<[1], [0], [0], [1], [0, 0, 1, 1], [], []>} : vector<8x8xf32>, vector<8x144xf32>, vector<8x144xf32> -> vector<8x144xf32>
    %cst_60 = arith.constant dense<0.000000e+00> : vector<8x144xf32>
    %73 = tpu.matmul %64, %70, %cst_60 {dimension_numbers = #tpu.dot_dimension_numbers<[0], [0], [1], [1], [0, 1, 1, 1], [], []>} : vector<8x8xf32>, vector<8x144xf32>, vector<8x144xf32> -> vector<8x144xf32>
    %cst_61 = arith.constant 0.000000e+00 : f32
    %74 = vector.broadcast %cst_61 : f32 to vector<8x144xf32>
    %75 = arith.cmpf ogt, %72, %74 : vector<8x144xf32>
    %cst_62 = arith.constant 0.00999999977 : f32
    %76 = vector.broadcast %cst_62 : f32 to vector<8x144xf32>
    %77 = arith.mulf %76, %72 : vector<8x144xf32>
    %78 = arith.select %75, %72, %77 : vector<8x144xi1>, vector<8x144xf32>
    %cst_63 = arith.constant 0.000000e+00 : f32
    %79 = vector.broadcast %cst_63 : f32 to vector<8x144xf32>
    %80 = arith.cmpf ogt, %73, %79 : vector<8x144xf32>
    %cst_64 = arith.constant 0.00999999977 : f32
    %81 = vector.broadcast %cst_64 : f32 to vector<8x144xf32>
    %82 = arith.mulf %81, %73 : vector<8x144xf32>
    %83 = arith.select %80, %73, %82 : vector<8x144xi1>, vector<8x144xf32>
    %cst_65 = arith.constant dense<0.000000e+00> : vector<8x72xf32>
    %84 = tpu.matmul %78, %8, %cst_65 {dimension_numbers = #tpu.dot_dimension_numbers<[1], [0], [0], [1], [0, 0, 1, 1], [], []>} : vector<8x144xf32>, vector<144x72xf32>, vector<8x72xf32> -> vector<8x72xf32>
    %85 = vector.broadcast %9 : vector<1x72xf32> to vector<8x72xf32>
    %86 = arith.addf %84, %85 : vector<8x72xf32>
    %cst_66 = arith.constant dense<0.000000e+00> : vector<8x72xf32>
    %87 = tpu.matmul %83, %8, %cst_66 {dimension_numbers = #tpu.dot_dimension_numbers<[1], [0], [0], [1], [0, 0, 1, 1], [], []>} : vector<8x144xf32>, vector<144x72xf32>, vector<8x72xf32> -> vector<8x72xf32>
    %88 = vector.shape_cast %86 : vector<8x72xf32> to vector<8x1x72xf32>
    %89 = vector.shape_cast %87 : vector<8x72xf32> to vector<1x8x72xf32>
    %90 = vector.broadcast %88 : vector<8x1x72xf32> to vector<8x8x72xf32>
    %91 = vector.broadcast %89 : vector<1x8x72xf32> to vector<8x8x72xf32>
    %92 = arith.subf %90, %91 : vector<8x8x72xf32>
    %cst_67 = arith.constant 0.000000e+00 : f32
    %93 = vector.broadcast %cst_67 : f32 to vector<8x8x72xf32>
    %94 = arith.cmpf ogt, %92, %93 : vector<8x8x72xf32>
    %cst_68 = arith.constant 0.00999999977 : f32
    %95 = vector.broadcast %cst_68 : f32 to vector<8x8x72xf32>
    %96 = arith.mulf %95, %92 : vector<8x8x72xf32>
    %97 = arith.select %94, %92, %96 : vector<8x8x72xi1>, vector<8x8x72xf32>
    %98 = vector.shape_cast %10 : vector<72x36xf32> to vector<1x72x36xf32>
    %99 = vector.broadcast %98 : vector<1x72x36xf32> to vector<8x72x36xf32>
    "tpu.trace_start"() <{level = 10 : i32, message = "ijk,ikl->ijl"}> : () -> ()
    %cst_69 = arith.constant dense<0.000000e+00> : vector<8x8x36xf32>
    %100 = tpu.matmul %97, %99, %cst_69 {dimension_numbers = #tpu.dot_dimension_numbers<[2], [1], [1], [2], [0, 0, 0, 1, 1, 2], [0], [0]>} : vector<8x8x72xf32>, vector<8x72x36xf32>, vector<8x8x36xf32> -> vector<8x8x36xf32>
    "tpu.trace_stop"() : () -> ()
    %101 = vector.shape_cast %11 : vector<1x36xf32> to vector<1x1x36xf32>
    %102 = vector.broadcast %101 : vector<1x1x36xf32> to vector<8x8x36xf32>
    %103 = arith.addf %100, %102 : vector<8x8x36xf32>
    %cst_70 = arith.constant 0.000000e+00 : f32
    %104 = vector.broadcast %cst_70 : f32 to vector<8x8x36xf32>
    %105 = arith.cmpf ogt, %103, %104 : vector<8x8x36xf32>
    %cst_71 = arith.constant 0.00999999977 : f32
    %106 = vector.broadcast %cst_71 : f32 to vector<8x8x36xf32>
    %107 = arith.mulf %106, %103 : vector<8x8x36xf32>
    %108 = arith.select %105, %103, %107 : vector<8x8x36xi1>, vector<8x8x36xf32>
    %109 = vector.shape_cast %14 : vector<1x36xf32> to vector<1x1x36xf32>
    %110 = vector.broadcast %109 : vector<1x1x36xf32> to vector<8x8x36xf32>
    %111 = arith.mulf %108, %110 : vector<8x8x36xf32>
    %cst_72 = arith.constant dense<0.000000e+00> : vector<8x8xf32>
    %112 = vector.multi_reduction <add>, %111, %cst_72 [2] : vector<8x8x36xf32> to vector<8x8xf32>
    %113 = vector.broadcast %15 : vector<1x1xf32> to vector<8x8xf32>
    %114 = arith.addf %112, %113 : vector<8x8xf32>
    %115 = vector.shape_cast %108 : vector<8x8x36xf32> to vector<64x36xf32>
    %cst_73 = arith.constant dense<0.000000e+00> : vector<2x64xf32>
    %116 = tpu.matmul %12, %115, %cst_73 {dimension_numbers = #tpu.dot_dimension_numbers<[1], [1], [0], [0], [0, 0, 1, 0], [], []>} : vector<2x36xf32>, vector<64x36xf32>, vector<2x64xf32> -> vector<2x64xf32>
    %117 = vector.broadcast %13 : vector<2x1xf32> to vector<2x64xf32>
    %118 = arith.addf %116, %117 : vector<2x64xf32>
    %c0_74 = arith.constant 0 : index
    %c0_75 = arith.constant 0 : index
    %119 = vector.load %arg21[%c0_74, %c0_75] : memref<2x64xf32, #tpu.memory_space<vmem>>, vector<2x64xf32>
    tpu.vector_store %arg21[%c0_74, %c0_75], %68 {strides = array<i32>} : memref<2x64xf32, #tpu.memory_space<vmem>>, vector<2x64xf32>,
    %c0_76 = arith.constant 0 : index
    %c0_77 = arith.constant 0 : index
    %120 = vector.load %arg22[%c0_76, %c0_77] : memref<2x64xf32, #tpu.memory_space<vmem>>, vector<2x64xf32>
    tpu.vector_store %arg22[%c0_76, %c0_77], %118 {strides = array<i32>} : memref<2x64xf32, #tpu.memory_space<vmem>>, vector<2x64xf32>,
    %c0_78 = arith.constant 0 : index
    %c0_79 = arith.constant 0 : index
    %121 = vector.load %arg23[%c0_78, %c0_79] : memref<8x8xf32, #tpu.memory_space<vmem>>, vector<8x8xf32>
    tpu.vector_store %arg23[%c0_78, %c0_79], %114 {strides = array<i32>} : memref<8x8xf32, #tpu.memory_space<vmem>>, vector<8x8xf32>,
    return
  }
}

</mosaic_0001>

<llo_original>
// kernel: fuckup_gcn_forward.1
$region0: #{fuckup_gcn_forward.1}
  #allocation0 [shape = 'u32[]', space=smem, size = 0x4, offset = 0x4, fixed_abs, tag = 'smem constant byte address 0x4 - core index']
  #allocation1 [shape = 'u32[144,128]{1,0:T(1,128)}', space=vmem, size = 0x12000, scoped, tag = 'internal scratch']
  #allocation2 [shape = 'f32[1,1]{1,0:T(1,128)S(1)}', space=vmem, size = 0x200, scoped, tag = 'scoped memory for fuckup_gcn_forward.1']
  #allocation3 [shape = 'f32[1,1]{1,0:T(1,128)S(1)}', space=vmem, size = 0x200, scoped, tag = 'scoped memory for fuckup_gcn_forward.1']
  %s0 = inlined_call_operand.vmem [shape: f32[8,144], index: 0, kind: input, shape index: {}]
  %s1 = inlined_call_operand.vmem [shape: f32[8,144], index: 1, kind: input, shape index: {}]
  %s2 = inlined_call_operand.vmem [shape: f32[8,8], index: 2, kind: input, shape index: {}]
  %s3 = inlined_call_operand.hbm [shape: f32[144,144], index: 3, kind: input, shape index: {}]
  %s4 = inlined_call_operand.hbm [shape: f32[144,144], index: 4, kind: input, shape index: {}]
  %s5 = inlined_call_operand.vmem [shape: f32[144,72], index: 5, kind: input, shape index: {}]
  %s6 = inlined_call_operand.vmem [shape: f32[1,72], index: 6, kind: input, shape index: {}]
  %s7 = inlined_call_operand.vmem [shape: f32[72,36], index: 7, kind: input, shape index: {}]
  %s8 = inlined_call_operand.vmem [shape: f32[1,36], index: 8, kind: input, shape index: {}]
  %s9 = inlined_call_operand.vmem [shape: f32[2,36], index: 9, kind: input, shape index: {}]
  %s10 = inlined_call_operand.vmem [shape: f32[2,1], index: 10, kind: input, shape index: {}]
  %s11 = inlined_call_operand.vmem [shape: f32[1,36], index: 11, kind: input, shape index: {}]
  %s12 = inlined_call_operand.<no memory space> [shape: f32[1,1], index: 12, kind: input, shape index: {}]
  %s13 = inlined_call_operand.hbm [shape: f32[144,72], index: 13, kind: input, shape index: {}]
  %s14 = inlined_call_operand.vmem [shape: f32[1,72], index: 14, kind: input, shape index: {}]
  %s15 = inlined_call_operand.vmem [shape: f32[72,36], index: 15, kind: input, shape index: {}]
  %s16 = inlined_call_operand.vmem [shape: f32[1,36], index: 16, kind: input, shape index: {}]
  %s17 = inlined_call_operand.vmem [shape: f32[2,36], index: 17, kind: input, shape index: {}]
  %s18 = inlined_call_operand.vmem [shape: f32[2,1], index: 18, kind: input, shape index: {}]
  %s19 = inlined_call_operand.vmem [shape: f32[1,36], index: 19, kind: input, shape index: {}]
  %s20 = inlined_call_operand.<no memory space> [shape: f32[1,1], index: 20, kind: input, shape index: {}]
  %s21 = inlined_call_operand.hbm [shape: f32[2,64], index: 21, kind: output, shape index: {0}]
  %s22 = inlined_call_operand.hbm [shape: f32[2,64], index: 22, kind: output, shape index: {1}]
  %s23 = inlined_call_operand.hbm [shape: f32[8,8], index: 23, kind: output, shape index: {2}]
  %24 = xla_tuple %s21, %s22, %s23
  %s25 = sld [smem:[#allocation0]]
  $region122: #{fuckup_gcn_forward.1} parent=0
    _
  %s27 = ssub.s32 1, %s25
  %s28 = scalar_select 0, %s27, %s25
  %v29 = vstv %s12
  %30 = vst [vmem:[#allocation2] sm:$0x1] %v29
  %v31 = vstv %s20
  %32 = vst [vmem:[#allocation3] sm:$0x1] %v31
  $region1: #{fuckup_gcn_forward.1} parent=0
    #allocation4 [shape = 'u8[147456]{0}', space=vmem, size = 0x24000, scoped, tag = 'input window, operand 3, single buffered']
    #allocation5 [shape = 's32[1]{0}', space=sflag, size = 0x4, scoped, tag = 'scoped memory for fuckup_gcn_forward.1']
    #allocation6 [shape = 's32[1]{0}', space=sflag, size = 0x4, scoped, tag = 'scoped memory for fuckup_gcn_forward.1']
    #allocation7 [shape = 'u8[147456]{0}', space=vmem, size = 0x24000, scoped, tag = 'input window, operand 4, single buffered']
    #allocation8 [shape = 's32[1]{0}', space=sflag, size = 0x4, scoped, tag = 'scoped memory for fuckup_gcn_forward.1']
    #allocation9 [shape = 'u8[73728]{0}', space=vmem, size = 0x12000, scoped, tag = 'input window, operand 13, single buffered']
    #allocation10 [shape = 'u8[1024]{0}', space=vmem, size = 0x400, scoped, tag = 'output window, operand 0, single buffered']
    #allocation11 [shape = 'u8[1024]{0}', space=vmem, size = 0x400, scoped, tag = 'output window, operand 1, single buffered']
    #allocation12 [shape = 's32[1]{0}', space=sflag, size = 0x4, scoped, tag = 'scoped memory for fuckup_gcn_forward.1']
    #allocation13 [shape = 'u8[4096]{0}', space=vmem, size = 0x1000, scoped, tag = 'output window, operand 2, single buffered']
    %33 = vsyncpa [#allocation5], 0
    %34 = vsyncpa [#allocation8], 0
    %35 = vsyncpa [#allocation6], 0
    %36 = vsyncpa [#allocation12], 0
    // Predicated region
    $region2: #{fuckup_gcn_forward.1} parent=1 // pred_check
      _
    $region3: #{fuckup_gcn_forward.1} parent=1 // pred_check_branch
      %38 = sbr.rel (0) target = $region5
    $region4: #{fuckup_gcn_forward.1} parent=1 // pred_region
      _
    $region5: #{fuckup_gcn_forward.1} parent=1 // pred_fallthru
      _
    // Predicated region
    $region6: #{fuckup_gcn_forward.1} parent=1 // pred_check
      _
    $region7: #{fuckup_gcn_forward.1} parent=1 // pred_check_branch
      %40 = sbr.rel (0) target = $region9
    $region8: #{fuckup_gcn_forward.1} parent=1 // pred_region
      _
    $region9: #{fuckup_gcn_forward.1} parent=1 // pred_fallthru
      _
    // Predicated region
    $region10: #{fuckup_gcn_forward.1} parent=1 // pred_check
      _
    $region11: #{fuckup_gcn_forward.1} parent=1 // pred_check_branch
      %42 = sbr.rel (0) target = $region13
    $region12: #{fuckup_gcn_forward.1} parent=1 // pred_region
      _
    $region13: #{fuckup_gcn_forward.1} parent=1 // pred_fallthru
      _
    // Predicated region
    $region14: #{fuckup_gcn_forward.1} parent=1 // pred_check
      _
    $region15: #{fuckup_gcn_forward.1} parent=1 // pred_check_branch
      %44 = sbr.rel (0) target = $region17
    $region16: #{fuckup_gcn_forward.1} parent=1 // pred_region
      %s46 = ssub.s32 4608, 4608
      %47 = vsyncadd [#allocation5], %s46
      %s48 = sshll.u32 [#allocation4], 4
      %s49 = int_to_ptr.vmem [resolvable:$true] %s48
      %54 = dma.hbm_to_vmem [thread:$0]  %s3, 4608, %s49, [#allocation5], 256, 256, 16
    $region17: #{fuckup_gcn_forward.1} parent=1 // pred_fallthru
      _
    // Predicated region
    $region18: #{fuckup_gcn_forward.1} parent=1 // pred_check
      _
    $region19: #{fuckup_gcn_forward.1} parent=1 // pred_check_branch
      %56 = sbr.rel (0) target = $region21
    $region20: #{fuckup_gcn_forward.1} parent=1 // pred_region
      %s58 = ssub.s32 4608, 4608
      %59 = vsyncadd [#allocation8], %s58
      %s60 = sshll.u32 [#allocation7], 4
      %s61 = int_to_ptr.vmem [resolvable:$true] %s60
      %66 = dma.hbm_to_vmem [thread:$0]  %s4, 4608, %s61, [#allocation8], 256, 256, 16
    $region21: #{fuckup_gcn_forward.1} parent=1 // pred_fallthru
      _
    // Predicated region
    $region22: #{fuckup_gcn_forward.1} parent=1 // pred_check
      _
    $region23: #{fuckup_gcn_forward.1} parent=1 // pred_check_branch
      %68 = sbr.rel (0) target = $region25
    $region24: #{fuckup_gcn_forward.1} parent=1 // pred_region
      _
    $region25: #{fuckup_gcn_forward.1} parent=1 // pred_fallthru
      _
    // Predicated region
    $region26: #{fuckup_gcn_forward.1} parent=1 // pred_check
      _
    $region27: #{fuckup_gcn_forward.1} parent=1 // pred_check_branch
      %70 = sbr.rel (0) target = $region29
    $region28: #{fuckup_gcn_forward.1} parent=1 // pred_region
      _
    $region29: #{fuckup_gcn_forward.1} parent=1 // pred_fallthru
      _
    // Predicated region
    $region30: #{fuckup_gcn_forward.1} parent=1 // pred_check
      _
    $region31: #{fuckup_gcn_forward.1} parent=1 // pred_check_branch
      %72 = sbr.rel (0) target = $region33
    $region32: #{fuckup_gcn_forward.1} parent=1 // pred_region
      _
    $region33: #{fuckup_gcn_forward.1} parent=1 // pred_fallthru
      _
    // Predicated region
    $region34: #{fuckup_gcn_forward.1} parent=1 // pred_check
      _
    $region35: #{fuckup_gcn_forward.1} parent=1 // pred_check_branch
      %74 = sbr.rel (0) target = $region37
    $region36: #{fuckup_gcn_forward.1} parent=1 // pred_region
      _
    $region37: #{fuckup_gcn_forward.1} parent=1 // pred_fallthru
      _
    // Predicated region
    $region38: #{fuckup_gcn_forward.1} parent=1 // pred_check
      _
    $region39: #{fuckup_gcn_forward.1} parent=1 // pred_check_branch
      %76 = sbr.rel (0) target = $region41
    $region40: #{fuckup_gcn_forward.1} parent=1 // pred_region
      _
    $region41: #{fuckup_gcn_forward.1} parent=1 // pred_fallthru
      _
    // Predicated region
    $region42: #{fuckup_gcn_forward.1} parent=1 // pred_check
      _
    $region43: #{fuckup_gcn_forward.1} parent=1 // pred_check_branch
      %78 = sbr.rel (0) target = $region45
    $region44: #{fuckup_gcn_forward.1} parent=1 // pred_region
      _
    $region45: #{fuckup_gcn_forward.1} parent=1 // pred_fallthru
      _
    // Predicated region
    $region46: #{fuckup_gcn_forward.1} parent=1 // pred_check
      _
    $region47: #{fuckup_gcn_forward.1} parent=1 // pred_check_branch
      %80 = sbr.rel (0) target = $region49
    $region48: #{fuckup_gcn_forward.1} parent=1 // pred_region
      _
    $region49: #{fuckup_gcn_forward.1} parent=1 // pred_fallthru
      _
    // Predicated region
    $region50: #{fuckup_gcn_forward.1} parent=1 // pred_check
      _
    $region51: #{fuckup_gcn_forward.1} parent=1 // pred_check_branch
      %82 = sbr.rel (0) target = $region53
    $region52: #{fuckup_gcn_forward.1} parent=1 // pred_region
      _
    $region53: #{fuckup_gcn_forward.1} parent=1 // pred_fallthru
      _
    // Predicated region
    $region54: #{fuckup_gcn_forward.1} parent=1 // pred_check
      _
    $region55: #{fuckup_gcn_forward.1} parent=1 // pred_check_branch
      %84 = sbr.rel (0) target = $region57
    $region56: #{fuckup_gcn_forward.1} parent=1 // pred_region
      %s86 = ssub.s32 2304, 2304
      %87 = vsyncadd [#allocation8], %s86
      %s88 = sshll.u32 [#allocation9], 4
      %s89 = int_to_ptr.vmem [resolvable:$true] %s88
      %94 = dma.hbm_to_vmem [thread:$0]  %s13, 2304, %s89, [#allocation8], 128, 128, 8
    $region57: #{fuckup_gcn_forward.1} parent=1 // pred_fallthru
      _
    // Predicated region
    $region58: #{fuckup_gcn_forward.1} parent=1 // pred_check
      _
    $region59: #{fuckup_gcn_forward.1} parent=1 // pred_check_branch
      %96 = sbr.rel (0) target = $region61
    $region60: #{fuckup_gcn_forward.1} parent=1 // pred_region
      _
    $region61: #{fuckup_gcn_forward.1} parent=1 // pred_fallthru
      _
    // Predicated region
    $region62: #{fuckup_gcn_forward.1} parent=1 // pred_check
      _
    $region63: #{fuckup_gcn_forward.1} parent=1 // pred_check_branch
      %98 = sbr.rel (0) target = $region65
    $region64: #{fuckup_gcn_forward.1} parent=1 // pred_region
      _
    $region65: #{fuckup_gcn_forward.1} parent=1 // pred_fallthru
      _
    // Predicated region
    $region66: #{fuckup_gcn_forward.1} parent=1 // pred_check
      _
    $region67: #{fuckup_gcn_forward.1} parent=1 // pred_check_branch
      %100 = sbr.rel (0) target = $region69
    $region68: #{fuckup_gcn_forward.1} parent=1 // pred_region
      _
    $region69: #{fuckup_gcn_forward.1} parent=1 // pred_fallthru
      _
    // Predicated region
    $region70: #{fuckup_gcn_forward.1} parent=1 // pred_check
      _
    $region71: #{fuckup_gcn_forward.1} parent=1 // pred_check_branch
      %102 = sbr.rel (0) target = $region73
    $region72: #{fuckup_gcn_forward.1} parent=1 // pred_region
      _
    $region73: #{fuckup_gcn_forward.1} parent=1 // pred_fallthru
      _
    // Predicated region
    $region74: #{fuckup_gcn_forward.1} parent=1 // pred_check
      _
    $region75: #{fuckup_gcn_forward.1} parent=1 // pred_check_branch
      %104 = sbr.rel (0) target = $region77
    $region76: #{fuckup_gcn_forward.1} parent=1 // pred_region
      _
    $region77: #{fuckup_gcn_forward.1} parent=1 // pred_fallthru
      _
    // Predicated region
    $region78: #{fuckup_gcn_forward.1} parent=1 // pred_check
      _
    $region79: #{fuckup_gcn_forward.1} parent=1 // pred_check_branch
      %106 = sbr.rel (0) target = $region81
    $region80: #{fuckup_gcn_forward.1} parent=1 // pred_region
      _
    $region81: #{fuckup_gcn_forward.1} parent=1 // pred_fallthru
      _
    // Predicated region
    $region82: #{fuckup_gcn_forward.1} parent=1 // pred_check
      _
    $region83: #{fuckup_gcn_forward.1} parent=1 // pred_check_branch
      %108 = sbr.rel (0) target = $region85
    $region84: #{fuckup_gcn_forward.1} parent=1 // pred_region
      _
    $region85: #{fuckup_gcn_forward.1} parent=1 // pred_fallthru
      _
    // Predicated region
    $region86: #{fuckup_gcn_forward.1} parent=1 // pred_check
      _
    $region87: #{fuckup_gcn_forward.1} parent=1 // pred_check_branch
      %110 = sbr.rel (0) target = $region89
    $region88: #{fuckup_gcn_forward.1} parent=1 // pred_region
      %111 = dma.done [#allocation5], 4608
    $region89: #{fuckup_gcn_forward.1} parent=1 // pred_fallthru
      _
    // Predicated region
    $region90: #{fuckup_gcn_forward.1} parent=1 // pred_check
      _
    $region91: #{fuckup_gcn_forward.1} parent=1 // pred_check_branch
      %113 = sbr.rel (0) target = $region93
    $region92: #{fuckup_gcn_forward.1} parent=1 // pred_region
      %114 = dma.done [#allocation8], 4608
    $region93: #{fuckup_gcn_forward.1} parent=1 // pred_fallthru
      _
    // Predicated region
    $region94: #{fuckup_gcn_forward.1} parent=1 // pred_check
      _
    $region95: #{fuckup_gcn_forward.1} parent=1 // pred_check_branch
      %116 = sbr.rel (0) target = $region97
    $region96: #{fuckup_gcn_forward.1} parent=1 // pred_region
      %117 = dma.done [#allocation8], 2304
    $region97: #{fuckup_gcn_forward.1} parent=1 // pred_fallthru
      _
    %v118 = vld [vmem:[%s5] sm:$0xff]
    %v119 = vld [vmem:[%s5 + $0x8] sm:$0xff]
    %v120 = vld [vmem:[%s5 + $0x10] sm:$0xff]
    %v121 = vld [vmem:[%s5 + $0x18] sm:$0xff]
    %v122 = vld [vmem:[%s5 + $0x20] sm:$0xff]
    %v123 = vld [vmem:[%s5 + $0x28] sm:$0xff]
    %v124 = vld [vmem:[%s5 + $0x30] sm:$0xff]
    %v125 = vld [vmem:[%s5 + $0x38] sm:$0xff]
    %v126 = vld [vmem:[%s5 + $0x40] sm:$0xff]
    %v127 = vld [vmem:[%s5 + $0x48] sm:$0xff]
    %v128 = vld [vmem:[%s5 + $0x50] sm:$0xff]
    %v129 = vld [vmem:[%s5 + $0x58] sm:$0xff]
    %v130 = vld [vmem:[%s5 + $0x60] sm:$0xff]
    %v131 = vld [vmem:[%s5 + $0x68] sm:$0xff]
    %v132 = vld [vmem:[%s5 + $0x70] sm:$0xff]
    %v133 = vld [vmem:[%s5 + $0x78] sm:$0xff]
    %v134 = vld [vmem:[%s5 + $0x80] sm:$0xff]
    %v135 = vld [vmem:[%s5 + $0x88] sm:$0xff]
    %v136 = vld [vmem:[%s6] sm:$0x1]
    %v137 = vld [vmem:[%s7] sm:$0xff]
    %v138 = vld [vmem:[%s7 + $0x8] sm:$0xff]
    %v139 = vld [vmem:[%s7 + $0x10] sm:$0xff]
    %v140 = vld [vmem:[%s7 + $0x18] sm:$0xff]
    %v141 = vld [vmem:[%s7 + $0x20] sm:$0xff]
    %v142 = vld [vmem:[%s7 + $0x28] sm:$0xff]
    %v143 = vld [vmem:[%s7 + $0x30] sm:$0xff]
    %v144 = vld [vmem:[%s7 + $0x38] sm:$0xff]
    %v145 = vld [vmem:[%s7 + $0x40] sm:$0xff]
    %v146 = vld [vmem:[%s8] sm:$0x1]
    %v147 = vld [vmem:[%s9] sm:$0x3]
    %v148 = vld [vmem:[%s10] sm:$0x3]
    %v149 = vld [vmem:[%s11] sm:$0x1]
    %v150 = vld [vmem:[#allocation2] sm:$0x1]
    %v151 = vld [vmem:[#allocation9] sm:$0xff]
    %v152 = vld [vmem:[#allocation9 + $0x8] sm:$0xff]
    %v153 = vld [vmem:[#allocation9 + $0x10] sm:$0xff]
    %v154 = vld [vmem:[#allocation9 + $0x18] sm:$0xff]
    %v155 = vld [vmem:[#allocation9 + $0x20] sm:$0xff]
    %v156 = vld [vmem:[#allocation9 + $0x28] sm:$0xff]
    %v157 = vld [vmem:[#allocation9 + $0x30] sm:$0xff]
    %v158 = vld [vmem:[#allocation9 + $0x38] sm:$0xff]
    %v159 = vld [vmem:[#allocation9 + $0x40] sm:$0xff]
    %v160 = vld [vmem:[#allocation9 + $0x48] sm:$0xff]
    %v161 = vld [vmem:[#allocation9 + $0x50] sm:$0xff]
    %v162 = vld [vmem:[#allocation9 + $0x58] sm:$0xff]
    %v163 = vld [vmem:[#allocation9 + $0x60] sm:$0xff]
    %v164 = vld [vmem:[#allocation9 + $0x68] sm:$0xff]
    %v165 = vld [vmem:[#allocation9 + $0x70] sm:$0xff]
    %v166 = vld [vmem:[#allocation9 + $0x78] sm:$0xff]
    %v167 = vld [vmem:[#allocation9 + $0x80] sm:$0xff]
    %v168 = vld [vmem:[#allocation9 + $0x88] sm:$0xff]
    %v169 = vld [vmem:[%s14] sm:$0x1]
    %v170 = vld [vmem:[%s15] sm:$0xff]
    %v171 = vld [vmem:[%s15 + $0x8] sm:$0xff]
    %v172 = vld [vmem:[%s15 + $0x10] sm:$0xff]
    %v173 = vld [vmem:[%s15 + $0x18] sm:$0xff]
    %v174 = vld [vmem:[%s15 + $0x20] sm:$0xff]
    %v175 = vld [vmem:[%s15 + $0x28] sm:$0xff]
    %v176 = vld [vmem:[%s15 + $0x30] sm:$0xff]
    %v177 = vld [vmem:[%s15 + $0x38] sm:$0xff]
    %v178 = vld [vmem:[%s15 + $0x40] sm:$0xff]
    %v179 = vld [vmem:[%s16] sm:$0x1]
    %v180 = vld [vmem:[%s17] sm:$0x3]
    %v181 = vld [vmem:[%s18] sm:$0x3]
    %v182 = vld [vmem:[%s19] sm:$0x1]
    %v183 = vld [vmem:[#allocation3] sm:$0x1]
    %v184 = vld [vmem:[%s0] sm:$0xff]
    %v185 = vld [vmem:[%s0 + $0x8] sm:$0xff]
    %v186 = vld [vmem:[%s1] sm:$0xff]
    %v187 = vld [vmem:[%s1 + $0x8] sm:$0xff]
    %v188 = vld [vmem:[%s2] sm:$0xff]
    %v189 = vld [vmem:[#allocation4] sm:$0xff]
    %v190 = vld [vmem:[#allocation4 + $0x8] sm:$0xff]
    %v191 = vld [vmem:[#allocation4 + $0x10] sm:$0xff]
    %v192 = vld [vmem:[#allocation4 + $0x18] sm:$0xff]
    %v193 = vld [vmem:[#allocation4 + $0x20] sm:$0xff]
    %v194 = vld [vmem:[#allocation4 + $0x28] sm:$0xff]
    %v195 = vld [vmem:[#allocation4 + $0x30] sm:$0xff]
    %v196 = vld [vmem:[#allocation4 + $0x38] sm:$0xff]
    %v197 = vld [vmem:[#allocation4 + $0x40] sm:$0xff]
    %v198 = vld [vmem:[#allocation4 + $0x48] sm:$0xff]
    %v199 = vld [vmem:[#allocation4 + $0x50] sm:$0xff]
    %v200 = vld [vmem:[#allocation4 + $0x58] sm:$0xff]
    %v201 = vld [vmem:[#allocation4 + $0x60] sm:$0xff]
    %v202 = vld [vmem:[#allocation4 + $0x68] sm:$0xff]
    %v203 = vld [vmem:[#allocation4 + $0x70] sm:$0xff]
    %v204 = vld [vmem:[#allocation4 + $0x78] sm:$0xff]
    %v205 = vld [vmem:[#allocation4 + $0x80] sm:$0xff]
    %v206 = vld [vmem:[#allocation4 + $0x88] sm:$0xff]
    %v207 = vld [vmem:[#allocation4 + $0x90] sm:$0xff]
    %v208 = vld [vmem:[#allocation4 + $0x98] sm:$0xff]
    %v209 = vld [vmem:[#allocation4 + $0xa0] sm:$0xff]
    %v210 = vld [vmem:[#allocation4 + $0xa8] sm:$0xff]
    %v211 = vld [vmem:[#allocation4 + $0xb0] sm:$0xff]
    %v212 = vld [vmem:[#allocation4 + $0xb8] sm:$0xff]
    %v213 = vld [vmem:[#allocation4 + $0xc0] sm:$0xff]
    %v214 = vld [vmem:[#allocation4 + $0xc8] sm:$0xff]
    %v215 = vld [vmem:[#allocation4 + $0xd0] sm:$0xff]
    %v216 = vld [vmem:[#allocation4 + $0xd8] sm:$0xff]
    %v217 = vld [vmem:[#allocation4 + $0xe0] sm:$0xff]
    %v218 = vld [vmem:[#allocation4 + $0xe8] sm:$0xff]
    %v219 = vld [vmem:[#allocation4 + $0xf0] sm:$0xff]
    %v220 = vld [vmem:[#allocation4 + $0xf8] sm:$0xff]
    %v221 = vld [vmem:[#allocation4 + $0x100] sm:$0xff]
    %v222 = vld [vmem:[#allocation4 + $0x108] sm:$0xff]
    %v223 = vld [vmem:[#allocation4 + $0x110] sm:$0xff]
    %v224 = vld [vmem:[#allocation4 + $0x118] sm:$0xff]
    %vm225 = vcmask 130048
    %v227 = vsel %vm225, %v185, 0
    %229 = vmatprep.subr.mxu0 %v220
    %230 = vmatpush1.msra.mxu0 %v219
    %231 = vmatprep.subr.mxu0 %v218
    %232 = vmatpush1.msra.mxu0 %v217
    %233 = vmatprep.subr.mxu0 %v216
    %234 = vmatpush1.msra.mxu0 %v215
    %235 = vmatprep.subr.mxu0 %v214
    %236 = vmatpush1.msra.mxu0 %v213
    %237 = vmatprep.subr.mxu0 %v212
    %238 = vmatpush1.msra.mxu0 %v211
    %239 = vmatprep.subr.mxu0 %v210
    %240 = vmatpush1.msra.mxu0 %v209
    %241 = vmatprep.subr.mxu0 %v208
    %242 = vmatpush1.msra.mxu0 %v207
    %243 = vmatprep.subr.mxu0 %v206
    %244 = vmatpush1.msra.mxu0 %v205
    %245 = vmatprep.subr.mxu0 %v204
    %246 = vmatpush1.msra.mxu0 %v203
    %247 = vmatprep.subr.mxu0 %v202
    %248 = vmatpush1.msra.mxu0 %v201
    %249 = vmatprep.subr.mxu0 %v200
    %250 = vmatpush1.msra.mxu0 %v199
    %251 = vmatprep.subr.mxu0 %v198
    %252 = vmatpush1.msra.mxu0 %v197
    %253 = vmatprep.subr.mxu0 %v196
    %254 = vmatpush1.msra.mxu0 %v195
    %255 = vmatprep.subr.mxu0 %v194
    %256 = vmatpush1.msra.mxu0 %v193
    %257 = vmatprep.subr.mxu0 %v192
    %258 = vmatpush1.msra.mxu0 %v191
    %259 = vmatprep.subr.mxu0 %v190
    %260 = vmatpush1.msra.mxu0 %v189
    %261 = vmatprep.subr.mxu0 0.0
    %262 = vmatpush2.msra.mxu0 0.0
    %263 = vmatprep.subr.mxu0 0.0
    %264 = vmatpush2.msra.mxu0 0.0
    %265 = vmatprep.subr.mxu0 0.0
    %266 = vmatpush2.msra.mxu0 0.0
    %267 = vmatprep.subr.mxu0 0.0
    %268 = vmatpush2.msra.mxu0 0.0
    %269 = vmatprep.subr.mxu0 0.0
    %270 = vmatpush2.msra.mxu0 0.0
    %271 = vmatprep.subr.mxu0 0.0
    %272 = vmatpush2.msra.mxu0 0.0
    %273 = vmatprep.subr.mxu0 0.0
    %274 = vmatpush2.msra.mxu0 0.0
    %275 = vmatprep.subr.mxu0 0.0
    %276 = vmatpush2.msra.mxu0 0.0
    %277 = vmatprep.subr.mxu0 0.0
    %278 = vmatpush2.msra.mxu0 0.0
    %279 = vmatprep.subr.mxu0 0.0
    %280 = vmatpush2.msra.mxu0 0.0
    %281 = vmatprep.subr.mxu0 0.0
    %282 = vmatpush2.msra.mxu0 0.0
    %283 = vmatprep.subr.mxu0 0.0
    %284 = vmatpush2.msra.mxu0 0.0
    %285 = vmatprep.subr.mxu0 0.0
    %286 = vmatpush2.msra.mxu0 0.0
    %287 = vmatprep.subr.mxu0 0.0
    %288 = vmatpush2.msra.mxu0 0.0
    %289 = vmatprep.subr.mxu0 %v224
    %290 = vmatpush2.msra.mxu0 %v223
    %291 = vmatprep.subr.mxu0 %v222
    %292 = vmatpush2.msra.mxu0 %v221
    %293 = vmatprep.mubr.f32.mxu0 %v227
    %294 = vmatmul.mubr.f32.gmra.mxu0 %v184
    %v295 = vpop.f32.mrf.mxu0
    %v296 = vadd.f32 0.0, %v295
    %v297 = vpop.f32.mrf.mxu0
    %v298 = vadd.f32 0.0, %v297
    %299 = vdwg.mxu0
    %v301 = vsel %vm225, %v187, 0
    %303 = vmatprep.subr.mxu0 %v220
    %304 = vmatpush1.msra.mxu0 %v219
    %305 = vmatprep.subr.mxu0 %v218
    %306 = vmatpush1.msra.mxu0 %v217
    %307 = vmatprep.subr.mxu0 %v216
    %308 = vmatpush1.msra.mxu0 %v215
    %309 = vmatprep.subr.mxu0 %v214
    %310 = vmatpush1.msra.mxu0 %v213
    %311 = vmatprep.subr.mxu0 %v212
    %312 = vmatpush1.msra.mxu0 %v211
    %313 = vmatprep.subr.mxu0 %v210
    %314 = vmatpush1.msra.mxu0 %v209
    %315 = vmatprep.subr.mxu0 %v208
    %316 = vmatpush1.msra.mxu0 %v207
    %317 = vmatprep.subr.mxu0 %v206
    %318 = vmatpush1.msra.mxu0 %v205
    %319 = vmatprep.subr.mxu0 %v204
    %320 = vmatpush1.msra.mxu0 %v203
    %321 = vmatprep.subr.mxu0 %v202
    %322 = vmatpush1.msra.mxu0 %v201
    %323 = vmatprep.subr.mxu0 %v200
    %324 = vmatpush1.msra.mxu0 %v199
    %325 = vmatprep.subr.mxu0 %v198
    %326 = vmatpush1.msra.mxu0 %v197
    %327 = vmatprep.subr.mxu0 %v196
    %328 = vmatpush1.msra.mxu0 %v195
    %329 = vmatprep.subr.mxu0 %v194
    %330 = vmatpush1.msra.mxu0 %v193
    %331 = vmatprep.subr.mxu0 %v192
    %332 = vmatpush1.msra.mxu0 %v191
    %333 = vmatprep.subr.mxu0 %v190
    %334 = vmatpush1.msra.mxu0 %v189
    %335 = vmatprep.subr.mxu0 0.0
    %336 = vmatpush2.msra.mxu0 0.0
    %337 = vmatprep.subr.mxu0 0.0
    %338 = vmatpush2.msra.mxu0 0.0
    %339 = vmatprep.subr.mxu0 0.0
    %340 = vmatpush2.msra.mxu0 0.0
    %341 = vmatprep.subr.mxu0 0.0
    %342 = vmatpush2.msra.mxu0 0.0
    %343 = vmatprep.subr.mxu0 0.0
    %344 = vmatpush2.msra.mxu0 0.0
    %345 = vmatprep.subr.mxu0 0.0
    %346 = vmatpush2.msra.mxu0 0.0
    %347 = vmatprep.subr.mxu0 0.0
    %348 = vmatpush2.msra.mxu0 0.0
    %349 = vmatprep.subr.mxu0 0.0
    %350 = vmatpush2.msra.mxu0 0.0
    %351 = vmatprep.subr.mxu0 0.0
    %352 = vmatpush2.msra.mxu0 0.0
    %353 = vmatprep.subr.mxu0 0.0
    %354 = vmatpush2.msra.mxu0 0.0
    %355 = vmatprep.subr.mxu0 0.0
    %356 = vmatpush2.msra.mxu0 0.0
    %357 = vmatprep.subr.mxu0 0.0
    %358 = vmatpush2.msra.mxu0 0.0
    %359 = vmatprep.subr.mxu0 0.0
    %360 = vmatpush2.msra.mxu0 0.0
    %361 = vmatprep.subr.mxu0 0.0
    %362 = vmatpush2.msra.mxu0 0.0
    %363 = vmatprep.subr.mxu0 %v224
    %364 = vmatpush2.msra.mxu0 %v223
    %365 = vmatprep.subr.mxu0 %v222
    %366 = vmatpush2.msra.mxu0 %v221
    %367 = vmatprep.mubr.f32.mxu0 %v301
    %368 = vmatmul.mubr.f32.gmra.mxu0 %v186
    %v369 = vpop.f32.mrf.mxu0
    %v370 = vadd.f32 0.0, %v369
    %v371 = vpop.f32.mrf.mxu0
    %v372 = vadd.f32 0.0, %v371
    %373 = vdwg.mxu0
    %vm374 = vcmask 64512
    %v376 = vsel %vm374, %v188, 0
    %378 = vmatprep.subr.mxu0 0.0
    %379 = vmatpush1.msra.mxu0 0.0
    %380 = vmatprep.subr.mxu0 0.0
    %381 = vmatpush1.msra.mxu0 0.0
    %382 = vmatprep.subr.mxu0 0.0
    %383 = vmatpush1.msra.mxu0 0.0
    %384 = vmatprep.subr.mxu0 0.0
    %385 = vmatpush1.msra.mxu0 0.0
    %386 = vmatprep.subr.mxu0 0.0
    %387 = vmatpush1.msra.mxu0 0.0
    %388 = vmatprep.subr.mxu0 0.0
    %389 = vmatpush1.msra.mxu0 0.0
    %390 = vmatprep.subr.mxu0 0.0
    %391 = vmatpush1.msra.mxu0 0.0
    %392 = vmatprep.subr.mxu0 0.0
    %393 = vmatpush1.msra.mxu0 0.0
    %394 = vmatprep.subr.mxu0 0.0
    %395 = vmatpush1.msra.mxu0 0.0
    %396 = vmatprep.subr.mxu0 0.0
    %397 = vmatpush1.msra.mxu0 0.0
    %398 = vmatprep.subr.mxu0 0.0
    %399 = vmatpush1.msra.mxu0 0.0
    %400 = vmatprep.subr.mxu0 0.0
    %401 = vmatpush1.msra.mxu0 0.0
    %402 = vmatprep.subr.mxu0 0.0
    %403 = vmatpush1.msra.mxu0 0.0
    %404 = vmatprep.subr.mxu0 0.0
    %405 = vmatpush1.msra.mxu0 0.0
    %406 = vmatprep.subr.mxu0 0.0
    %407 = vmatpush1.msra.mxu0 0.0
    %408 = vmatprep.subr.mxu0 %v372
    %409 = vmatpush1.msra.mxu0 %v370
    %410 = vmatprep.subr.mxu0 0.0
    %411 = vmatpush2.msra.mxu0 0.0
    %412 = vmatprep.subr.mxu0 0.0
    %413 = vmatpush2.msra.mxu0 0.0
    %414 = vmatprep.subr.mxu0 0.0
    %415 = vmatpush2.msra.mxu0 0.0
    %416 = vmatprep.subr.mxu0 0.0
    %417 = vmatpush2.msra.mxu0 0.0
    %418 = vmatprep.subr.mxu0 0.0
    %419 = vmatpush2.msra.mxu0 0.0
    %420 = vmatprep.subr.mxu0 0.0
    %421 = vmatpush2.msra.mxu0 0.0
    %422 = vmatprep.subr.mxu0 0.0
    %423 = vmatpush2.msra.mxu0 0.0
    %424 = vmatprep.subr.mxu0 0.0
    %425 = vmatpush2.msra.mxu0 0.0
    %426 = vmatprep.subr.mxu0 0.0
    %427 = vmatpush2.msra.mxu0 0.0
    %428 = vmatprep.subr.mxu0 0.0
    %429 = vmatpush2.msra.mxu0 0.0
    %430 = vmatprep.subr.mxu0 0.0
    %431 = vmatpush2.msra.mxu0 0.0
    %432 = vmatprep.subr.mxu0 0.0
    %433 = vmatpush2.msra.mxu0 0.0
    %434 = vmatprep.subr.mxu0 0.0
    %435 = vmatpush2.msra.mxu0 0.0
    %436 = vmatprep.subr.mxu0 0.0
    %437 = vmatpush2.msra.mxu0 0.0
    %438 = vmatprep.subr.mxu0 0.0
    %439 = vmatpush2.msra.mxu0 0.0
    %440 = vmatprep.subr.mxu0 0.0
    %441 = vmatpush2.msra.mxu0 0.0
    %442 = vmatprep.mubr.f32.mxu0 0.0
    %443 = vmatmul.mubr.f32.gmra.mxu0 %v376
    %v444 = vpop.f32.mrf.mxu0
    %v445 = vadd.f32 0.0, %v444
    %v446 = vpop.f32.mrf.mxu0
    %v447 = vadd.f32 0.0, %v446
    %448 = vdwg.mxu0
    %449 = vxpose.xlu0.b32.start [1/16] %v188, 128
    %450 = vxpose.xlu0.b32.cont [2/16] 0.0, 128
    %451 = vxpose.xlu0.b32.cont [3/16] 0.0, 128
    %452 = vxpose.xlu0.b32.cont [4/16] 0.0, 128
    %453 = vxpose.xlu0.b32.cont [5/16] 0.0, 128
    %454 = vxpose.xlu0.b32.cont [6/16] 0.0, 128
    %455 = vxpose.xlu0.b32.cont [7/16] 0.0, 128
    %456 = vxpose.xlu0.b32.cont [8/16] 0.0, 128
    %457 = vxpose.xlu0.b32.cont [9/16] 0.0, 128
    %458 = vxpose.xlu0.b32.cont [10/16] 0.0, 128
    %459 = vxpose.xlu0.b32.cont [11/16] 0.0, 128
    %460 = vxpose.xlu0.b32.cont [12/16] 0.0, 128
    %461 = vxpose.xlu0.b32.cont [13/16] 0.0, 128
    %462 = vxpose.xlu0.b32.cont [14/16] 0.0, 128
    %463 = vxpose.xlu0.b32.cont [15/16] 0.0, 128
    %464 = vxpose.xlu0.b32.end [16/16] 0.0, 128
    %v465 = vpop.trf.xlu0
    %v466 = vpop.trf.xlu0
    %v467 = vpop.trf.xlu0
    %v468 = vpop.trf.xlu0
    %v469 = vpop.trf.xlu0
    %v470 = vpop.trf.xlu0
    %v471 = vpop.trf.xlu0
    %v472 = vpop.trf.xlu0
    %v473 = vpop.trf.xlu0
    %v474 = vpop.trf.xlu0
    %v475 = vpop.trf.xlu0
    %v476 = vpop.trf.xlu0
    %v477 = vpop.trf.xlu0
    %v478 = vpop.trf.xlu0
    %v479 = vpop.trf.xlu0
    %v480 = vpop.trf.xlu0
    %v482 = vsel %vm374, %v465, 0
    %484 = vmatprep.subr.mxu0 0.0
    %485 = vmatpush1.msra.mxu0 0.0
    %486 = vmatprep.subr.mxu0 0.0
    %487 = vmatpush1.msra.mxu0 0.0
    %488 = vmatprep.subr.mxu0 0.0
    %489 = vmatpush1.msra.mxu0 0.0
    %490 = vmatprep.subr.mxu0 0.0
    %491 = vmatpush1.msra.mxu0 0.0
    %492 = vmatprep.subr.mxu0 0.0
    %493 = vmatpush1.msra.mxu0 0.0
    %494 = vmatprep.subr.mxu0 0.0
    %495 = vmatpush1.msra.mxu0 0.0
    %496 = vmatprep.subr.mxu0 0.0
    %497 = vmatpush1.msra.mxu0 0.0
    %498 = vmatprep.subr.mxu0 0.0
    %499 = vmatpush1.msra.mxu0 0.0
    %500 = vmatprep.subr.mxu0 0.0
    %501 = vmatpush1.msra.mxu0 0.0
    %502 = vmatprep.subr.mxu0 0.0
    %503 = vmatpush1.msra.mxu0 0.0
    %504 = vmatprep.subr.mxu0 0.0
    %505 = vmatpush1.msra.mxu0 0.0
    %506 = vmatprep.subr.mxu0 0.0
    %507 = vmatpush1.msra.mxu0 0.0
    %508 = vmatprep.subr.mxu0 0.0
    %509 = vmatpush1.msra.mxu0 0.0
    %510 = vmatprep.subr.mxu0 0.0
    %511 = vmatpush1.msra.mxu0 0.0
    %512 = vmatprep.subr.mxu0 0.0
    %513 = vmatpush1.msra.mxu0 0.0
    %514 = vmatprep.subr.mxu0 %v298
    %515 = vmatpush1.msra.mxu0 %v296
    %516 = vmatprep.subr.mxu0 0.0
    %517 = vmatpush2.msra.mxu0 0.0
    %518 = vmatprep.subr.mxu0 0.0
    %519 = vmatpush2.msra.mxu0 0.0
    %520 = vmatprep.subr.mxu0 0.0
    %521 = vmatpush2.msra.mxu0 0.0
    %522 = vmatprep.subr.mxu0 0.0
    %523 = vmatpush2.msra.mxu0 0.0
    %524 = vmatprep.subr.mxu0 0.0
    %525 = vmatpush2.msra.mxu0 0.0
    %526 = vmatprep.subr.mxu0 0.0
    %527 = vmatpush2.msra.mxu0 0.0
    %528 = vmatprep.subr.mxu0 0.0
    %529 = vmatpush2.msra.mxu0 0.0
    %530 = vmatprep.subr.mxu0 0.0
    %531 = vmatpush2.msra.mxu0 0.0
    %532 = vmatprep.subr.mxu0 0.0
    %533 = vmatpush2.msra.mxu0 0.0
    %534 = vmatprep.subr.mxu0 0.0
    %535 = vmatpush2.msra.mxu0 0.0
    %536 = vmatprep.subr.mxu0 0.0
    %537 = vmatpush2.msra.mxu0 0.0
    %538 = vmatprep.subr.mxu0 0.0
    %539 = vmatpush2.msra.mxu0 0.0
    %540 = vmatprep.subr.mxu0 0.0
    %541 = vmatpush2.msra.mxu0 0.0
    %542 = vmatprep.subr.mxu0 0.0
    %543 = vmatpush2.msra.mxu0 0.0
    %544 = vmatprep.subr.mxu0 0.0
    %545 = vmatpush2.msra.mxu0 0.0
    %546 = vmatprep.subr.mxu0 0.0
    %547 = vmatpush2.msra.mxu0 0.0
    %548 = vmatprep.mubr.f32.mxu0 0.0
    %549 = vmatmul.mubr.f32.gmra.mxu0 %v482
    %v550 = vpop.f32.mrf.mxu0
    %v551 = vadd.f32 0.0, %v550
    %v552 = vpop.f32.mrf.mxu0
    %v553 = vadd.f32 0.0, %v552
    %554 = vdwg.mxu0
    %vm555 = vcmp.gt.f32.partialorder %v445, 0.0
    %vm556 = vcmp.gt.f32.partialorder %v447, 0.0
    %v557 = vmul.f32 %v445, 0.01
    %v558 = vmul.f32 %v447, 0.01
    %v559 = vsel %vm555, %v445, %v557
    %v560 = vsel %vm556, %v447, %v558
    %vm561 = vcmp.gt.f32.partialorder %v551, 0.0
    %vm562 = vcmp.gt.f32.partialorder %v553, 0.0
    %v563 = vmul.f32 %v551, 0.01
    %v564 = vmul.f32 %v553, 0.01
    %v565 = vsel %vm561, %v551, %v563
    %v566 = vsel %vm562, %v553, %v564
    %v568 = vlaneseq
    %v569 = vshrl.u32 %v568, 7
    %v570 = vsub.s32 0, %v569
    %v571 = vrot.slane %v136, %v570
    %v574 = vsel %vm225, %v560, 0
    %576 = vmatprep.subr.mxu0 0.0
    %577 = vmatpush1.msra.mxu0 %v133
    %578 = vmatprep.subr.mxu0 0.0
    %579 = vmatpush1.msra.mxu0 %v132
    %580 = vmatprep.subr.mxu0 0.0
    %581 = vmatpush1.msra.mxu0 %v131
    %582 = vmatprep.subr.mxu0 0.0
    %583 = vmatpush1.msra.mxu0 %v130
    %584 = vmatprep.subr.mxu0 0.0
    %585 = vmatpush1.msra.mxu0 %v129
    %586 = vmatprep.subr.mxu0 0.0
    %587 = vmatpush1.msra.mxu0 %v128
    %588 = vmatprep.subr.mxu0 0.0
    %589 = vmatpush1.msra.mxu0 %v127
    %590 = vmatprep.subr.mxu0 0.0
    %591 = vmatpush1.msra.mxu0 %v126
    %592 = vmatprep.subr.mxu0 0.0
    %593 = vmatpush1.msra.mxu0 %v125
    %594 = vmatprep.subr.mxu0 0.0
    %595 = vmatpush1.msra.mxu0 %v124
    %596 = vmatprep.subr.mxu0 0.0
    %597 = vmatpush1.msra.mxu0 %v123
    %598 = vmatprep.subr.mxu0 0.0
    %599 = vmatpush1.msra.mxu0 %v122
    %600 = vmatprep.subr.mxu0 0.0
    %601 = vmatpush1.msra.mxu0 %v121
    %602 = vmatprep.subr.mxu0 0.0
    %603 = vmatpush1.msra.mxu0 %v120
    %604 = vmatprep.subr.mxu0 0.0
    %605 = vmatpush1.msra.mxu0 %v119
    %606 = vmatprep.subr.mxu0 0.0
    %607 = vmatpush1.msra.mxu0 %v118
    %608 = vmatprep.subr.mxu0 0.0
    %609 = vmatpush2.msra.mxu0 0.0
    %610 = vmatprep.subr.mxu0 0.0
    %611 = vmatpush2.msra.mxu0 0.0
    %612 = vmatprep.subr.mxu0 0.0
    %613 = vmatpush2.msra.mxu0 0.0
    %614 = vmatprep.subr.mxu0 0.0
    %615 = vmatpush2.msra.mxu0 0.0
    %616 = vmatprep.subr.mxu0 0.0
    %617 = vmatpush2.msra.mxu0 0.0
    %618 = vmatprep.subr.mxu0 0.0
    %619 = vmatpush2.msra.mxu0 0.0
    %620 = vmatprep.subr.mxu0 0.0
    %621 = vmatpush2.msra.mxu0 0.0
    %622 = vmatprep.subr.mxu0 0.0
    %623 = vmatpush2.msra.mxu0 0.0
    %624 = vmatprep.subr.mxu0 0.0
    %625 = vmatpush2.msra.mxu0 0.0
    %626 = vmatprep.subr.mxu0 0.0
    %627 = vmatpush2.msra.mxu0 0.0
    %628 = vmatprep.subr.mxu0 0.0
    %629 = vmatpush2.msra.mxu0 0.0
    %630 = vmatprep.subr.mxu0 0.0
    %631 = vmatpush2.msra.mxu0 0.0
    %632 = vmatprep.subr.mxu0 0.0
    %633 = vmatpush2.msra.mxu0 0.0
    %634 = vmatprep.subr.mxu0 0.0
    %635 = vmatpush2.msra.mxu0 0.0
    %636 = vmatprep.subr.mxu0 0.0
    %637 = vmatpush2.msra.mxu0 %v135
    %638 = vmatprep.subr.mxu0 0.0
    %639 = vmatpush2.msra.mxu0 %v134
    %640 = vmatprep.mubr.f32.mxu0 %v574
    %641 = vmatmul.mubr.f32.gmra.mxu0 %v559
    %v642 = vpop.f32.mrf.mxu0
    %v643 = vadd.f32 %v571, %v642
    %v644 = vpop.f32.mrf.mxu0
    %645 = vdwg.mxu0
    %v647 = vsel %vm225, %v566, 0
    %649 = vmatprep.subr.mxu0 0.0
    %650 = vmatpush1.msra.mxu0 %v133
    %651 = vmatprep.subr.mxu0 0.0
    %652 = vmatpush1.msra.mxu0 %v132
    %653 = vmatprep.subr.mxu0 0.0
    %654 = vmatpush1.msra.mxu0 %v131
    %655 = vmatprep.subr.mxu0 0.0
    %656 = vmatpush1.msra.mxu0 %v130
    %657 = vmatprep.subr.mxu0 0.0
    %658 = vmatpush1.msra.mxu0 %v129
    %659 = vmatprep.subr.mxu0 0.0
    %660 = vmatpush1.msra.mxu0 %v128
    %661 = vmatprep.subr.mxu0 0.0
    %662 = vmatpush1.msra.mxu0 %v127
    %663 = vmatprep.subr.mxu0 0.0
    %664 = vmatpush1.msra.mxu0 %v126
    %665 = vmatprep.subr.mxu0 0.0
    %666 = vmatpush1.msra.mxu0 %v125
    %667 = vmatprep.subr.mxu0 0.0
    %668 = vmatpush1.msra.mxu0 %v124
    %669 = vmatprep.subr.mxu0 0.0
    %670 = vmatpush1.msra.mxu0 %v123
    %671 = vmatprep.subr.mxu0 0.0
    %672 = vmatpush1.msra.mxu0 %v122
    %673 = vmatprep.subr.mxu0 0.0
    %674 = vmatpush1.msra.mxu0 %v121
    %675 = vmatprep.subr.mxu0 0.0
    %676 = vmatpush1.msra.mxu0 %v120
    %677 = vmatprep.subr.mxu0 0.0
    %678 = vmatpush1.msra.mxu0 %v119
    %679 = vmatprep.subr.mxu0 0.0
    %680 = vmatpush1.msra.mxu0 %v118
    %681 = vmatprep.subr.mxu0 0.0
    %682 = vmatpush2.msra.mxu0 0.0
    %683 = vmatprep.subr.mxu0 0.0
    %684 = vmatpush2.msra.mxu0 0.0
    %685 = vmatprep.subr.mxu0 0.0
    %686 = vmatpush2.msra.mxu0 0.0
    %687 = vmatprep.subr.mxu0 0.0
    %688 = vmatpush2.msra.mxu0 0.0
    %689 = vmatprep.subr.mxu0 0.0
    %690 = vmatpush2.msra.mxu0 0.0
    %691 = vmatprep.subr.mxu0 0.0
    %692 = vmatpush2.msra.mxu0 0.0
    %693 = vmatprep.subr.mxu0 0.0
    %694 = vmatpush2.msra.mxu0 0.0
    %695 = vmatprep.subr.mxu0 0.0
    %696 = vmatpush2.msra.mxu0 0.0
    %697 = vmatprep.subr.mxu0 0.0
    %698 = vmatpush2.msra.mxu0 0.0
    %699 = vmatprep.subr.mxu0 0.0
    %700 = vmatpush2.msra.mxu0 0.0
    %701 = vmatprep.subr.mxu0 0.0
    %702 = vmatpush2.msra.mxu0 0.0
    %703 = vmatprep.subr.mxu0 0.0
    %704 = vmatpush2.msra.mxu0 0.0
    %705 = vmatprep.subr.mxu0 0.0
    %706 = vmatpush2.msra.mxu0 0.0
    %707 = vmatprep.subr.mxu0 0.0
    %708 = vmatpush2.msra.mxu0 0.0
    %709 = vmatprep.subr.mxu0 0.0
    %710 = vmatpush2.msra.mxu0 %v135
    %711 = vmatprep.subr.mxu0 0.0
    %712 = vmatpush2.msra.mxu0 %v134
    %713 = vmatprep.mubr.f32.mxu0 %v647
    %714 = vmatmul.mubr.f32.gmra.mxu0 %v565
    %v715 = vpop.f32.mrf.mxu0
    %v716 = vadd.f32 0.0, %v715
    %v717 = vpop.f32.mrf.mxu0
    %718 = vdwg.mxu0
    %v720 = vcombine.high %v643, %v643
    %v722 = vunpack.c.l.s4 1966171168
    %v723 = vunpack.c.0.s8 %v722
    %v724 = vlaneseq
    %v725 = vshrl.u32 %v724, 7
    %v726 = vsub.s32 %v723, %v725
    %v727 = vrot.slane %v643, %v726
    %v729 = vunpack.c.l.s4 1966171168
    %v730 = vunpack.c.0.s8 %v729
    %v731 = vlaneseq
    %v732 = vshrl.u32 %v731, 7
    %v733 = vsub.s32 %v730, %v732
    %v734 = vrot.slane %v720, %v733
    %v735 = vcombine.high %v727, %v727
    %v736 = vcombine.high %v734, %v734
    %v738 = vunpack.c.l.s4 1966171168
    %v739 = vunpack.c.0.s8 %v738
    %v740 = vlaneseq
    %v741 = vshrl.u32 %v740, 7
    %v742 = vsub.s32 %v739, %v741
    %v743 = vrot.slane %v727, %v742
    %v745 = vunpack.c.l.s4 1966171168
    %v746 = vunpack.c.0.s8 %v745
    %v747 = vlaneseq
    %v748 = vshrl.u32 %v747, 7
    %v749 = vsub.s32 %v746, %v748
    %v750 = vrot.slane %v734, %v749
    %v752 = vunpack.c.l.s4 1966171168
    %v753 = vunpack.c.0.s8 %v752
    %v754 = vlaneseq
    %v755 = vshrl.u32 %v754, 7
    %v756 = vsub.s32 %v753, %v755
    %v757 = vrot.slane %v735, %v756
    %v759 = vunpack.c.l.s4 1966171168
    %v760 = vunpack.c.0.s8 %v759
    %v761 = vlaneseq
    %v762 = vshrl.u32 %v761, 7
    %v763 = vsub.s32 %v760, %v762
    %v764 = vrot.slane %v736, %v763
    %v765 = vcombine.high %v743, %v743
    %v766 = vcombine.high %v750, %v750
    %v767 = vcombine.high %v757, %v757
    %v768 = vcombine.high %v764, %v764
    %v769 = vlaneseq
    %v770 = vshrl.u32 %v769, 7
    %v771 = vsub.s32 0, %v770
    %v772 = vrot.slane %v743, %v771
    %v773 = vlaneseq
    %v774 = vshrl.u32 %v773, 7
    %v775 = vsub.s32 0, %v774
    %v776 = vrot.slane %v757, %v775
    %v777 = vlaneseq
    %v778 = vshrl.u32 %v777, 7
    %v779 = vsub.s32 0, %v778
    %v780 = vrot.slane %v765, %v779
    %v781 = vlaneseq
    %v782 = vshrl.u32 %v781, 7
    %v783 = vsub.s32 0, %v782
    %v784 = vrot.slane %v767, %v783
    %v785 = vlaneseq
    %v786 = vshrl.u32 %v785, 7
    %v787 = vsub.s32 0, %v786
    %v788 = vrot.slane %v750, %v787
    %v789 = vlaneseq
    %v790 = vshrl.u32 %v789, 7
    %v791 = vsub.s32 0, %v790
    %v792 = vrot.slane %v764, %v791
    %v793 = vlaneseq
    %v794 = vshrl.u32 %v793, 7
    %v795 = vsub.s32 0, %v794
    %v796 = vrot.slane %v766, %v795
    %v797 = vlaneseq
    %v798 = vshrl.u32 %v797, 7
    %v799 = vsub.s32 0, %v798
    %v800 = vrot.slane %v768, %v799
    %v809 = vsub.f32 %v772, %v716
    %v810 = vsub.f32 %v776, %v716
    %v811 = vsub.f32 %v780, %v716
    %v812 = vsub.f32 %v784, %v716
    %v813 = vsub.f32 %v788, %v716
    %v814 = vsub.f32 %v792, %v716
    %v815 = vsub.f32 %v796, %v716
    %v816 = vsub.f32 %v800, %v716
    %vm817 = vcmp.gt.f32.partialorder %v809, 0.0
    %vm818 = vcmp.gt.f32.partialorder %v810, 0.0
    %vm819 = vcmp.gt.f32.partialorder %v811, 0.0
    %vm820 = vcmp.gt.f32.partialorder %v812, 0.0
    %vm821 = vcmp.gt.f32.partialorder %v813, 0.0
    %vm822 = vcmp.gt.f32.partialorder %v814, 0.0
    %vm823 = vcmp.gt.f32.partialorder %v815, 0.0
    %vm824 = vcmp.gt.f32.partialorder %v816, 0.0
    %v825 = vmul.f32 %v809, 0.01
    %v826 = vmul.f32 %v810, 0.01
    %v827 = vmul.f32 %v811, 0.01
    %v828 = vmul.f32 %v812, 0.01
    %v829 = vmul.f32 %v813, 0.01
    %v830 = vmul.f32 %v814, 0.01
    %v831 = vmul.f32 %v815, 0.01
    %v832 = vmul.f32 %v816, 0.01
    %v833 = vsel %vm817, %v809, %v825
    %v834 = vsel %vm818, %v810, %v826
    %v835 = vsel %vm819, %v811, %v827
    %v836 = vsel %vm820, %v812, %v828
    %v837 = vsel %vm821, %v813, %v829
    %v838 = vsel %vm822, %v814, %v830
    %v839 = vsel %vm823, %v815, %v831
    %v840 = vsel %vm824, %v816, %v832
    %v842 = vlaneseq
    %v843 = vshrl.u32 %v842, 7
    %v844 = vsub.s32 0, %v843
    %v845 = vrot.slane %v146, %v844
    %vm847 = vcmask 588800
    %v849 = vsel %vm847, %v833, 0
    %851 = vmatprep.subr.mxu0 0.0
    %852 = vmatpush1.msra.mxu0 0.0
    %853 = vmatprep.subr.mxu0 0.0
    %854 = vmatpush1.msra.mxu0 0.0
    %855 = vmatprep.subr.mxu0 0.0
    %856 = vmatpush1.msra.mxu0 0.0
    %857 = vmatprep.subr.mxu0 0.0
    %858 = vmatpush1.msra.mxu0 0.0
    %859 = vmatprep.subr.mxu0 0.0
    %860 = vmatpush1.msra.mxu0 0.0
    %861 = vmatprep.subr.mxu0 0.0
    %862 = vmatpush1.msra.mxu0 0.0
    %863 = vmatprep.subr.mxu0 0.0
    %864 = vmatpush1.msra.mxu0 0.0
    %865 = vmatprep.subr.mxu0 0.0
    %866 = vmatpush1.msra.mxu0 %v145
    %867 = vmatprep.subr.mxu0 0.0
    %868 = vmatpush1.msra.mxu0 %v144
    %869 = vmatprep.subr.mxu0 0.0
    %870 = vmatpush1.msra.mxu0 %v143
    %871 = vmatprep.subr.mxu0 0.0
    %872 = vmatpush1.msra.mxu0 %v142
    %873 = vmatprep.subr.mxu0 0.0
    %874 = vmatpush1.msra.mxu0 %v141
    %875 = vmatprep.subr.mxu0 0.0
    %876 = vmatpush1.msra.mxu0 %v140
    %877 = vmatprep.subr.mxu0 0.0
    %878 = vmatpush1.msra.mxu0 %v139
    %879 = vmatprep.subr.mxu0 0.0
    %880 = vmatpush1.msra.mxu0 %v138
    %881 = vmatprep.subr.mxu0 0.0
    %882 = vmatpush1.msra.mxu0 %v137
    %883 = vmatprep.subr.mxu0 0.0
    %884 = vmatpush2.msra.mxu0 0.0
    %885 = vmatprep.subr.mxu0 0.0
    %886 = vmatpush2.msra.mxu0 0.0
    %887 = vmatprep.subr.mxu0 0.0
    %888 = vmatpush2.msra.mxu0 0.0
    %889 = vmatprep.subr.mxu0 0.0
    %890 = vmatpush2.msra.mxu0 0.0
    %891 = vmatprep.subr.mxu0 0.0
    %892 = vmatpush2.msra.mxu0 0.0
    %893 = vmatprep.subr.mxu0 0.0
    %894 = vmatpush2.msra.mxu0 0.0
    %895 = vmatprep.subr.mxu0 0.0
    %896 = vmatpush2.msra.mxu0 0.0
    %897 = vmatprep.subr.mxu0 0.0
    %898 = vmatpush2.msra.mxu0 0.0
    %899 = vmatprep.subr.mxu0 0.0
    %900 = vmatpush2.msra.mxu0 0.0
    %901 = vmatprep.subr.mxu0 0.0
    %902 = vmatpush2.msra.mxu0 0.0
    %903 = vmatprep.subr.mxu0 0.0
    %904 = vmatpush2.msra.mxu0 0.0
    %905 = vmatprep.subr.mxu0 0.0
    %906 = vmatpush2.msra.mxu0 0.0
    %907 = vmatprep.subr.mxu0 0.0
    %908 = vmatpush2.msra.mxu0 0.0
    %909 = vmatprep.subr.mxu0 0.0
    %910 = vmatpush2.msra.mxu0 0.0
    %911 = vmatprep.subr.mxu0 0.0
    %912 = vmatpush2.msra.mxu0 0.0
    %913 = vmatprep.subr.mxu0 0.0
    %914 = vmatpush2.msra.mxu0 0.0
    %915 = vmatprep.mubr.f32.mxu0 0.0
    %916 = vmatmul.mubr.f32.gmra.mxu0 %v849
    %v917 = vpop.f32.mrf.mxu0
    %v918 = vadd.f32 %v845, %v917
    %v919 = vpop.f32.mrf.mxu0
    %920 = vdwg.mxu0
    %v922 = vsel %vm847, %v834, 0
    %924 = vmatprep.subr.mxu0 0.0
    %925 = vmatpush1.msra.mxu0 0.0
    %926 = vmatprep.subr.mxu0 0.0
    %927 = vmatpush1.msra.mxu0 0.0
    %928 = vmatprep.subr.mxu0 0.0
    %929 = vmatpush1.msra.mxu0 0.0
    %930 = vmatprep.subr.mxu0 0.0
    %931 = vmatpush1.msra.mxu0 0.0
    %932 = vmatprep.subr.mxu0 0.0
    %933 = vmatpush1.msra.mxu0 0.0
    %934 = vmatprep.subr.mxu0 0.0
    %935 = vmatpush1.msra.mxu0 0.0
    %936 = vmatprep.subr.mxu0 0.0
    %937 = vmatpush1.msra.mxu0 0.0
    %938 = vmatprep.subr.mxu0 0.0
    %939 = vmatpush1.msra.mxu0 %v145
    %940 = vmatprep.subr.mxu0 0.0
    %941 = vmatpush1.msra.mxu0 %v144
    %942 = vmatprep.subr.mxu0 0.0
    %943 = vmatpush1.msra.mxu0 %v143
    %944 = vmatprep.subr.mxu0 0.0
    %945 = vmatpush1.msra.mxu0 %v142
    %946 = vmatprep.subr.mxu0 0.0
    %947 = vmatpush1.msra.mxu0 %v141
    %948 = vmatprep.subr.mxu0 0.0
    %949 = vmatpush1.msra.mxu0 %v140
    %950 = vmatprep.subr.mxu0 0.0
    %951 = vmatpush1.msra.mxu0 %v139
    %952 = vmatprep.subr.mxu0 0.0
    %953 = vmatpush1.msra.mxu0 %v138
    %954 = vmatprep.subr.mxu0 0.0
    %955 = vmatpush1.msra.mxu0 %v137
    %956 = vmatprep.subr.mxu0 0.0
    %957 = vmatpush2.msra.mxu0 0.0
    %958 = vmatprep.subr.mxu0 0.0
    %959 = vmatpush2.msra.mxu0 0.0
    %960 = vmatprep.subr.mxu0 0.0
    %961 = vmatpush2.msra.mxu0 0.0
    %962 = vmatprep.subr.mxu0 0.0
    %963 = vmatpush2.msra.mxu0 0.0
    %964 = vmatprep.subr.mxu0 0.0
    %965 = vmatpush2.msra.mxu0 0.0
    %966 = vmatprep.subr.mxu0 0.0
    %967 = vmatpush2.msra.mxu0 0.0
    %968 = vmatprep.subr.mxu0 0.0
    %969 = vmatpush2.msra.mxu0 0.0
    %970 = vmatprep.subr.mxu0 0.0
    %971 = vmatpush2.msra.mxu0 0.0
    %972 = vmatprep.subr.mxu0 0.0
    %973 = vmatpush2.msra.mxu0 0.0
    %974 = vmatprep.subr.mxu0 0.0
    %975 = vmatpush2.msra.mxu0 0.0
    %976 = vmatprep.subr.mxu0 0.0
    %977 = vmatpush2.msra.mxu0 0.0
    %978 = vmatprep.subr.mxu0 0.0
    %979 = vmatpush2.msra.mxu0 0.0
    %980 = vmatprep.subr.mxu0 0.0
    %981 = vmatpush2.msra.mxu0 0.0
    %982 = vmatprep.subr.mxu0 0.0
    %983 = vmatpush2.msra.mxu0 0.0
    %984 = vmatprep.subr.mxu0 0.0
    %985 = vmatpush2.msra.mxu0 0.0
    %986 = vmatprep.subr.mxu0 0.0
    %987 = vmatpush2.msra.mxu0 0.0
    %988 = vmatprep.mubr.f32.mxu0 0.0
    %989 = vmatmul.mubr.f32.gmra.mxu0 %v922
    %v990 = vpop.f32.mrf.mxu0
    %v991 = vadd.f32 %v845, %v990
    %v992 = vpop.f32.mrf.mxu0
    %993 = vdwg.mxu0
    %v995 = vsel %vm847, %v835, 0
    %997 = vmatprep.subr.mxu0 0.0
    %998 = vmatpush1.msra.mxu0 0.0
    %999 = vmatprep.subr.mxu0 0.0
    %1000 = vmatpush1.msra.mxu0 0.0
    %1001 = vmatprep.subr.mxu0 0.0
    %1002 = vmatpush1.msra.mxu0 0.0
    %1003 = vmatprep.subr.mxu0 0.0
    %1004 = vmatpush1.msra.mxu0 0.0
    %1005 = vmatprep.subr.mxu0 0.0
    %1006 = vmatpush1.msra.mxu0 0.0
    %1007 = vmatprep.subr.mxu0 0.0
    %1008 = vmatpush1.msra.mxu0 0.0
    %1009 = vmatprep.subr.mxu0 0.0
    %1010 = vmatpush1.msra.mxu0 0.0
    %1011 = vmatprep.subr.mxu0 0.0
    %1012 = vmatpush1.msra.mxu0 %v145
    %1013 = vmatprep.subr.mxu0 0.0
    %1014 = vmatpush1.msra.mxu0 %v144
    %1015 = vmatprep.subr.mxu0 0.0
    %1016 = vmatpush1.msra.mxu0 %v143
    %1017 = vmatprep.subr.mxu0 0.0
    %1018 = vmatpush1.msra.mxu0 %v142
    %1019 = vmatprep.subr.mxu0 0.0
    %1020 = vmatpush1.msra.mxu0 %v141
    %1021 = vmatprep.subr.mxu0 0.0
    %1022 = vmatpush1.msra.mxu0 %v140
    %1023 = vmatprep.subr.mxu0 0.0
    %1024 = vmatpush1.msra.mxu0 %v139
    %1025 = vmatprep.subr.mxu0 0.0
    %1026 = vmatpush1.msra.mxu0 %v138
    %1027 = vmatprep.subr.mxu0 0.0
    %1028 = vmatpush1.msra.mxu0 %v137
    %1029 = vmatprep.subr.mxu0 0.0
    %1030 = vmatpush2.msra.mxu0 0.0
    %1031 = vmatprep.subr.mxu0 0.0
    %1032 = vmatpush2.msra.mxu0 0.0
    %1033 = vmatprep.subr.mxu0 0.0
    %1034 = vmatpush2.msra.mxu0 0.0
    %1035 = vmatprep.subr.mxu0 0.0
    %1036 = vmatpush2.msra.mxu0 0.0
    %1037 = vmatprep.subr.mxu0 0.0
    %1038 = vmatpush2.msra.mxu0 0.0
    %1039 = vmatprep.subr.mxu0 0.0
    %1040 = vmatpush2.msra.mxu0 0.0
    %1041 = vmatprep.subr.mxu0 0.0
    %1042 = vmatpush2.msra.mxu0 0.0
    %1043 = vmatprep.subr.mxu0 0.0
    %1044 = vmatpush2.msra.mxu0 0.0
    %1045 = vmatprep.subr.mxu0 0.0
    %1046 = vmatpush2.msra.mxu0 0.0
    %1047 = vmatprep.subr.mxu0 0.0
    %1048 = vmatpush2.msra.mxu0 0.0
    %1049 = vmatprep.subr.mxu0 0.0
    %1050 = vmatpush2.msra.mxu0 0.0
    %1051 = vmatprep.subr.mxu0 0.0
    %1052 = vmatpush2.msra.mxu0 0.0
    %1053 = vmatprep.subr.mxu0 0.0
    %1054 = vmatpush2.msra.mxu0 0.0
    %1055 = vmatprep.subr.mxu0 0.0
    %1056 = vmatpush2.msra.mxu0 0.0
    %1057 = vmatprep.subr.mxu0 0.0
    %1058 = vmatpush2.msra.mxu0 0.0
    %1059 = vmatprep.subr.mxu0 0.0
    %1060 = vmatpush2.msra.mxu0 0.0
    %1061 = vmatprep.mubr.f32.mxu0 0.0
    %1062 = vmatmul.mubr.f32.gmra.mxu0 %v995
    %v1063 = vpop.f32.mrf.mxu0
    %v1064 = vadd.f32 %v845, %v1063
    %v1065 = vpop.f32.mrf.mxu0
    %1066 = vdwg.mxu0
    %v1068 = vsel %vm847, %v836, 0
    %1070 = vmatprep.subr.mxu0 0.0
    %1071 = vmatpush1.msra.mxu0 0.0
    %1072 = vmatprep.subr.mxu0 0.0
    %1073 = vmatpush1.msra.mxu0 0.0
    %1074 = vmatprep.subr.mxu0 0.0
    %1075 = vmatpush1.msra.mxu0 0.0
    %1076 = vmatprep.subr.mxu0 0.0
    %1077 = vmatpush1.msra.mxu0 0.0
    %1078 = vmatprep.subr.mxu0 0.0
    %1079 = vmatpush1.msra.mxu0 0.0
    %1080 = vmatprep.subr.mxu0 0.0
    %1081 = vmatpush1.msra.mxu0 0.0
    %1082 = vmatprep.subr.mxu0 0.0
    %1083 = vmatpush1.msra.mxu0 0.0
    %1084 = vmatprep.subr.mxu0 0.0
    %1085 = vmatpush1.msra.mxu0 %v145
    %1086 = vmatprep.subr.mxu0 0.0
    %1087 = vmatpush1.msra.mxu0 %v144
    %1088 = vmatprep.subr.mxu0 0.0
    %1089 = vmatpush1.msra.mxu0 %v143
    %1090 = vmatprep.subr.mxu0 0.0
    %1091 = vmatpush1.msra.mxu0 %v142
    %1092 = vmatprep.subr.mxu0 0.0
    %1093 = vmatpush1.msra.mxu0 %v141
    %1094 = vmatprep.subr.mxu0 0.0
    %1095 = vmatpush1.msra.mxu0 %v140
    %1096 = vmatprep.subr.mxu0 0.0
    %1097 = vmatpush1.msra.mxu0 %v139
    %1098 = vmatprep.subr.mxu0 0.0
    %1099 = vmatpush1.msra.mxu0 %v138
    %1100 = vmatprep.subr.mxu0 0.0
    %1101 = vmatpush1.msra.mxu0 %v137
    %1102 = vmatprep.subr.mxu0 0.0
    %1103 = vmatpush2.msra.mxu0 0.0
    %1104 = vmatprep.subr.mxu0 0.0
    %1105 = vmatpush2.msra.mxu0 0.0
    %1106 = vmatprep.subr.mxu0 0.0
    %1107 = vmatpush2.msra.mxu0 0.0
    %1108 = vmatprep.subr.mxu0 0.0
    %1109 = vmatpush2.msra.mxu0 0.0
    %1110 = vmatprep.subr.mxu0 0.0
    %1111 = vmatpush2.msra.mxu0 0.0
    %1112 = vmatprep.subr.mxu0 0.0
    %1113 = vmatpush2.msra.mxu0 0.0
    %1114 = vmatprep.subr.mxu0 0.0
    %1115 = vmatpush2.msra.mxu0 0.0
    %1116 = vmatprep.subr.mxu0 0.0
    %1117 = vmatpush2.msra.mxu0 0.0
    %1118 = vmatprep.subr.mxu0 0.0
    %1119 = vmatpush2.msra.mxu0 0.0
    %1120 = vmatprep.subr.mxu0 0.0
    %1121 = vmatpush2.msra.mxu0 0.0
    %1122 = vmatprep.subr.mxu0 0.0
    %1123 = vmatpush2.msra.mxu0 0.0
    %1124 = vmatprep.subr.mxu0 0.0
    %1125 = vmatpush2.msra.mxu0 0.0
    %1126 = vmatprep.subr.mxu0 0.0
    %1127 = vmatpush2.msra.mxu0 0.0
    %1128 = vmatprep.subr.mxu0 0.0
    %1129 = vmatpush2.msra.mxu0 0.0
    %1130 = vmatprep.subr.mxu0 0.0
    %1131 = vmatpush2.msra.mxu0 0.0
    %1132 = vmatprep.subr.mxu0 0.0
    %1133 = vmatpush2.msra.mxu0 0.0
    %1134 = vmatprep.mubr.f32.mxu0 0.0
    %1135 = vmatmul.mubr.f32.gmra.mxu0 %v1068
    %v1136 = vpop.f32.mrf.mxu0
    %v1137 = vadd.f32 %v845, %v1136
    %v1138 = vpop.f32.mrf.mxu0
    %1139 = vdwg.mxu0
    %v1141 = vsel %vm847, %v837, 0
    %1143 = vmatprep.subr.mxu0 0.0
    %1144 = vmatpush1.msra.mxu0 0.0
    %1145 = vmatprep.subr.mxu0 0.0
    %1146 = vmatpush1.msra.mxu0 0.0
    %1147 = vmatprep.subr.mxu0 0.0
    %1148 = vmatpush1.msra.mxu0 0.0
    %1149 = vmatprep.subr.mxu0 0.0
    %1150 = vmatpush1.msra.mxu0 0.0
    %1151 = vmatprep.subr.mxu0 0.0
    %1152 = vmatpush1.msra.mxu0 0.0
    %1153 = vmatprep.subr.mxu0 0.0
    %1154 = vmatpush1.msra.mxu0 0.0
    %1155 = vmatprep.subr.mxu0 0.0
    %1156 = vmatpush1.msra.mxu0 0.0
    %1157 = vmatprep.subr.mxu0 0.0
    %1158 = vmatpush1.msra.mxu0 %v145
    %1159 = vmatprep.subr.mxu0 0.0
    %1160 = vmatpush1.msra.mxu0 %v144
    %1161 = vmatprep.subr.mxu0 0.0
    %1162 = vmatpush1.msra.mxu0 %v143
    %1163 = vmatprep.subr.mxu0 0.0
    %1164 = vmatpush1.msra.mxu0 %v142
    %1165 = vmatprep.subr.mxu0 0.0
    %1166 = vmatpush1.msra.mxu0 %v141
    %1167 = vmatprep.subr.mxu0 0.0
    %1168 = vmatpush1.msra.mxu0 %v140
    %1169 = vmatprep.subr.mxu0 0.0
    %1170 = vmatpush1.msra.mxu0 %v139
    %1171 = vmatprep.subr.mxu0 0.0
    %1172 = vmatpush1.msra.mxu0 %v138
    %1173 = vmatprep.subr.mxu0 0.0
    %1174 = vmatpush1.msra.mxu0 %v137
    %1175 = vmatprep.subr.mxu0 0.0
    %1176 = vmatpush2.msra.mxu0 0.0
    %1177 = vmatprep.subr.mxu0 0.0
    %1178 = vmatpush2.msra.mxu0 0.0
    %1179 = vmatprep.subr.mxu0 0.0
    %1180 = vmatpush2.msra.mxu0 0.0
    %1181 = vmatprep.subr.mxu0 0.0
    %1182 = vmatpush2.msra.mxu0 0.0
    %1183 = vmatprep.subr.mxu0 0.0
    %1184 = vmatpush2.msra.mxu0 0.0
    %1185 = vmatprep.subr.mxu0 0.0
    %1186 = vmatpush2.msra.mxu0 0.0
    %1187 = vmatprep.subr.mxu0 0.0
    %1188 = vmatpush2.msra.mxu0 0.0
    %1189 = vmatprep.subr.mxu0 0.0
    %1190 = vmatpush2.msra.mxu0 0.0
    %1191 = vmatprep.subr.mxu0 0.0
    %1192 = vmatpush2.msra.mxu0 0.0
    %1193 = vmatprep.subr.mxu0 0.0
    %1194 = vmatpush2.msra.mxu0 0.0
    %1195 = vmatprep.subr.mxu0 0.0
    %1196 = vmatpush2.msra.mxu0 0.0
    %1197 = vmatprep.subr.mxu0 0.0
    %1198 = vmatpush2.msra.mxu0 0.0
    %1199 = vmatprep.subr.mxu0 0.0
    %1200 = vmatpush2.msra.mxu0 0.0
    %1201 = vmatprep.subr.mxu0 0.0
    %1202 = vmatpush2.msra.mxu0 0.0
    %1203 = vmatprep.subr.mxu0 0.0
    %1204 = vmatpush2.msra.mxu0 0.0
    %1205 = vmatprep.subr.mxu0 0.0
    %1206 = vmatpush2.msra.mxu0 0.0
    %1207 = vmatprep.mubr.f32.mxu0 0.0
    %1208 = vmatmul.mubr.f32.gmra.mxu0 %v1141
    %v1209 = vpop.f32.mrf.mxu0
    %v1210 = vadd.f32 %v845, %v1209
    %v1211 = vpop.f32.mrf.mxu0
    %1212 = vdwg.mxu0
    %v1214 = vsel %vm847, %v838, 0
    %1216 = vmatprep.subr.mxu0 0.0
    %1217 = vmatpush1.msra.mxu0 0.0
    %1218 = vmatprep.subr.mxu0 0.0
    %1219 = vmatpush1.msra.mxu0 0.0
    %1220 = vmatprep.subr.mxu0 0.0
    %1221 = vmatpush1.msra.mxu0 0.0
    %1222 = vmatprep.subr.mxu0 0.0
    %1223 = vmatpush1.msra.mxu0 0.0
    %1224 = vmatprep.subr.mxu0 0.0
    %1225 = vmatpush1.msra.mxu0 0.0
    %1226 = vmatprep.subr.mxu0 0.0
    %1227 = vmatpush1.msra.mxu0 0.0
    %1228 = vmatprep.subr.mxu0 0.0
    %1229 = vmatpush1.msra.mxu0 0.0
    %1230 = vmatprep.subr.mxu0 0.0
    %1231 = vmatpush1.msra.mxu0 %v145
    %1232 = vmatprep.subr.mxu0 0.0
    %1233 = vmatpush1.msra.mxu0 %v144
    %1234 = vmatprep.subr.mxu0 0.0
    %1235 = vmatpush1.msra.mxu0 %v143
    %1236 = vmatprep.subr.mxu0 0.0
    %1237 = vmatpush1.msra.mxu0 %v142
    %1238 = vmatprep.subr.mxu0 0.0
    %1239 = vmatpush1.msra.mxu0 %v141
    %1240 = vmatprep.subr.mxu0 0.0
    %1241 = vmatpush1.msra.mxu0 %v140
    %1242 = vmatprep.subr.mxu0 0.0
    %1243 = vmatpush1.msra.mxu0 %v139
    %1244 = vmatprep.subr.mxu0 0.0
    %1245 = vmatpush1.msra.mxu0 %v138
    %1246 = vmatprep.subr.mxu0 0.0
    %1247 = vmatpush1.msra.mxu0 %v137
    %1248 = vmatprep.subr.mxu0 0.0
    %1249 = vmatpush2.msra.mxu0 0.0
    %1250 = vmatprep.subr.mxu0 0.0
    %1251 = vmatpush2.msra.mxu0 0.0
    %1252 = vmatprep.subr.mxu0 0.0
    %1253 = vmatpush2.msra.mxu0 0.0
    %1254 = vmatprep.subr.mxu0 0.0
    %1255 = vmatpush2.msra.mxu0 0.0
    %1256 = vmatprep.subr.mxu0 0.0
    %1257 = vmatpush2.msra.mxu0 0.0
    %1258 = vmatprep.subr.mxu0 0.0
    %1259 = vmatpush2.msra.mxu0 0.0
    %1260 = vmatprep.subr.mxu0 0.0
    %1261 = vmatpush2.msra.mxu0 0.0
    %1262 = vmatprep.subr.mxu0 0.0
    %1263 = vmatpush2.msra.mxu0 0.0
    %1264 = vmatprep.subr.mxu0 0.0
    %1265 = vmatpush2.msra.mxu0 0.0
    %1266 = vmatprep.subr.mxu0 0.0
    %1267 = vmatpush2.msra.mxu0 0.0
    %1268 = vmatprep.subr.mxu0 0.0
    %1269 = vmatpush2.msra.mxu0 0.0
    %1270 = vmatprep.subr.mxu0 0.0
    %1271 = vmatpush2.msra.mxu0 0.0
    %1272 = vmatprep.subr.mxu0 0.0
    %1273 = vmatpush2.msra.mxu0 0.0
    %1274 = vmatprep.subr.mxu0 0.0
    %1275 = vmatpush2.msra.mxu0 0.0
    %1276 = vmatprep.subr.mxu0 0.0
    %1277 = vmatpush2.msra.mxu0 0.0
    %1278 = vmatprep.subr.mxu0 0.0
    %1279 = vmatpush2.msra.mxu0 0.0
    %1280 = vmatprep.mubr.f32.mxu0 0.0
    %1281 = vmatmul.mubr.f32.gmra.mxu0 %v1214
    %v1282 = vpop.f32.mrf.mxu0
    %v1283 = vadd.f32 %v845, %v1282
    %v1284 = vpop.f32.mrf.mxu0
    %1285 = vdwg.mxu0
    %v1287 = vsel %vm847, %v839, 0
    %1289 = vmatprep.subr.mxu0 0.0
    %1290 = vmatpush1.msra.mxu0 0.0
    %1291 = vmatprep.subr.mxu0 0.0
    %1292 = vmatpush1.msra.mxu0 0.0
    %1293 = vmatprep.subr.mxu0 0.0
    %1294 = vmatpush1.msra.mxu0 0.0
    %1295 = vmatprep.subr.mxu0 0.0
    %1296 = vmatpush1.msra.mxu0 0.0
    %1297 = vmatprep.subr.mxu0 0.0
    %1298 = vmatpush1.msra.mxu0 0.0
    %1299 = vmatprep.subr.mxu0 0.0
    %1300 = vmatpush1.msra.mxu0 0.0
    %1301 = vmatprep.subr.mxu0 0.0
    %1302 = vmatpush1.msra.mxu0 0.0
    %1303 = vmatprep.subr.mxu0 0.0
    %1304 = vmatpush1.msra.mxu0 %v145
    %1305 = vmatprep.subr.mxu0 0.0
    %1306 = vmatpush1.msra.mxu0 %v144
    %1307 = vmatprep.subr.mxu0 0.0
    %1308 = vmatpush1.msra.mxu0 %v143
    %1309 = vmatprep.subr.mxu0 0.0
    %1310 = vmatpush1.msra.mxu0 %v142
    %1311 = vmatprep.subr.mxu0 0.0
    %1312 = vmatpush1.msra.mxu0 %v141
    %1313 = vmatprep.subr.mxu0 0.0
    %1314 = vmatpush1.msra.mxu0 %v140
    %1315 = vmatprep.subr.mxu0 0.0
    %1316 = vmatpush1.msra.mxu0 %v139
    %1317 = vmatprep.subr.mxu0 0.0
    %1318 = vmatpush1.msra.mxu0 %v138
    %1319 = vmatprep.subr.mxu0 0.0
    %1320 = vmatpush1.msra.mxu0 %v137
    %1321 = vmatprep.subr.mxu0 0.0
    %1322 = vmatpush2.msra.mxu0 0.0
    %1323 = vmatprep.subr.mxu0 0.0
    %1324 = vmatpush2.msra.mxu0 0.0
    %1325 = vmatprep.subr.mxu0 0.0
    %1326 = vmatpush2.msra.mxu0 0.0
    %1327 = vmatprep.subr.mxu0 0.0
    %1328 = vmatpush2.msra.mxu0 0.0
    %1329 = vmatprep.subr.mxu0 0.0
    %1330 = vmatpush2.msra.mxu0 0.0
    %1331 = vmatprep.subr.mxu0 0.0
    %1332 = vmatpush2.msra.mxu0 0.0
    %1333 = vmatprep.subr.mxu0 0.0
    %1334 = vmatpush2.msra.mxu0 0.0
    %1335 = vmatprep.subr.mxu0 0.0
    %1336 = vmatpush2.msra.mxu0 0.0
    %1337 = vmatprep.subr.mxu0 0.0
    %1338 = vmatpush2.msra.mxu0 0.0
    %1339 = vmatprep.subr.mxu0 0.0
    %1340 = vmatpush2.msra.mxu0 0.0
    %1341 = vmatprep.subr.mxu0 0.0
    %1342 = vmatpush2.msra.mxu0 0.0
    %1343 = vmatprep.subr.mxu0 0.0
    %1344 = vmatpush2.msra.mxu0 0.0
    %1345 = vmatprep.subr.mxu0 0.0
    %1346 = vmatpush2.msra.mxu0 0.0
    %1347 = vmatprep.subr.mxu0 0.0
    %1348 = vmatpush2.msra.mxu0 0.0
    %1349 = vmatprep.subr.mxu0 0.0
    %1350 = vmatpush2.msra.mxu0 0.0
    %1351 = vmatprep.subr.mxu0 0.0
    %1352 = vmatpush2.msra.mxu0 0.0
    %1353 = vmatprep.mubr.f32.mxu0 0.0
    %1354 = vmatmul.mubr.f32.gmra.mxu0 %v1287
    %v1355 = vpop.f32.mrf.mxu0
    %v1356 = vadd.f32 %v845, %v1355
    %v1357 = vpop.f32.mrf.mxu0
    %1358 = vdwg.mxu0
    %v1360 = vsel %vm847, %v840, 0
    %1362 = vmatprep.subr.mxu0 0.0
    %1363 = vmatpush1.msra.mxu0 0.0
    %1364 = vmatprep.subr.mxu0 0.0
    %1365 = vmatpush1.msra.mxu0 0.0
    %1366 = vmatprep.subr.mxu0 0.0
    %1367 = vmatpush1.msra.mxu0 0.0
    %1368 = vmatprep.subr.mxu0 0.0
    %1369 = vmatpush1.msra.mxu0 0.0
    %1370 = vmatprep.subr.mxu0 0.0
    %1371 = vmatpush1.msra.mxu0 0.0
    %1372 = vmatprep.subr.mxu0 0.0
    %1373 = vmatpush1.msra.mxu0 0.0
    %1374 = vmatprep.subr.mxu0 0.0
    %1375 = vmatpush1.msra.mxu0 0.0
    %1376 = vmatprep.subr.mxu0 0.0
    %1377 = vmatpush1.msra.mxu0 %v145
    %1378 = vmatprep.subr.mxu0 0.0
    %1379 = vmatpush1.msra.mxu0 %v144
    %1380 = vmatprep.subr.mxu0 0.0
    %1381 = vmatpush1.msra.mxu0 %v143
    %1382 = vmatprep.subr.mxu0 0.0
    %1383 = vmatpush1.msra.mxu0 %v142
    %1384 = vmatprep.subr.mxu0 0.0
    %1385 = vmatpush1.msra.mxu0 %v141
    %1386 = vmatprep.subr.mxu0 0.0
    %1387 = vmatpush1.msra.mxu0 %v140
    %1388 = vmatprep.subr.mxu0 0.0
    %1389 = vmatpush1.msra.mxu0 %v139
    %1390 = vmatprep.subr.mxu0 0.0
    %1391 = vmatpush1.msra.mxu0 %v138
    %1392 = vmatprep.subr.mxu0 0.0
    %1393 = vmatpush1.msra.mxu0 %v137
    %1394 = vmatprep.subr.mxu0 0.0
    %1395 = vmatpush2.msra.mxu0 0.0
    %1396 = vmatprep.subr.mxu0 0.0
    %1397 = vmatpush2.msra.mxu0 0.0
    %1398 = vmatprep.subr.mxu0 0.0
    %1399 = vmatpush2.msra.mxu0 0.0
    %1400 = vmatprep.subr.mxu0 0.0
    %1401 = vmatpush2.msra.mxu0 0.0
    %1402 = vmatprep.subr.mxu0 0.0
    %1403 = vmatpush2.msra.mxu0 0.0
    %1404 = vmatprep.subr.mxu0 0.0
    %1405 = vmatpush2.msra.mxu0 0.0
    %1406 = vmatprep.subr.mxu0 0.0
    %1407 = vmatpush2.msra.mxu0 0.0
    %1408 = vmatprep.subr.mxu0 0.0
    %1409 = vmatpush2.msra.mxu0 0.0
    %1410 = vmatprep.subr.mxu0 0.0
    %1411 = vmatpush2.msra.mxu0 0.0
    %1412 = vmatprep.subr.mxu0 0.0
    %1413 = vmatpush2.msra.mxu0 0.0
    %1414 = vmatprep.subr.mxu0 0.0
    %1415 = vmatpush2.msra.mxu0 0.0
    %1416 = vmatprep.subr.mxu0 0.0
    %1417 = vmatpush2.msra.mxu0 0.0
    %1418 = vmatprep.subr.mxu0 0.0
    %1419 = vmatpush2.msra.mxu0 0.0
    %1420 = vmatprep.subr.mxu0 0.0
    %1421 = vmatpush2.msra.mxu0 0.0
    %1422 = vmatprep.subr.mxu0 0.0
    %1423 = vmatpush2.msra.mxu0 0.0
    %1424 = vmatprep.subr.mxu0 0.0
    %1425 = vmatpush2.msra.mxu0 0.0
    %1426 = vmatprep.mubr.f32.mxu0 0.0
    %1427 = vmatmul.mubr.f32.gmra.mxu0 %v1360
    %v1428 = vpop.f32.mrf.mxu0
    %v1429 = vadd.f32 %v845, %v1428
    %v1430 = vpop.f32.mrf.mxu0
    %1431 = vdwg.mxu0
    %vm1432 = vcmp.gt.f32.partialorder %v918, 0.0
    %vm1433 = vcmp.gt.f32.partialorder %v991, 0.0
    %vm1434 = vcmp.gt.f32.partialorder %v1064, 0.0
    %vm1435 = vcmp.gt.f32.partialorder %v1137, 0.0
    %vm1436 = vcmp.gt.f32.partialorder %v1210, 0.0
    %vm1437 = vcmp.gt.f32.partialorder %v1283, 0.0
    %vm1438 = vcmp.gt.f32.partialorder %v1356, 0.0
    %vm1439 = vcmp.gt.f32.partialorder %v1429, 0.0
    %v1440 = vmul.f32 %v918, 0.01
    %v1441 = vmul.f32 %v991, 0.01
    %v1442 = vmul.f32 %v1064, 0.01
    %v1443 = vmul.f32 %v1137, 0.01
    %v1444 = vmul.f32 %v1210, 0.01
    %v1445 = vmul.f32 %v1283, 0.01
    %v1446 = vmul.f32 %v1356, 0.01
    %v1447 = vmul.f32 %v1429, 0.01
    %v1448 = vsel %vm1432, %v918, %v1440
    %v1449 = vsel %vm1433, %v991, %v1441
    %v1450 = vsel %vm1434, %v1064, %v1442
    %v1451 = vsel %vm1435, %v1137, %v1443
    %v1452 = vsel %vm1436, %v1210, %v1444
    %v1453 = vsel %vm1437, %v1283, %v1445
    %v1454 = vsel %vm1438, %v1356, %v1446
    %v1455 = vsel %vm1439, %v1429, %v1447
    %v1457 = vlaneseq
    %v1458 = vshrl.u32 %v1457, 7
    %v1459 = vsub.s32 0, %v1458
    %v1460 = vrot.slane %v149, %v1459
    %v1462 = vmul.f32 %v1448, %v1460
    %v1463 = vmul.f32 %v1449, %v1460
    %v1464 = vmul.f32 %v1450, %v1460
    %v1465 = vmul.f32 %v1451, %v1460
    %v1466 = vmul.f32 %v1452, %v1460
    %v1467 = vmul.f32 %v1453, %v1460
    %v1468 = vmul.f32 %v1454, %v1460
    %v1469 = vmul.f32 %v1455, %v1460
    %vm1470 = vcmask 293888
    %v1471 = vsel %vm1470, %v1462, 0.0
    %1472 = vadd.xlane.f32.xlu0 %v1471
    %v1473 = vpop.xlane.xlu0 %1472
    %v1474 = vsel %vm1470, %v1463, 0.0
    %1475 = vadd.xlane.f32.xlu0 %v1474
    %v1476 = vpop.xlane.xlu0 %1475
    %v1477 = vsel %vm1470, %v1464, 0.0
    %1478 = vadd.xlane.f32.xlu0 %v1477
    %v1479 = vpop.xlane.xlu0 %1478
    %v1480 = vsel %vm1470, %v1465, 0.0
    %1481 = vadd.xlane.f32.xlu0 %v1480
    %v1482 = vpop.xlane.xlu0 %1481
    %v1483 = vsel %vm1470, %v1466, 0.0
    %1484 = vadd.xlane.f32.xlu0 %v1483
    %v1485 = vpop.xlane.xlu0 %1484
    %v1486 = vsel %vm1470, %v1467, 0.0
    %1487 = vadd.xlane.f32.xlu0 %v1486
    %v1488 = vpop.xlane.xlu0 %1487
    %v1489 = vsel %vm1470, %v1468, 0.0
    %1490 = vadd.xlane.f32.xlu0 %v1489
    %v1491 = vpop.xlane.xlu0 %1490
    %v1492 = vsel %vm1470, %v1469, 0.0
    %1493 = vadd.xlane.f32.xlu0 %v1492
    %v1494 = vpop.xlane.xlu0 %1493
    %v1496 = vlaneseq
    %v1497 = vshrl.u32 %v1496, 7
    %v1498 = vsub.s32 0, %v1497
    %v1499 = vrot.slane %v150, %v1498
    %1500 = vset.pattern.permute.xlu0 0
    %1501 = vperm.xlu0 %1500, %v1499
    %v1502 = vpop.permute.xlu0 %1501
    %v1504 = vadd.f32 %v1473, %v1502
    %v1505 = vadd.f32 %v1476, %v1502
    %v1506 = vadd.f32 %v1479, %v1502
    %v1507 = vadd.f32 %v1482, %v1502
    %v1508 = vadd.f32 %v1485, %v1502
    %v1509 = vadd.f32 %v1488, %v1502
    %v1510 = vadd.f32 %v1491, %v1502
    %v1511 = vadd.f32 %v1494, %v1502
    %1513 = vset.pattern.permute.xlu0 0
    %1514 = vperm.xlu0 %1513, %v148
    %v1515 = vpop.permute.xlu0 %1514
    %v1518 = vsel %vm1470, %v147, 0
    %v1521 = vsel %vm1470, %v1448, 0
    %v1524 = vsel %vm1470, %v1449, 0
    %v1527 = vsel %vm1470, %v1450, 0
    %v1530 = vsel %vm1470, %v1451, 0
    %v1533 = vsel %vm1470, %v1452, 0
    %v1536 = vsel %vm1470, %v1453, 0
    %v1539 = vsel %vm1470, %v1454, 0
    %v1542 = vsel %vm1470, %v1455, 0
    %1544 = vmatprep.subr.mxu0 0.0
    %1545 = vmatpush1.xpose.msra.mxu0 0.0
    %1546 = vmatprep.subr.mxu0 0.0
    %1547 = vmatpush1.xpose.msra.mxu0 0.0
    %1548 = vmatprep.subr.mxu0 0.0
    %1549 = vmatpush1.xpose.msra.mxu0 0.0
    %1550 = vmatprep.subr.mxu0 0.0
    %1551 = vmatpush1.xpose.msra.mxu0 0.0
    %1552 = vmatprep.subr.mxu0 0.0
    %1553 = vmatpush1.xpose.msra.mxu0 0.0
    %1554 = vmatprep.subr.mxu0 0.0
    %1555 = vmatpush1.xpose.msra.mxu0 0.0
    %1556 = vmatprep.subr.mxu0 0.0
    %1557 = vmatpush1.xpose.msra.mxu0 0.0
    %1558 = vmatprep.subr.mxu0 0.0
    %1559 = vmatpush1.xpose.msra.mxu0 0.0
    %1560 = vmatprep.subr.mxu0 0.0
    %1561 = vmatpush1.xpose.msra.mxu0 %v1542
    %1562 = vmatprep.subr.mxu0 0.0
    %1563 = vmatpush1.xpose.msra.mxu0 %v1539
    %1564 = vmatprep.subr.mxu0 0.0
    %1565 = vmatpush1.xpose.msra.mxu0 %v1536
    %1566 = vmatprep.subr.mxu0 0.0
    %1567 = vmatpush1.xpose.msra.mxu0 %v1533
    %1568 = vmatprep.subr.mxu0 0.0
    %1569 = vmatpush1.xpose.msra.mxu0 %v1530
    %1570 = vmatprep.subr.mxu0 0.0
    %1571 = vmatpush1.xpose.msra.mxu0 %v1527
    %1572 = vmatprep.subr.mxu0 0.0
    %1573 = vmatpush1.xpose.msra.mxu0 %v1524
    %1574 = vmatprep.subr.mxu0 0.0
    %1575 = vmatpush1.xpose.msra.mxu0 %v1521
    %1576 = vmatprep.subr.mxu0 0.0
    %1577 = vmatpush2.xpose.msra.mxu0 0.0
    %1578 = vmatprep.subr.mxu0 0.0
    %1579 = vmatpush2.xpose.msra.mxu0 0.0
    %1580 = vmatprep.subr.mxu0 0.0
    %1581 = vmatpush2.xpose.msra.mxu0 0.0
    %1582 = vmatprep.subr.mxu0 0.0
    %1583 = vmatpush2.xpose.msra.mxu0 0.0
    %1584 = vmatprep.subr.mxu0 0.0
    %1585 = vmatpush2.xpose.msra.mxu0 0.0
    %1586 = vmatprep.subr.mxu0 0.0
    %1587 = vmatpush2.xpose.msra.mxu0 0.0
    %1588 = vmatprep.subr.mxu0 0.0
    %1589 = vmatpush2.xpose.msra.mxu0 0.0
    %1590 = vmatprep.subr.mxu0 0.0
    %1591 = vmatpush2.xpose.msra.mxu0 0.0
    %1592 = vmatprep.subr.mxu0 0.0
    %1593 = vmatpush2.xpose.msra.mxu0 0.0
    %1594 = vmatprep.subr.mxu0 0.0
    %1595 = vmatpush2.xpose.msra.mxu0 0.0
    %1596 = vmatprep.subr.mxu0 0.0
    %1597 = vmatpush2.xpose.msra.mxu0 0.0
    %1598 = vmatprep.subr.mxu0 0.0
    %1599 = vmatpush2.xpose.msra.mxu0 0.0
    %1600 = vmatprep.subr.mxu0 0.0
    %1601 = vmatpush2.xpose.msra.mxu0 0.0
    %1602 = vmatprep.subr.mxu0 0.0
    %1603 = vmatpush2.xpose.msra.mxu0 0.0
    %1604 = vmatprep.subr.mxu0 0.0
    %1605 = vmatpush2.xpose.msra.mxu0 0.0
    %1606 = vmatprep.subr.mxu0 0.0
    %1607 = vmatpush2.xpose.msra.mxu0 0.0
    %1608 = vmatprep.mubr.f32.mxu0 0.0
    %1609 = vmatmul.mubr.f32.gmra.mxu0 %v1518
    %v1610 = vpop.f32.mrf.mxu0
    %v1611 = vadd.f32 %v1515, %v1610
    %v1612 = vpop.f32.mrf.mxu0
    %1613 = vdwg.mxu0
    %v1614 = vld [vmem:[#allocation7] sm:$0xff]
    %v1615 = vld [vmem:[#allocation7 + $0x8] sm:$0xff]
    %v1616 = vld [vmem:[#allocation7 + $0x10] sm:$0xff]
    %v1617 = vld [vmem:[#allocation7 + $0x18] sm:$0xff]
    %v1618 = vld [vmem:[#allocation7 + $0x20] sm:$0xff]
    %v1619 = vld [vmem:[#allocation7 + $0x28] sm:$0xff]
    %v1620 = vld [vmem:[#allocation7 + $0x30] sm:$0xff]
    %v1621 = vld [vmem:[#allocation7 + $0x38] sm:$0xff]
    %v1622 = vld [vmem:[#allocation7 + $0x40] sm:$0xff]
    %v1623 = vld [vmem:[#allocation7 + $0x48] sm:$0xff]
    %v1624 = vld [vmem:[#allocation7 + $0x50] sm:$0xff]
    %v1625 = vld [vmem:[#allocation7 + $0x58] sm:$0xff]
    %v1626 = vld [vmem:[#allocation7 + $0x60] sm:$0xff]
    %v1627 = vld [vmem:[#allocation7 + $0x68] sm:$0xff]
    %v1628 = vld [vmem:[#allocation7 + $0x70] sm:$0xff]
    %v1629 = vld [vmem:[#allocation7 + $0x78] sm:$0xff]
    %v1630 = vld [vmem:[#allocation7 + $0x80] sm:$0xff]
    %v1631 = vld [vmem:[#allocation7 + $0x88] sm:$0xff]
    %v1632 = vld [vmem:[#allocation7 + $0x90] sm:$0xff]
    %v1633 = vld [vmem:[#allocation7 + $0x98] sm:$0xff]
    %v1634 = vld [vmem:[#allocation7 + $0xa0] sm:$0xff]
    %v1635 = vld [vmem:[#allocation7 + $0xa8] sm:$0xff]
    %v1636 = vld [vmem:[#allocation7 + $0xb0] sm:$0xff]
    %v1637 = vld [vmem:[#allocation7 + $0xb8] sm:$0xff]
    %v1638 = vld [vmem:[#allocation7 + $0xc0] sm:$0xff]
    %v1639 = vld [vmem:[#allocation7 + $0xc8] sm:$0xff]
    %v1640 = vld [vmem:[#allocation7 + $0xd0] sm:$0xff]
    %v1641 = vld [vmem:[#allocation7 + $0xd8] sm:$0xff]
    %v1642 = vld [vmem:[#allocation7 + $0xe0] sm:$0xff]
    %v1643 = vld [vmem:[#allocation7 + $0xe8] sm:$0xff]
    %v1644 = vld [vmem:[#allocation7 + $0xf0] sm:$0xff]
    %v1645 = vld [vmem:[#allocation7 + $0xf8] sm:$0xff]
    %v1646 = vld [vmem:[#allocation7 + $0x100] sm:$0xff]
    %v1647 = vld [vmem:[#allocation7 + $0x108] sm:$0xff]
    %v1648 = vld [vmem:[#allocation7 + $0x110] sm:$0xff]
    %v1649 = vld [vmem:[#allocation7 + $0x118] sm:$0xff]
    %1650 = vmatprep.subr.mxu0 %v1645
    %1651 = vmatpush1.msra.mxu0 %v1644
    %1652 = vmatprep.subr.mxu0 %v1643
    %1653 = vmatpush1.msra.mxu0 %v1642
    %1654 = vmatprep.subr.mxu0 %v1641
    %1655 = vmatpush1.msra.mxu0 %v1640
    %1656 = vmatprep.subr.mxu0 %v1639
    %1657 = vmatpush1.msra.mxu0 %v1638
    %1658 = vmatprep.subr.mxu0 %v1637
    %1659 = vmatpush1.msra.mxu0 %v1636
    %1660 = vmatprep.subr.mxu0 %v1635
    %1661 = vmatpush1.msra.mxu0 %v1634
    %1662 = vmatprep.subr.mxu0 %v1633
    %1663 = vmatpush1.msra.mxu0 %v1632
    %1664 = vmatprep.subr.mxu0 %v1631
    %1665 = vmatpush1.msra.mxu0 %v1630
    %1666 = vmatprep.subr.mxu0 %v1629
    %1667 = vmatpush1.msra.mxu0 %v1628
    %1668 = vmatprep.subr.mxu0 %v1627
    %1669 = vmatpush1.msra.mxu0 %v1626
    %1670 = vmatprep.subr.mxu0 %v1625
    %1671 = vmatpush1.msra.mxu0 %v1624
    %1672 = vmatprep.subr.mxu0 %v1623
    %1673 = vmatpush1.msra.mxu0 %v1622
    %1674 = vmatprep.subr.mxu0 %v1621
    %1675 = vmatpush1.msra.mxu0 %v1620
    %1676 = vmatprep.subr.mxu0 %v1619
    %1677 = vmatpush1.msra.mxu0 %v1618
    %1678 = vmatprep.subr.mxu0 %v1617
    %1679 = vmatpush1.msra.mxu0 %v1616
    %1680 = vmatprep.subr.mxu0 %v1615
    %1681 = vmatpush1.msra.mxu0 %v1614
    %1682 = vmatprep.subr.mxu0 0.0
    %1683 = vmatpush2.msra.mxu0 0.0
    %1684 = vmatprep.subr.mxu0 0.0
    %1685 = vmatpush2.msra.mxu0 0.0
    %1686 = vmatprep.subr.mxu0 0.0
    %1687 = vmatpush2.msra.mxu0 0.0
    %1688 = vmatprep.subr.mxu0 0.0
    %1689 = vmatpush2.msra.mxu0 0.0
    %1690 = vmatprep.subr.mxu0 0.0
    %1691 = vmatpush2.msra.mxu0 0.0
    %1692 = vmatprep.subr.mxu0 0.0
    %1693 = vmatpush2.msra.mxu0 0.0
    %1694 = vmatprep.subr.mxu0 0.0
    %1695 = vmatpush2.msra.mxu0 0.0
    %1696 = vmatprep.subr.mxu0 0.0
    %1697 = vmatpush2.msra.mxu0 0.0
    %1698 = vmatprep.subr.mxu0 0.0
    %1699 = vmatpush2.msra.mxu0 0.0
    %1700 = vmatprep.subr.mxu0 0.0
    %1701 = vmatpush2.msra.mxu0 0.0
    %1702 = vmatprep.subr.mxu0 0.0
    %1703 = vmatpush2.msra.mxu0 0.0
    %1704 = vmatprep.subr.mxu0 0.0
    %1705 = vmatpush2.msra.mxu0 0.0
    %1706 = vmatprep.subr.mxu0 0.0
    %1707 = vmatpush2.msra.mxu0 0.0
    %1708 = vmatprep.subr.mxu0 0.0
    %1709 = vmatpush2.msra.mxu0 0.0
    %1710 = vmatprep.subr.mxu0 %v1649
    %1711 = vmatpush2.msra.mxu0 %v1648
    %1712 = vmatprep.subr.mxu0 %v1647
    %1713 = vmatpush2.msra.mxu0 %v1646
    %1714 = vmatprep.mubr.f32.mxu0 %v574
    %1715 = vmatmul.mubr.f32.gmra.mxu0 %v559
    %v1716 = vpop.f32.mrf.mxu0
    %v1717 = vadd.f32 0.0, %v1716
    %v1718 = vpop.f32.mrf.mxu0
    %v1719 = vadd.f32 0.0, %v1718
    %1720 = vdwg.mxu0
    %1721 = vmatprep.subr.mxu0 %v1645
    %1722 = vmatpush1.msra.mxu0 %v1644
    %1723 = vmatprep.subr.mxu0 %v1643
    %1724 = vmatpush1.msra.mxu0 %v1642
    %1725 = vmatprep.subr.mxu0 %v1641
    %1726 = vmatpush1.msra.mxu0 %v1640
    %1727 = vmatprep.subr.mxu0 %v1639
    %1728 = vmatpush1.msra.mxu0 %v1638
    %1729 = vmatprep.subr.mxu0 %v1637
    %1730 = vmatpush1.msra.mxu0 %v1636
    %1731 = vmatprep.subr.mxu0 %v1635
    %1732 = vmatpush1.msra.mxu0 %v1634
    %1733 = vmatprep.subr.mxu0 %v1633
    %1734 = vmatpush1.msra.mxu0 %v1632
    %1735 = vmatprep.subr.mxu0 %v1631
    %1736 = vmatpush1.msra.mxu0 %v1630
    %1737 = vmatprep.subr.mxu0 %v1629
    %1738 = vmatpush1.msra.mxu0 %v1628
    %1739 = vmatprep.subr.mxu0 %v1627
    %1740 = vmatpush1.msra.mxu0 %v1626
    %1741 = vmatprep.subr.mxu0 %v1625
    %1742 = vmatpush1.msra.mxu0 %v1624
    %1743 = vmatprep.subr.mxu0 %v1623
    %1744 = vmatpush1.msra.mxu0 %v1622
    %1745 = vmatprep.subr.mxu0 %v1621
    %1746 = vmatpush1.msra.mxu0 %v1620
    %1747 = vmatprep.subr.mxu0 %v1619
    %1748 = vmatpush1.msra.mxu0 %v1618
    %1749 = vmatprep.subr.mxu0 %v1617
    %1750 = vmatpush1.msra.mxu0 %v1616
    %1751 = vmatprep.subr.mxu0 %v1615
    %1752 = vmatpush1.msra.mxu0 %v1614
    %1753 = vmatprep.subr.mxu0 0.0
    %1754 = vmatpush2.msra.mxu0 0.0
    %1755 = vmatprep.subr.mxu0 0.0
    %1756 = vmatpush2.msra.mxu0 0.0
    %1757 = vmatprep.subr.mxu0 0.0
    %1758 = vmatpush2.msra.mxu0 0.0
    %1759 = vmatprep.subr.mxu0 0.0
    %1760 = vmatpush2.msra.mxu0 0.0
    %1761 = vmatprep.subr.mxu0 0.0
    %1762 = vmatpush2.msra.mxu0 0.0
    %1763 = vmatprep.subr.mxu0 0.0
    %1764 = vmatpush2.msra.mxu0 0.0
    %1765 = vmatprep.subr.mxu0 0.0
    %1766 = vmatpush2.msra.mxu0 0.0
    %1767 = vmatprep.subr.mxu0 0.0
    %1768 = vmatpush2.msra.mxu0 0.0
    %1769 = vmatprep.subr.mxu0 0.0
    %1770 = vmatpush2.msra.mxu0 0.0
    %1771 = vmatprep.subr.mxu0 0.0
    %1772 = vmatpush2.msra.mxu0 0.0
    %1773 = vmatprep.subr.mxu0 0.0
    %1774 = vmatpush2.msra.mxu0 0.0
    %1775 = vmatprep.subr.mxu0 0.0
    %1776 = vmatpush2.msra.mxu0 0.0
    %1777 = vmatprep.subr.mxu0 0.0
    %1778 = vmatpush2.msra.mxu0 0.0
    %1779 = vmatprep.subr.mxu0 0.0
    %1780 = vmatpush2.msra.mxu0 0.0
    %1781 = vmatprep.subr.mxu0 %v1649
    %1782 = vmatpush2.msra.mxu0 %v1648
    %1783 = vmatprep.subr.mxu0 %v1647
    %1784 = vmatpush2.msra.mxu0 %v1646
    %1785 = vmatprep.mubr.f32.mxu0 %v647
    %1786 = vmatmul.mubr.f32.gmra.mxu0 %v565
    %v1787 = vpop.f32.mrf.mxu0
    %v1788 = vadd.f32 0.0, %v1787
    %v1789 = vpop.f32.mrf.mxu0
    %v1790 = vadd.f32 0.0, %v1789
    %1791 = vdwg.mxu0
    %v1800 = vlaneseq
    %v1801 = vand.u32 %v1800, 127
    %v1802 = vlaneseq
    %v1803 = vshrl.u32 %v1802, 7
    %v1804 = vsub.s32 %v1801, %v1803
    %v1805 = vrot.slane %v1504, %v1804
    %v1806 = vlaneseq
    %v1807 = vshrl.u32 %v1806, 7
    %v1808 = vsub.s32 %v1801, %v1807
    %v1809 = vrot.slane %v1505, %v1808
    %v1810 = vlaneseq
    %v1811 = vshrl.u32 %v1810, 7
    %v1812 = vsub.s32 %v1801, %v1811
    %v1813 = vrot.slane %v1506, %v1812
    %v1814 = vlaneseq
    %v1815 = vshrl.u32 %v1814, 7
    %v1816 = vsub.s32 %v1801, %v1815
    %v1817 = vrot.slane %v1507, %v1816
    %v1818 = vlaneseq
    %v1819 = vshrl.u32 %v1818, 7
    %v1820 = vsub.s32 %v1801, %v1819
    %v1821 = vrot.slane %v1508, %v1820
    %v1822 = vlaneseq
    %v1823 = vshrl.u32 %v1822, 7
    %v1824 = vsub.s32 %v1801, %v1823
    %v1825 = vrot.slane %v1509, %v1824
    %v1826 = vlaneseq
    %v1827 = vshrl.u32 %v1826, 7
    %v1828 = vsub.s32 %v1801, %v1827
    %v1829 = vrot.slane %v1510, %v1828
    %v1830 = vlaneseq
    %v1831 = vshrl.u32 %v1830, 7
    %v1832 = vsub.s32 %v1801, %v1831
    %v1833 = vrot.slane %v1511, %v1832
    %vm1834 = vcmask 1041409
    %v1835 = vsel %vm1834, %v1809, %v1805
    %vm1836 = vcmask 1042434
    %v1837 = vsel %vm1836, %v1813, %v1835
    %vm1838 = vcmask 1043459
    %v1839 = vsel %vm1838, %v1817, %v1837
    %vm1840 = vcmask 1044484
    %v1841 = vsel %vm1840, %v1821, %v1839
    %vm1842 = vcmask 1045509
    %v1843 = vsel %vm1842, %v1825, %v1841
    %vm1844 = vcmask 1046534
    %v1845 = vsel %vm1844, %v1829, %v1843
    %vm1846 = vcmask 1047559
    %v1847 = vsel %vm1846, %v1833, %v1845
    %v1848 = vsel %vm374, %v1847, 0
    %1850 = vmatprep.subr.mxu0 0.0
    %1851 = vmatpush1.msra.mxu0 0.0
    %1852 = vmatprep.subr.mxu0 0.0
    %1853 = vmatpush1.msra.mxu0 0.0
    %1854 = vmatprep.subr.mxu0 0.0
    %1855 = vmatpush1.msra.mxu0 0.0
    %1856 = vmatprep.subr.mxu0 0.0
    %1857 = vmatpush1.msra.mxu0 0.0
    %1858 = vmatprep.subr.mxu0 0.0
    %1859 = vmatpush1.msra.mxu0 0.0
    %1860 = vmatprep.subr.mxu0 0.0
    %1861 = vmatpush1.msra.mxu0 0.0
    %1862 = vmatprep.subr.mxu0 0.0
    %1863 = vmatpush1.msra.mxu0 0.0
    %1864 = vmatprep.subr.mxu0 0.0
    %1865 = vmatpush1.msra.mxu0 0.0
    %1866 = vmatprep.subr.mxu0 0.0
    %1867 = vmatpush1.msra.mxu0 0.0
    %1868 = vmatprep.subr.mxu0 0.0
    %1869 = vmatpush1.msra.mxu0 0.0
    %1870 = vmatprep.subr.mxu0 0.0
    %1871 = vmatpush1.msra.mxu0 0.0
    %1872 = vmatprep.subr.mxu0 0.0
    %1873 = vmatpush1.msra.mxu0 0.0
    %1874 = vmatprep.subr.mxu0 0.0
    %1875 = vmatpush1.msra.mxu0 0.0
    %1876 = vmatprep.subr.mxu0 0.0
    %1877 = vmatpush1.msra.mxu0 0.0
    %1878 = vmatprep.subr.mxu0 0.0
    %1879 = vmatpush1.msra.mxu0 0.0
    %1880 = vmatprep.subr.mxu0 %v1790
    %1881 = vmatpush1.msra.mxu0 %v1788
    %1882 = vmatprep.subr.mxu0 0.0
    %1883 = vmatpush2.msra.mxu0 0.0
    %1884 = vmatprep.subr.mxu0 0.0
    %1885 = vmatpush2.msra.mxu0 0.0
    %1886 = vmatprep.subr.mxu0 0.0
    %1887 = vmatpush2.msra.mxu0 0.0
    %1888 = vmatprep.subr.mxu0 0.0
    %1889 = vmatpush2.msra.mxu0 0.0
    %1890 = vmatprep.subr.mxu0 0.0
    %1891 = vmatpush2.msra.mxu0 0.0
    %1892 = vmatprep.subr.mxu0 0.0
    %1893 = vmatpush2.msra.mxu0 0.0
    %1894 = vmatprep.subr.mxu0 0.0
    %1895 = vmatpush2.msra.mxu0 0.0
    %1896 = vmatprep.subr.mxu0 0.0
    %1897 = vmatpush2.msra.mxu0 0.0
    %1898 = vmatprep.subr.mxu0 0.0
    %1899 = vmatpush2.msra.mxu0 0.0
    %1900 = vmatprep.subr.mxu0 0.0
    %1901 = vmatpush2.msra.mxu0 0.0
    %1902 = vmatprep.subr.mxu0 0.0
    %1903 = vmatpush2.msra.mxu0 0.0
    %1904 = vmatprep.subr.mxu0 0.0
    %1905 = vmatpush2.msra.mxu0 0.0
    %1906 = vmatprep.subr.mxu0 0.0
    %1907 = vmatpush2.msra.mxu0 0.0
    %1908 = vmatprep.subr.mxu0 0.0
    %1909 = vmatpush2.msra.mxu0 0.0
    %1910 = vmatprep.subr.mxu0 0.0
    %1911 = vmatpush2.msra.mxu0 0.0
    %1912 = vmatprep.subr.mxu0 0.0
    %1913 = vmatpush2.msra.mxu0 0.0
    %1914 = vmatprep.mubr.f32.mxu0 0.0
    %1915 = vmatmul.mubr.f32.gmra.mxu0 %v1848
    %v1916 = vpop.f32.mrf.mxu0
    %v1917 = vadd.f32 0.0, %v1916
    %v1918 = vpop.f32.mrf.mxu0
    %v1919 = vadd.f32 0.0, %v1918
    %1920 = vdwg.mxu0
    %1922 = vxpose.xlu0.b32.start [1/16] %v1847, 128
    %1923 = vxpose.xlu0.b32.cont [2/16] 0.0, 128
    %1924 = vxpose.xlu0.b32.cont [3/16] 0.0, 128
    %1925 = vxpose.xlu0.b32.cont [4/16] 0.0, 128
    %1926 = vxpose.xlu0.b32.cont [5/16] 0.0, 128
    %1927 = vxpose.xlu0.b32.cont [6/16] 0.0, 128
    %1928 = vxpose.xlu0.b32.cont [7/16] 0.0, 128
    %1929 = vxpose.xlu0.b32.cont [8/16] 0.0, 128
    %1930 = vxpose.xlu0.b32.cont [9/16] 0.0, 128
    %1931 = vxpose.xlu0.b32.cont [10/16] 0.0, 128
    %1932 = vxpose.xlu0.b32.cont [11/16] 0.0, 128
    %1933 = vxpose.xlu0.b32.cont [12/16] 0.0, 128
    %1934 = vxpose.xlu0.b32.cont [13/16] 0.0, 128
    %1935 = vxpose.xlu0.b32.cont [14/16] 0.0, 128
    %1936 = vxpose.xlu0.b32.cont [15/16] 0.0, 128
    %1937 = vxpose.xlu0.b32.end [16/16] 0.0, 128
    %v1938 = vpop.trf.xlu0
    %v1939 = vpop.trf.xlu0
    %v1940 = vpop.trf.xlu0
    %v1941 = vpop.trf.xlu0
    %v1942 = vpop.trf.xlu0
    %v1943 = vpop.trf.xlu0
    %v1944 = vpop.trf.xlu0
    %v1945 = vpop.trf.xlu0
    %v1946 = vpop.trf.xlu0
    %v1947 = vpop.trf.xlu0
    %v1948 = vpop.trf.xlu0
    %v1949 = vpop.trf.xlu0
    %v1950 = vpop.trf.xlu0
    %v1951 = vpop.trf.xlu0
    %v1952 = vpop.trf.xlu0
    %v1953 = vpop.trf.xlu0
    %v1955 = vsel %vm374, %v1938, 0
    %1957 = vmatprep.subr.mxu0 0.0
    %1958 = vmatpush1.msra.mxu0 0.0
    %1959 = vmatprep.subr.mxu0 0.0
    %1960 = vmatpush1.msra.mxu0 0.0
    %1961 = vmatprep.subr.mxu0 0.0
    %1962 = vmatpush1.msra.mxu0 0.0
    %1963 = vmatprep.subr.mxu0 0.0
    %1964 = vmatpush1.msra.mxu0 0.0
    %1965 = vmatprep.subr.mxu0 0.0
    %1966 = vmatpush1.msra.mxu0 0.0
    %1967 = vmatprep.subr.mxu0 0.0
    %1968 = vmatpush1.msra.mxu0 0.0
    %1969 = vmatprep.subr.mxu0 0.0
    %1970 = vmatpush1.msra.mxu0 0.0
    %1971 = vmatprep.subr.mxu0 0.0
    %1972 = vmatpush1.msra.mxu0 0.0
    %1973 = vmatprep.subr.mxu0 0.0
    %1974 = vmatpush1.msra.mxu0 0.0
    %1975 = vmatprep.subr.mxu0 0.0
    %1976 = vmatpush1.msra.mxu0 0.0
    %1977 = vmatprep.subr.mxu0 0.0
    %1978 = vmatpush1.msra.mxu0 0.0
    %1979 = vmatprep.subr.mxu0 0.0
    %1980 = vmatpush1.msra.mxu0 0.0
    %1981 = vmatprep.subr.mxu0 0.0
    %1982 = vmatpush1.msra.mxu0 0.0
    %1983 = vmatprep.subr.mxu0 0.0
    %1984 = vmatpush1.msra.mxu0 0.0
    %1985 = vmatprep.subr.mxu0 0.0
    %1986 = vmatpush1.msra.mxu0 0.0
    %1987 = vmatprep.subr.mxu0 %v1719
    %1988 = vmatpush1.msra.mxu0 %v1717
    %1989 = vmatprep.subr.mxu0 0.0
    %1990 = vmatpush2.msra.mxu0 0.0
    %1991 = vmatprep.subr.mxu0 0.0
    %1992 = vmatpush2.msra.mxu0 0.0
    %1993 = vmatprep.subr.mxu0 0.0
    %1994 = vmatpush2.msra.mxu0 0.0
    %1995 = vmatprep.subr.mxu0 0.0
    %1996 = vmatpush2.msra.mxu0 0.0
    %1997 = vmatprep.subr.mxu0 0.0
    %1998 = vmatpush2.msra.mxu0 0.0
    %1999 = vmatprep.subr.mxu0 0.0
    %2000 = vmatpush2.msra.mxu0 0.0
    %2001 = vmatprep.subr.mxu0 0.0
    %2002 = vmatpush2.msra.mxu0 0.0
    %2003 = vmatprep.subr.mxu0 0.0
    %2004 = vmatpush2.msra.mxu0 0.0
    %2005 = vmatprep.subr.mxu0 0.0
    %2006 = vmatpush2.msra.mxu0 0.0
    %2007 = vmatprep.subr.mxu0 0.0
    %2008 = vmatpush2.msra.mxu0 0.0
    %2009 = vmatprep.subr.mxu0 0.0
    %2010 = vmatpush2.msra.mxu0 0.0
    %2011 = vmatprep.subr.mxu0 0.0
    %2012 = vmatpush2.msra.mxu0 0.0
    %2013 = vmatprep.subr.mxu0 0.0
    %2014 = vmatpush2.msra.mxu0 0.0
    %2015 = vmatprep.subr.mxu0 0.0
    %2016 = vmatpush2.msra.mxu0 0.0
    %2017 = vmatprep.subr.mxu0 0.0
    %2018 = vmatpush2.msra.mxu0 0.0
    %2019 = vmatprep.subr.mxu0 0.0
    %2020 = vmatpush2.msra.mxu0 0.0
    %2021 = vmatprep.mubr.f32.mxu0 0.0
    %2022 = vmatmul.mubr.f32.gmra.mxu0 %v1955
    %v2023 = vpop.f32.mrf.mxu0
    %v2024 = vadd.f32 0.0, %v2023
    %v2025 = vpop.f32.mrf.mxu0
    %v2026 = vadd.f32 0.0, %v2025
    %2027 = vdwg.mxu0
    %vm2028 = vcmp.gt.f32.partialorder %v1917, 0.0
    %vm2029 = vcmp.gt.f32.partialorder %v1919, 0.0
    %v2030 = vmul.f32 %v1917, 0.01
    %v2031 = vmul.f32 %v1919, 0.01
    %v2032 = vsel %vm2028, %v1917, %v2030
    %v2033 = vsel %vm2029, %v1919, %v2031
    %vm2034 = vcmp.gt.f32.partialorder %v2024, 0.0
    %vm2035 = vcmp.gt.f32.partialorder %v2026, 0.0
    %v2036 = vmul.f32 %v2024, 0.01
    %v2037 = vmul.f32 %v2026, 0.01
    %v2038 = vsel %vm2034, %v2024, %v2036
    %v2039 = vsel %vm2035, %v2026, %v2037
    %v2041 = vlaneseq
    %v2042 = vshrl.u32 %v2041, 7
    %v2043 = vsub.s32 0, %v2042
    %v2044 = vrot.slane %v169, %v2043
    %v2047 = vsel %vm225, %v2033, 0
    %2049 = vmatprep.subr.mxu0 0.0
    %2050 = vmatpush1.msra.mxu0 %v166
    %2051 = vmatprep.subr.mxu0 0.0
    %2052 = vmatpush1.msra.mxu0 %v165
    %2053 = vmatprep.subr.mxu0 0.0
    %2054 = vmatpush1.msra.mxu0 %v164
    %2055 = vmatprep.subr.mxu0 0.0
    %2056 = vmatpush1.msra.mxu0 %v163
    %2057 = vmatprep.subr.mxu0 0.0
    %2058 = vmatpush1.msra.mxu0 %v162
    %2059 = vmatprep.subr.mxu0 0.0
    %2060 = vmatpush1.msra.mxu0 %v161
    %2061 = vmatprep.subr.mxu0 0.0
    %2062 = vmatpush1.msra.mxu0 %v160
    %2063 = vmatprep.subr.mxu0 0.0
    %2064 = vmatpush1.msra.mxu0 %v159
    %2065 = vmatprep.subr.mxu0 0.0
    %2066 = vmatpush1.msra.mxu0 %v158
    %2067 = vmatprep.subr.mxu0 0.0
    %2068 = vmatpush1.msra.mxu0 %v157
    %2069 = vmatprep.subr.mxu0 0.0
    %2070 = vmatpush1.msra.mxu0 %v156
    %2071 = vmatprep.subr.mxu0 0.0
    %2072 = vmatpush1.msra.mxu0 %v155
    %2073 = vmatprep.subr.mxu0 0.0
    %2074 = vmatpush1.msra.mxu0 %v154
    %2075 = vmatprep.subr.mxu0 0.0
    %2076 = vmatpush1.msra.mxu0 %v153
    %2077 = vmatprep.subr.mxu0 0.0
    %2078 = vmatpush1.msra.mxu0 %v152
    %2079 = vmatprep.subr.mxu0 0.0
    %2080 = vmatpush1.msra.mxu0 %v151
    %2081 = vmatprep.subr.mxu0 0.0
    %2082 = vmatpush2.msra.mxu0 0.0
    %2083 = vmatprep.subr.mxu0 0.0
    %2084 = vmatpush2.msra.mxu0 0.0
    %2085 = vmatprep.subr.mxu0 0.0
    %2086 = vmatpush2.msra.mxu0 0.0
    %2087 = vmatprep.subr.mxu0 0.0
    %2088 = vmatpush2.msra.mxu0 0.0
    %2089 = vmatprep.subr.mxu0 0.0
    %2090 = vmatpush2.msra.mxu0 0.0
    %2091 = vmatprep.subr.mxu0 0.0
    %2092 = vmatpush2.msra.mxu0 0.0
    %2093 = vmatprep.subr.mxu0 0.0
    %2094 = vmatpush2.msra.mxu0 0.0
    %2095 = vmatprep.subr.mxu0 0.0
    %2096 = vmatpush2.msra.mxu0 0.0
    %2097 = vmatprep.subr.mxu0 0.0
    %2098 = vmatpush2.msra.mxu0 0.0
    %2099 = vmatprep.subr.mxu0 0.0
    %2100 = vmatpush2.msra.mxu0 0.0
    %2101 = vmatprep.subr.mxu0 0.0
    %2102 = vmatpush2.msra.mxu0 0.0
    %2103 = vmatprep.subr.mxu0 0.0
    %2104 = vmatpush2.msra.mxu0 0.0
    %2105 = vmatprep.subr.mxu0 0.0
    %2106 = vmatpush2.msra.mxu0 0.0
    %2107 = vmatprep.subr.mxu0 0.0
    %2108 = vmatpush2.msra.mxu0 0.0
    %2109 = vmatprep.subr.mxu0 0.0
    %2110 = vmatpush2.msra.mxu0 %v168
    %2111 = vmatprep.subr.mxu0 0.0
    %2112 = vmatpush2.msra.mxu0 %v167
    %2113 = vmatprep.mubr.f32.mxu0 %v2047
    %2114 = vmatmul.mubr.f32.gmra.mxu0 %v2032
    %v2115 = vpop.f32.mrf.mxu0
    %v2116 = vadd.f32 %v2044, %v2115
    %v2117 = vpop.f32.mrf.mxu0
    %2118 = vdwg.mxu0
    %v2120 = vsel %vm225, %v2039, 0
    %2122 = vmatprep.subr.mxu0 0.0
    %2123 = vmatpush1.msra.mxu0 %v166
    %2124 = vmatprep.subr.mxu0 0.0
    %2125 = vmatpush1.msra.mxu0 %v165
    %2126 = vmatprep.subr.mxu0 0.0
    %2127 = vmatpush1.msra.mxu0 %v164
    %2128 = vmatprep.subr.mxu0 0.0
    %2129 = vmatpush1.msra.mxu0 %v163
    %2130 = vmatprep.subr.mxu0 0.0
    %2131 = vmatpush1.msra.mxu0 %v162
    %2132 = vmatprep.subr.mxu0 0.0
    %2133 = vmatpush1.msra.mxu0 %v161
    %2134 = vmatprep.subr.mxu0 0.0
    %2135 = vmatpush1.msra.mxu0 %v160
    %2136 = vmatprep.subr.mxu0 0.0
    %2137 = vmatpush1.msra.mxu0 %v159
    %2138 = vmatprep.subr.mxu0 0.0
    %2139 = vmatpush1.msra.mxu0 %v158
    %2140 = vmatprep.subr.mxu0 0.0
    %2141 = vmatpush1.msra.mxu0 %v157
    %2142 = vmatprep.subr.mxu0 0.0
    %2143 = vmatpush1.msra.mxu0 %v156
    %2144 = vmatprep.subr.mxu0 0.0
    %2145 = vmatpush1.msra.mxu0 %v155
    %2146 = vmatprep.subr.mxu0 0.0
    %2147 = vmatpush1.msra.mxu0 %v154
    %2148 = vmatprep.subr.mxu0 0.0
    %2149 = vmatpush1.msra.mxu0 %v153
    %2150 = vmatprep.subr.mxu0 0.0
    %2151 = vmatpush1.msra.mxu0 %v152
    %2152 = vmatprep.subr.mxu0 0.0
    %2153 = vmatpush1.msra.mxu0 %v151
    %2154 = vmatprep.subr.mxu0 0.0
    %2155 = vmatpush2.msra.mxu0 0.0
    %2156 = vmatprep.subr.mxu0 0.0
    %2157 = vmatpush2.msra.mxu0 0.0
    %2158 = vmatprep.subr.mxu0 0.0
    %2159 = vmatpush2.msra.mxu0 0.0
    %2160 = vmatprep.subr.mxu0 0.0
    %2161 = vmatpush2.msra.mxu0 0.0
    %2162 = vmatprep.subr.mxu0 0.0
    %2163 = vmatpush2.msra.mxu0 0.0
    %2164 = vmatprep.subr.mxu0 0.0
    %2165 = vmatpush2.msra.mxu0 0.0
    %2166 = vmatprep.subr.mxu0 0.0
    %2167 = vmatpush2.msra.mxu0 0.0
    %2168 = vmatprep.subr.mxu0 0.0
    %2169 = vmatpush2.msra.mxu0 0.0
    %2170 = vmatprep.subr.mxu0 0.0
    %2171 = vmatpush2.msra.mxu0 0.0
    %2172 = vmatprep.subr.mxu0 0.0
    %2173 = vmatpush2.msra.mxu0 0.0
    %2174 = vmatprep.subr.mxu0 0.0
    %2175 = vmatpush2.msra.mxu0 0.0
    %2176 = vmatprep.subr.mxu0 0.0
    %2177 = vmatpush2.msra.mxu0 0.0
    %2178 = vmatprep.subr.mxu0 0.0
    %2179 = vmatpush2.msra.mxu0 0.0
    %2180 = vmatprep.subr.mxu0 0.0
    %2181 = vmatpush2.msra.mxu0 0.0
    %2182 = vmatprep.subr.mxu0 0.0
    %2183 = vmatpush2.msra.mxu0 %v168
    %2184 = vmatprep.subr.mxu0 0.0
    %2185 = vmatpush2.msra.mxu0 %v167
    %2186 = vmatprep.mubr.f32.mxu0 %v2120
    %2187 = vmatmul.mubr.f32.gmra.mxu0 %v2038
    %v2188 = vpop.f32.mrf.mxu0
    %v2189 = vadd.f32 0.0, %v2188
    %v2190 = vpop.f32.mrf.mxu0
    %2191 = vdwg.mxu0
    %v2193 = vcombine.high %v2116, %v2116
    %v2195 = vunpack.c.l.s4 1966171168
    %v2196 = vunpack.c.0.s8 %v2195
    %v2197 = vlaneseq
    %v2198 = vshrl.u32 %v2197, 7
    %v2199 = vsub.s32 %v2196, %v2198
    %v2200 = vrot.slane %v2116, %v2199
    %v2202 = vunpack.c.l.s4 1966171168
    %v2203 = vunpack.c.0.s8 %v2202
    %v2204 = vlaneseq
    %v2205 = vshrl.u32 %v2204, 7
    %v2206 = vsub.s32 %v2203, %v2205
    %v2207 = vrot.slane %v2193, %v2206
    %v2208 = vcombine.high %v2200, %v2200
    %v2209 = vcombine.high %v2207, %v2207
    %v2211 = vunpack.c.l.s4 1966171168
    %v2212 = vunpack.c.0.s8 %v2211
    %v2213 = vlaneseq
    %v2214 = vshrl.u32 %v2213, 7
    %v2215 = vsub.s32 %v2212, %v2214
    %v2216 = vrot.slane %v2200, %v2215
    %v2218 = vunpack.c.l.s4 1966171168
    %v2219 = vunpack.c.0.s8 %v2218
    %v2220 = vlaneseq
    %v2221 = vshrl.u32 %v2220, 7
    %v2222 = vsub.s32 %v2219, %v2221
    %v2223 = vrot.slane %v2207, %v2222
    %v2225 = vunpack.c.l.s4 1966171168
    %v2226 = vunpack.c.0.s8 %v2225
    %v2227 = vlaneseq
    %v2228 = vshrl.u32 %v2227, 7
    %v2229 = vsub.s32 %v2226, %v2228
    %v2230 = vrot.slane %v2208, %v2229
    %v2232 = vunpack.c.l.s4 1966171168
    %v2233 = vunpack.c.0.s8 %v2232
    %v2234 = vlaneseq
    %v2235 = vshrl.u32 %v2234, 7
    %v2236 = vsub.s32 %v2233, %v2235
    %v2237 = vrot.slane %v2209, %v2236
    %v2238 = vcombine.high %v2216, %v2216
    %v2239 = vcombine.high %v2223, %v2223
    %v2240 = vcombine.high %v2230, %v2230
    %v2241 = vcombine.high %v2237, %v2237
    %v2242 = vlaneseq
    %v2243 = vshrl.u32 %v2242, 7
    %v2244 = vsub.s32 0, %v2243
    %v2245 = vrot.slane %v2216, %v2244
    %v2246 = vlaneseq
    %v2247 = vshrl.u32 %v2246, 7
    %v2248 = vsub.s32 0, %v2247
    %v2249 = vrot.slane %v2230, %v2248
    %v2250 = vlaneseq
    %v2251 = vshrl.u32 %v2250, 7
    %v2252 = vsub.s32 0, %v2251
    %v2253 = vrot.slane %v2238, %v2252
    %v2254 = vlaneseq
    %v2255 = vshrl.u32 %v2254, 7
    %v2256 = vsub.s32 0, %v2255
    %v2257 = vrot.slane %v2240, %v2256
    %v2258 = vlaneseq
    %v2259 = vshrl.u32 %v2258, 7
    %v2260 = vsub.s32 0, %v2259
    %v2261 = vrot.slane %v2223, %v2260
    %v2262 = vlaneseq
    %v2263 = vshrl.u32 %v2262, 7
    %v2264 = vsub.s32 0, %v2263
    %v2265 = vrot.slane %v2237, %v2264
    %v2266 = vlaneseq
    %v2267 = vshrl.u32 %v2266, 7
    %v2268 = vsub.s32 0, %v2267
    %v2269 = vrot.slane %v2239, %v2268
    %v2270 = vlaneseq
    %v2271 = vshrl.u32 %v2270, 7
    %v2272 = vsub.s32 0, %v2271
    %v2273 = vrot.slane %v2241, %v2272
    %v2282 = vsub.f32 %v2245, %v2189
    %v2283 = vsub.f32 %v2249, %v2189
    %v2284 = vsub.f32 %v2253, %v2189
    %v2285 = vsub.f32 %v2257, %v2189
    %v2286 = vsub.f32 %v2261, %v2189
    %v2287 = vsub.f32 %v2265, %v2189
    %v2288 = vsub.f32 %v2269, %v2189
    %v2289 = vsub.f32 %v2273, %v2189
    %vm2290 = vcmp.gt.f32.partialorder %v2282, 0.0
    %vm2291 = vcmp.gt.f32.partialorder %v2283, 0.0
    %vm2292 = vcmp.gt.f32.partialorder %v2284, 0.0
    %vm2293 = vcmp.gt.f32.partialorder %v2285, 0.0
    %vm2294 = vcmp.gt.f32.partialorder %v2286, 0.0
    %vm2295 = vcmp.gt.f32.partialorder %v2287, 0.0
    %vm2296 = vcmp.gt.f32.partialorder %v2288, 0.0
    %vm2297 = vcmp.gt.f32.partialorder %v2289, 0.0
    %v2298 = vmul.f32 %v2282, 0.01
    %v2299 = vmul.f32 %v2283, 0.01
    %v2300 = vmul.f32 %v2284, 0.01
    %v2301 = vmul.f32 %v2285, 0.01
    %v2302 = vmul.f32 %v2286, 0.01
    %v2303 = vmul.f32 %v2287, 0.01
    %v2304 = vmul.f32 %v2288, 0.01
    %v2305 = vmul.f32 %v2289, 0.01
    %v2306 = vsel %vm2290, %v2282, %v2298
    %v2307 = vsel %vm2291, %v2283, %v2299
    %v2308 = vsel %vm2292, %v2284, %v2300
    %v2309 = vsel %vm2293, %v2285, %v2301
    %v2310 = vsel %vm2294, %v2286, %v2302
    %v2311 = vsel %vm2295, %v2287, %v2303
    %v2312 = vsel %vm2296, %v2288, %v2304
    %v2313 = vsel %vm2297, %v2289, %v2305
    %v2315 = vlaneseq
    %v2316 = vshrl.u32 %v2315, 7
    %v2317 = vsub.s32 0, %v2316
    %v2318 = vrot.slane %v179, %v2317
    %v2321 = vsel %vm847, %v2306, 0
    %2323 = vmatprep.subr.mxu0 0.0
    %2324 = vmatpush1.msra.mxu0 0.0
    %2325 = vmatprep.subr.mxu0 0.0
    %2326 = vmatpush1.msra.mxu0 0.0
    %2327 = vmatprep.subr.mxu0 0.0
    %2328 = vmatpush1.msra.mxu0 0.0
    %2329 = vmatprep.subr.mxu0 0.0
    %2330 = vmatpush1.msra.mxu0 0.0
    %2331 = vmatprep.subr.mxu0 0.0
    %2332 = vmatpush1.msra.mxu0 0.0
    %2333 = vmatprep.subr.mxu0 0.0
    %2334 = vmatpush1.msra.mxu0 0.0
    %2335 = vmatprep.subr.mxu0 0.0
    %2336 = vmatpush1.msra.mxu0 0.0
    %2337 = vmatprep.subr.mxu0 0.0
    %2338 = vmatpush1.msra.mxu0 %v178
    %2339 = vmatprep.subr.mxu0 0.0
    %2340 = vmatpush1.msra.mxu0 %v177
    %2341 = vmatprep.subr.mxu0 0.0
    %2342 = vmatpush1.msra.mxu0 %v176
    %2343 = vmatprep.subr.mxu0 0.0
    %2344 = vmatpush1.msra.mxu0 %v175
    %2345 = vmatprep.subr.mxu0 0.0
    %2346 = vmatpush1.msra.mxu0 %v174
    %2347 = vmatprep.subr.mxu0 0.0
    %2348 = vmatpush1.msra.mxu0 %v173
    %2349 = vmatprep.subr.mxu0 0.0
    %2350 = vmatpush1.msra.mxu0 %v172
    %2351 = vmatprep.subr.mxu0 0.0
    %2352 = vmatpush1.msra.mxu0 %v171
    %2353 = vmatprep.subr.mxu0 0.0
    %2354 = vmatpush1.msra.mxu0 %v170
    %2355 = vmatprep.subr.mxu0 0.0
    %2356 = vmatpush2.msra.mxu0 0.0
    %2357 = vmatprep.subr.mxu0 0.0
    %2358 = vmatpush2.msra.mxu0 0.0
    %2359 = vmatprep.subr.mxu0 0.0
    %2360 = vmatpush2.msra.mxu0 0.0
    %2361 = vmatprep.subr.mxu0 0.0
    %2362 = vmatpush2.msra.mxu0 0.0
    %2363 = vmatprep.subr.mxu0 0.0
    %2364 = vmatpush2.msra.mxu0 0.0
    %2365 = vmatprep.subr.mxu0 0.0
    %2366 = vmatpush2.msra.mxu0 0.0
    %2367 = vmatprep.subr.mxu0 0.0
    %2368 = vmatpush2.msra.mxu0 0.0
    %2369 = vmatprep.subr.mxu0 0.0
    %2370 = vmatpush2.msra.mxu0 0.0
    %2371 = vmatprep.subr.mxu0 0.0
    %2372 = vmatpush2.msra.mxu0 0.0
    %2373 = vmatprep.subr.mxu0 0.0
    %2374 = vmatpush2.msra.mxu0 0.0
    %2375 = vmatprep.subr.mxu0 0.0
    %2376 = vmatpush2.msra.mxu0 0.0
    %2377 = vmatprep.subr.mxu0 0.0
    %2378 = vmatpush2.msra.mxu0 0.0
    %2379 = vmatprep.subr.mxu0 0.0
    %2380 = vmatpush2.msra.mxu0 0.0
    %2381 = vmatprep.subr.mxu0 0.0
    %2382 = vmatpush2.msra.mxu0 0.0
    %2383 = vmatprep.subr.mxu0 0.0
    %2384 = vmatpush2.msra.mxu0 0.0
    %2385 = vmatprep.subr.mxu0 0.0
    %2386 = vmatpush2.msra.mxu0 0.0
    %2387 = vmatprep.mubr.f32.mxu0 0.0
    %2388 = vmatmul.mubr.f32.gmra.mxu0 %v2321
    %v2389 = vpop.f32.mrf.mxu0
    %v2390 = vadd.f32 %v2318, %v2389
    %v2391 = vpop.f32.mrf.mxu0
    %2392 = vdwg.mxu0
    %v2394 = vsel %vm847, %v2307, 0
    %2396 = vmatprep.subr.mxu0 0.0
    %2397 = vmatpush1.msra.mxu0 0.0
    %2398 = vmatprep.subr.mxu0 0.0
    %2399 = vmatpush1.msra.mxu0 0.0
    %2400 = vmatprep.subr.mxu0 0.0
    %2401 = vmatpush1.msra.mxu0 0.0
    %2402 = vmatprep.subr.mxu0 0.0
    %2403 = vmatpush1.msra.mxu0 0.0
    %2404 = vmatprep.subr.mxu0 0.0
    %2405 = vmatpush1.msra.mxu0 0.0
    %2406 = vmatprep.subr.mxu0 0.0
    %2407 = vmatpush1.msra.mxu0 0.0
    %2408 = vmatprep.subr.mxu0 0.0
    %2409 = vmatpush1.msra.mxu0 0.0
    %2410 = vmatprep.subr.mxu0 0.0
    %2411 = vmatpush1.msra.mxu0 %v178
    %2412 = vmatprep.subr.mxu0 0.0
    %2413 = vmatpush1.msra.mxu0 %v177
    %2414 = vmatprep.subr.mxu0 0.0
    %2415 = vmatpush1.msra.mxu0 %v176
    %2416 = vmatprep.subr.mxu0 0.0
    %2417 = vmatpush1.msra.mxu0 %v175
    %2418 = vmatprep.subr.mxu0 0.0
    %2419 = vmatpush1.msra.mxu0 %v174
    %2420 = vmatprep.subr.mxu0 0.0
    %2421 = vmatpush1.msra.mxu0 %v173
    %2422 = vmatprep.subr.mxu0 0.0
    %2423 = vmatpush1.msra.mxu0 %v172
    %2424 = vmatprep.subr.mxu0 0.0
    %2425 = vmatpush1.msra.mxu0 %v171
    %2426 = vmatprep.subr.mxu0 0.0
    %2427 = vmatpush1.msra.mxu0 %v170
    %2428 = vmatprep.subr.mxu0 0.0
    %2429 = vmatpush2.msra.mxu0 0.0
    %2430 = vmatprep.subr.mxu0 0.0
    %2431 = vmatpush2.msra.mxu0 0.0
    %2432 = vmatprep.subr.mxu0 0.0
    %2433 = vmatpush2.msra.mxu0 0.0
    %2434 = vmatprep.subr.mxu0 0.0
    %2435 = vmatpush2.msra.mxu0 0.0
    %2436 = vmatprep.subr.mxu0 0.0
    %2437 = vmatpush2.msra.mxu0 0.0
    %2438 = vmatprep.subr.mxu0 0.0
    %2439 = vmatpush2.msra.mxu0 0.0
    %2440 = vmatprep.subr.mxu0 0.0
    %2441 = vmatpush2.msra.mxu0 0.0
    %2442 = vmatprep.subr.mxu0 0.0
    %2443 = vmatpush2.msra.mxu0 0.0
    %2444 = vmatprep.subr.mxu0 0.0
    %2445 = vmatpush2.msra.mxu0 0.0
    %2446 = vmatprep.subr.mxu0 0.0
    %2447 = vmatpush2.msra.mxu0 0.0
    %2448 = vmatprep.subr.mxu0 0.0
    %2449 = vmatpush2.msra.mxu0 0.0
    %2450 = vmatprep.subr.mxu0 0.0
    %2451 = vmatpush2.msra.mxu0 0.0
    %2452 = vmatprep.subr.mxu0 0.0
    %2453 = vmatpush2.msra.mxu0 0.0
    %2454 = vmatprep.subr.mxu0 0.0
    %2455 = vmatpush2.msra.mxu0 0.0
    %2456 = vmatprep.subr.mxu0 0.0
    %2457 = vmatpush2.msra.mxu0 0.0
    %2458 = vmatprep.subr.mxu0 0.0
    %2459 = vmatpush2.msra.mxu0 0.0
    %2460 = vmatprep.mubr.f32.mxu0 0.0
    %2461 = vmatmul.mubr.f32.gmra.mxu0 %v2394
    %v2462 = vpop.f32.mrf.mxu0
    %v2463 = vadd.f32 %v2318, %v2462
    %v2464 = vpop.f32.mrf.mxu0
    %2465 = vdwg.mxu0
    %v2467 = vsel %vm847, %v2308, 0
    %2469 = vmatprep.subr.mxu0 0.0
    %2470 = vmatpush1.msra.mxu0 0.0
    %2471 = vmatprep.subr.mxu0 0.0
    %2472 = vmatpush1.msra.mxu0 0.0
    %2473 = vmatprep.subr.mxu0 0.0
    %2474 = vmatpush1.msra.mxu0 0.0
    %2475 = vmatprep.subr.mxu0 0.0
    %2476 = vmatpush1.msra.mxu0 0.0
    %2477 = vmatprep.subr.mxu0 0.0
    %2478 = vmatpush1.msra.mxu0 0.0
    %2479 = vmatprep.subr.mxu0 0.0
    %2480 = vmatpush1.msra.mxu0 0.0
    %2481 = vmatprep.subr.mxu0 0.0
    %2482 = vmatpush1.msra.mxu0 0.0
    %2483 = vmatprep.subr.mxu0 0.0
    %2484 = vmatpush1.msra.mxu0 %v178
    %2485 = vmatprep.subr.mxu0 0.0
    %2486 = vmatpush1.msra.mxu0 %v177
    %2487 = vmatprep.subr.mxu0 0.0
    %2488 = vmatpush1.msra.mxu0 %v176
    %2489 = vmatprep.subr.mxu0 0.0
    %2490 = vmatpush1.msra.mxu0 %v175
    %2491 = vmatprep.subr.mxu0 0.0
    %2492 = vmatpush1.msra.mxu0 %v174
    %2493 = vmatprep.subr.mxu0 0.0
    %2494 = vmatpush1.msra.mxu0 %v173
    %2495 = vmatprep.subr.mxu0 0.0
    %2496 = vmatpush1.msra.mxu0 %v172
    %2497 = vmatprep.subr.mxu0 0.0
    %2498 = vmatpush1.msra.mxu0 %v171
    %2499 = vmatprep.subr.mxu0 0.0
    %2500 = vmatpush1.msra.mxu0 %v170
    %2501 = vmatprep.subr.mxu0 0.0
    %2502 = vmatpush2.msra.mxu0 0.0
    %2503 = vmatprep.subr.mxu0 0.0
    %2504 = vmatpush2.msra.mxu0 0.0
    %2505 = vmatprep.subr.mxu0 0.0
    %2506 = vmatpush2.msra.mxu0 0.0
    %2507 = vmatprep.subr.mxu0 0.0
    %2508 = vmatpush2.msra.mxu0 0.0
    %2509 = vmatprep.subr.mxu0 0.0
    %2510 = vmatpush2.msra.mxu0 0.0
    %2511 = vmatprep.subr.mxu0 0.0
    %2512 = vmatpush2.msra.mxu0 0.0
    %2513 = vmatprep.subr.mxu0 0.0
    %2514 = vmatpush2.msra.mxu0 0.0
    %2515 = vmatprep.subr.mxu0 0.0
    %2516 = vmatpush2.msra.mxu0 0.0
    %2517 = vmatprep.subr.mxu0 0.0
    %2518 = vmatpush2.msra.mxu0 0.0
    %2519 = vmatprep.subr.mxu0 0.0
    %2520 = vmatpush2.msra.mxu0 0.0
    %2521 = vmatprep.subr.mxu0 0.0
    %2522 = vmatpush2.msra.mxu0 0.0
    %2523 = vmatprep.subr.mxu0 0.0
    %2524 = vmatpush2.msra.mxu0 0.0
    %2525 = vmatprep.subr.mxu0 0.0
    %2526 = vmatpush2.msra.mxu0 0.0
    %2527 = vmatprep.subr.mxu0 0.0
    %2528 = vmatpush2.msra.mxu0 0.0
    %2529 = vmatprep.subr.mxu0 0.0
    %2530 = vmatpush2.msra.mxu0 0.0
    %2531 = vmatprep.subr.mxu0 0.0
    %2532 = vmatpush2.msra.mxu0 0.0
    %2533 = vmatprep.mubr.f32.mxu0 0.0
    %2534 = vmatmul.mubr.f32.gmra.mxu0 %v2467
    %v2535 = vpop.f32.mrf.mxu0
    %v2536 = vadd.f32 %v2318, %v2535
    %v2537 = vpop.f32.mrf.mxu0
    %2538 = vdwg.mxu0
    %v2540 = vsel %vm847, %v2309, 0
    %2542 = vmatprep.subr.mxu0 0.0
    %2543 = vmatpush1.msra.mxu0 0.0
    %2544 = vmatprep.subr.mxu0 0.0
    %2545 = vmatpush1.msra.mxu0 0.0
    %2546 = vmatprep.subr.mxu0 0.0
    %2547 = vmatpush1.msra.mxu0 0.0
    %2548 = vmatprep.subr.mxu0 0.0
    %2549 = vmatpush1.msra.mxu0 0.0
    %2550 = vmatprep.subr.mxu0 0.0
    %2551 = vmatpush1.msra.mxu0 0.0
    %2552 = vmatprep.subr.mxu0 0.0
    %2553 = vmatpush1.msra.mxu0 0.0
    %2554 = vmatprep.subr.mxu0 0.0
    %2555 = vmatpush1.msra.mxu0 0.0
    %2556 = vmatprep.subr.mxu0 0.0
    %2557 = vmatpush1.msra.mxu0 %v178
    %2558 = vmatprep.subr.mxu0 0.0
    %2559 = vmatpush1.msra.mxu0 %v177
    %2560 = vmatprep.subr.mxu0 0.0
    %2561 = vmatpush1.msra.mxu0 %v176
    %2562 = vmatprep.subr.mxu0 0.0
    %2563 = vmatpush1.msra.mxu0 %v175
    %2564 = vmatprep.subr.mxu0 0.0
    %2565 = vmatpush1.msra.mxu0 %v174
    %2566 = vmatprep.subr.mxu0 0.0
    %2567 = vmatpush1.msra.mxu0 %v173
    %2568 = vmatprep.subr.mxu0 0.0
    %2569 = vmatpush1.msra.mxu0 %v172
    %2570 = vmatprep.subr.mxu0 0.0
    %2571 = vmatpush1.msra.mxu0 %v171
    %2572 = vmatprep.subr.mxu0 0.0
    %2573 = vmatpush1.msra.mxu0 %v170
    %2574 = vmatprep.subr.mxu0 0.0
    %2575 = vmatpush2.msra.mxu0 0.0
    %2576 = vmatprep.subr.mxu0 0.0
    %2577 = vmatpush2.msra.mxu0 0.0
    %2578 = vmatprep.subr.mxu0 0.0
    %2579 = vmatpush2.msra.mxu0 0.0
    %2580 = vmatprep.subr.mxu0 0.0
    %2581 = vmatpush2.msra.mxu0 0.0
    %2582 = vmatprep.subr.mxu0 0.0
    %2583 = vmatpush2.msra.mxu0 0.0
    %2584 = vmatprep.subr.mxu0 0.0
    %2585 = vmatpush2.msra.mxu0 0.0
    %2586 = vmatprep.subr.mxu0 0.0
    %2587 = vmatpush2.msra.mxu0 0.0
    %2588 = vmatprep.subr.mxu0 0.0
    %2589 = vmatpush2.msra.mxu0 0.0
    %2590 = vmatprep.subr.mxu0 0.0
    %2591 = vmatpush2.msra.mxu0 0.0
    %2592 = vmatprep.subr.mxu0 0.0
    %2593 = vmatpush2.msra.mxu0 0.0
    %2594 = vmatprep.subr.mxu0 0.0
    %2595 = vmatpush2.msra.mxu0 0.0
    %2596 = vmatprep.subr.mxu0 0.0
    %2597 = vmatpush2.msra.mxu0 0.0
    %2598 = vmatprep.subr.mxu0 0.0
    %2599 = vmatpush2.msra.mxu0 0.0
    %2600 = vmatprep.subr.mxu0 0.0
    %2601 = vmatpush2.msra.mxu0 0.0
    %2602 = vmatprep.subr.mxu0 0.0
    %2603 = vmatpush2.msra.mxu0 0.0
    %2604 = vmatprep.subr.mxu0 0.0
    %2605 = vmatpush2.msra.mxu0 0.0
    %2606 = vmatprep.mubr.f32.mxu0 0.0
    %2607 = vmatmul.mubr.f32.gmra.mxu0 %v2540
    %v2608 = vpop.f32.mrf.mxu0
    %v2609 = vadd.f32 %v2318, %v2608
    %v2610 = vpop.f32.mrf.mxu0
    %2611 = vdwg.mxu0
    %v2613 = vsel %vm847, %v2310, 0
    %2615 = vmatprep.subr.mxu0 0.0
    %2616 = vmatpush1.msra.mxu0 0.0
    %2617 = vmatprep.subr.mxu0 0.0
    %2618 = vmatpush1.msra.mxu0 0.0
    %2619 = vmatprep.subr.mxu0 0.0
    %2620 = vmatpush1.msra.mxu0 0.0
    %2621 = vmatprep.subr.mxu0 0.0
    %2622 = vmatpush1.msra.mxu0 0.0
    %2623 = vmatprep.subr.mxu0 0.0
    %2624 = vmatpush1.msra.mxu0 0.0
    %2625 = vmatprep.subr.mxu0 0.0
    %2626 = vmatpush1.msra.mxu0 0.0
    %2627 = vmatprep.subr.mxu0 0.0
    %2628 = vmatpush1.msra.mxu0 0.0
    %2629 = vmatprep.subr.mxu0 0.0
    %2630 = vmatpush1.msra.mxu0 %v178
    %2631 = vmatprep.subr.mxu0 0.0
    %2632 = vmatpush1.msra.mxu0 %v177
    %2633 = vmatprep.subr.mxu0 0.0
    %2634 = vmatpush1.msra.mxu0 %v176
    %2635 = vmatprep.subr.mxu0 0.0
    %2636 = vmatpush1.msra.mxu0 %v175
    %2637 = vmatprep.subr.mxu0 0.0
    %2638 = vmatpush1.msra.mxu0 %v174
    %2639 = vmatprep.subr.mxu0 0.0
    %2640 = vmatpush1.msra.mxu0 %v173
    %2641 = vmatprep.subr.mxu0 0.0
    %2642 = vmatpush1.msra.mxu0 %v172
    %2643 = vmatprep.subr.mxu0 0.0
    %2644 = vmatpush1.msra.mxu0 %v171
    %2645 = vmatprep.subr.mxu0 0.0
    %2646 = vmatpush1.msra.mxu0 %v170
    %2647 = vmatprep.subr.mxu0 0.0
    %2648 = vmatpush2.msra.mxu0 0.0
    %2649 = vmatprep.subr.mxu0 0.0
    %2650 = vmatpush2.msra.mxu0 0.0
    %2651 = vmatprep.subr.mxu0 0.0
    %2652 = vmatpush2.msra.mxu0 0.0
    %2653 = vmatprep.subr.mxu0 0.0
    %2654 = vmatpush2.msra.mxu0 0.0
    %2655 = vmatprep.subr.mxu0 0.0
    %2656 = vmatpush2.msra.mxu0 0.0
    %2657 = vmatprep.subr.mxu0 0.0
    %2658 = vmatpush2.msra.mxu0 0.0
    %2659 = vmatprep.subr.mxu0 0.0
    %2660 = vmatpush2.msra.mxu0 0.0
    %2661 = vmatprep.subr.mxu0 0.0
    %2662 = vmatpush2.msra.mxu0 0.0
    %2663 = vmatprep.subr.mxu0 0.0
    %2664 = vmatpush2.msra.mxu0 0.0
    %2665 = vmatprep.subr.mxu0 0.0
    %2666 = vmatpush2.msra.mxu0 0.0
    %2667 = vmatprep.subr.mxu0 0.0
    %2668 = vmatpush2.msra.mxu0 0.0
    %2669 = vmatprep.subr.mxu0 0.0
    %2670 = vmatpush2.msra.mxu0 0.0
    %2671 = vmatprep.subr.mxu0 0.0
    %2672 = vmatpush2.msra.mxu0 0.0
    %2673 = vmatprep.subr.mxu0 0.0
    %2674 = vmatpush2.msra.mxu0 0.0
    %2675 = vmatprep.subr.mxu0 0.0
    %2676 = vmatpush2.msra.mxu0 0.0
    %2677 = vmatprep.subr.mxu0 0.0
    %2678 = vmatpush2.msra.mxu0 0.0
    %2679 = vmatprep.mubr.f32.mxu0 0.0
    %2680 = vmatmul.mubr.f32.gmra.mxu0 %v2613
    %v2681 = vpop.f32.mrf.mxu0
    %v2682 = vadd.f32 %v2318, %v2681
    %v2683 = vpop.f32.mrf.mxu0
    %2684 = vdwg.mxu0
    %v2686 = vsel %vm847, %v2311, 0
    %2688 = vmatprep.subr.mxu0 0.0
    %2689 = vmatpush1.msra.mxu0 0.0
    %2690 = vmatprep.subr.mxu0 0.0
    %2691 = vmatpush1.msra.mxu0 0.0
    %2692 = vmatprep.subr.mxu0 0.0
    %2693 = vmatpush1.msra.mxu0 0.0
    %2694 = vmatprep.subr.mxu0 0.0
    %2695 = vmatpush1.msra.mxu0 0.0
    %2696 = vmatprep.subr.mxu0 0.0
    %2697 = vmatpush1.msra.mxu0 0.0
    %2698 = vmatprep.subr.mxu0 0.0
    %2699 = vmatpush1.msra.mxu0 0.0
    %2700 = vmatprep.subr.mxu0 0.0
    %2701 = vmatpush1.msra.mxu0 0.0
    %2702 = vmatprep.subr.mxu0 0.0
    %2703 = vmatpush1.msra.mxu0 %v178
    %2704 = vmatprep.subr.mxu0 0.0
    %2705 = vmatpush1.msra.mxu0 %v177
    %2706 = vmatprep.subr.mxu0 0.0
    %2707 = vmatpush1.msra.mxu0 %v176
    %2708 = vmatprep.subr.mxu0 0.0
    %2709 = vmatpush1.msra.mxu0 %v175
    %2710 = vmatprep.subr.mxu0 0.0
    %2711 = vmatpush1.msra.mxu0 %v174
    %2712 = vmatprep.subr.mxu0 0.0
    %2713 = vmatpush1.msra.mxu0 %v173
    %2714 = vmatprep.subr.mxu0 0.0
    %2715 = vmatpush1.msra.mxu0 %v172
    %2716 = vmatprep.subr.mxu0 0.0
    %2717 = vmatpush1.msra.mxu0 %v171
    %2718 = vmatprep.subr.mxu0 0.0
    %2719 = vmatpush1.msra.mxu0 %v170
    %2720 = vmatprep.subr.mxu0 0.0
    %2721 = vmatpush2.msra.mxu0 0.0
    %2722 = vmatprep.subr.mxu0 0.0
    %2723 = vmatpush2.msra.mxu0 0.0
    %2724 = vmatprep.subr.mxu0 0.0
    %2725 = vmatpush2.msra.mxu0 0.0
    %2726 = vmatprep.subr.mxu0 0.0
    %2727 = vmatpush2.msra.mxu0 0.0
    %2728 = vmatprep.subr.mxu0 0.0
    %2729 = vmatpush2.msra.mxu0 0.0
    %2730 = vmatprep.subr.mxu0 0.0
    %2731 = vmatpush2.msra.mxu0 0.0
    %2732 = vmatprep.subr.mxu0 0.0
    %2733 = vmatpush2.msra.mxu0 0.0
    %2734 = vmatprep.subr.mxu0 0.0
    %2735 = vmatpush2.msra.mxu0 0.0
    %2736 = vmatprep.subr.mxu0 0.0
    %2737 = vmatpush2.msra.mxu0 0.0
    %2738 = vmatprep.subr.mxu0 0.0
    %2739 = vmatpush2.msra.mxu0 0.0
    %2740 = vmatprep.subr.mxu0 0.0
    %2741 = vmatpush2.msra.mxu0 0.0
    %2742 = vmatprep.subr.mxu0 0.0
    %2743 = vmatpush2.msra.mxu0 0.0
    %2744 = vmatprep.subr.mxu0 0.0
    %2745 = vmatpush2.msra.mxu0 0.0
    %2746 = vmatprep.subr.mxu0 0.0
    %2747 = vmatpush2.msra.mxu0 0.0
    %2748 = vmatprep.subr.mxu0 0.0
    %2749 = vmatpush2.msra.mxu0 0.0
    %2750 = vmatprep.subr.mxu0 0.0
    %2751 = vmatpush2.msra.mxu0 0.0
    %2752 = vmatprep.mubr.f32.mxu0 0.0
    %2753 = vmatmul.mubr.f32.gmra.mxu0 %v2686
    %v2754 = vpop.f32.mrf.mxu0
    %v2755 = vadd.f32 %v2318, %v2754
    %v2756 = vpop.f32.mrf.mxu0
    %2757 = vdwg.mxu0
    %v2759 = vsel %vm847, %v2312, 0
    %2761 = vmatprep.subr.mxu0 0.0
    %2762 = vmatpush1.msra.mxu0 0.0
    %2763 = vmatprep.subr.mxu0 0.0
    %2764 = vmatpush1.msra.mxu0 0.0
    %2765 = vmatprep.subr.mxu0 0.0
    %2766 = vmatpush1.msra.mxu0 0.0
    %2767 = vmatprep.subr.mxu0 0.0
    %2768 = vmatpush1.msra.mxu0 0.0
    %2769 = vmatprep.subr.mxu0 0.0
    %2770 = vmatpush1.msra.mxu0 0.0
    %2771 = vmatprep.subr.mxu0 0.0
    %2772 = vmatpush1.msra.mxu0 0.0
    %2773 = vmatprep.subr.mxu0 0.0
    %2774 = vmatpush1.msra.mxu0 0.0
    %2775 = vmatprep.subr.mxu0 0.0
    %2776 = vmatpush1.msra.mxu0 %v178
    %2777 = vmatprep.subr.mxu0 0.0
    %2778 = vmatpush1.msra.mxu0 %v177
    %2779 = vmatprep.subr.mxu0 0.0
    %2780 = vmatpush1.msra.mxu0 %v176
    %2781 = vmatprep.subr.mxu0 0.0
    %2782 = vmatpush1.msra.mxu0 %v175
    %2783 = vmatprep.subr.mxu0 0.0
    %2784 = vmatpush1.msra.mxu0 %v174
    %2785 = vmatprep.subr.mxu0 0.0
    %2786 = vmatpush1.msra.mxu0 %v173
    %2787 = vmatprep.subr.mxu0 0.0
    %2788 = vmatpush1.msra.mxu0 %v172
    %2789 = vmatprep.subr.mxu0 0.0
    %2790 = vmatpush1.msra.mxu0 %v171
    %2791 = vmatprep.subr.mxu0 0.0
    %2792 = vmatpush1.msra.mxu0 %v170
    %2793 = vmatprep.subr.mxu0 0.0
    %2794 = vmatpush2.msra.mxu0 0.0
    %2795 = vmatprep.subr.mxu0 0.0
    %2796 = vmatpush2.msra.mxu0 0.0
    %2797 = vmatprep.subr.mxu0 0.0
    %2798 = vmatpush2.msra.mxu0 0.0
    %2799 = vmatprep.subr.mxu0 0.0
    %2800 = vmatpush2.msra.mxu0 0.0
    %2801 = vmatprep.subr.mxu0 0.0
    %2802 = vmatpush2.msra.mxu0 0.0
    %2803 = vmatprep.subr.mxu0 0.0
    %2804 = vmatpush2.msra.mxu0 0.0
    %2805 = vmatprep.subr.mxu0 0.0
    %2806 = vmatpush2.msra.mxu0 0.0
    %2807 = vmatprep.subr.mxu0 0.0
    %2808 = vmatpush2.msra.mxu0 0.0
    %2809 = vmatprep.subr.mxu0 0.0
    %2810 = vmatpush2.msra.mxu0 0.0
    %2811 = vmatprep.subr.mxu0 0.0
    %2812 = vmatpush2.msra.mxu0 0.0
    %2813 = vmatprep.subr.mxu0 0.0
    %2814 = vmatpush2.msra.mxu0 0.0
    %2815 = vmatprep.subr.mxu0 0.0
    %2816 = vmatpush2.msra.mxu0 0.0
    %2817 = vmatprep.subr.mxu0 0.0
    %2818 = vmatpush2.msra.mxu0 0.0
    %2819 = vmatprep.subr.mxu0 0.0
    %2820 = vmatpush2.msra.mxu0 0.0
    %2821 = vmatprep.subr.mxu0 0.0
    %2822 = vmatpush2.msra.mxu0 0.0
    %2823 = vmatprep.subr.mxu0 0.0
    %2824 = vmatpush2.msra.mxu0 0.0
    %2825 = vmatprep.mubr.f32.mxu0 0.0
    %2826 = vmatmul.mubr.f32.gmra.mxu0 %v2759
    %v2827 = vpop.f32.mrf.mxu0
    %v2828 = vadd.f32 %v2318, %v2827
    %v2829 = vpop.f32.mrf.mxu0
    %2830 = vdwg.mxu0
    %v2832 = vsel %vm847, %v2313, 0
    %2834 = vmatprep.subr.mxu0 0.0
    %2835 = vmatpush1.msra.mxu0 0.0
    %2836 = vmatprep.subr.mxu0 0.0
    %2837 = vmatpush1.msra.mxu0 0.0
    %2838 = vmatprep.subr.mxu0 0.0
    %2839 = vmatpush1.msra.mxu0 0.0
    %2840 = vmatprep.subr.mxu0 0.0
    %2841 = vmatpush1.msra.mxu0 0.0
    %2842 = vmatprep.subr.mxu0 0.0
    %2843 = vmatpush1.msra.mxu0 0.0
    %2844 = vmatprep.subr.mxu0 0.0
    %2845 = vmatpush1.msra.mxu0 0.0
    %2846 = vmatprep.subr.mxu0 0.0
    %2847 = vmatpush1.msra.mxu0 0.0
    %2848 = vmatprep.subr.mxu0 0.0
    %2849 = vmatpush1.msra.mxu0 %v178
    %2850 = vmatprep.subr.mxu0 0.0
    %2851 = vmatpush1.msra.mxu0 %v177
    %2852 = vmatprep.subr.mxu0 0.0
    %2853 = vmatpush1.msra.mxu0 %v176
    %2854 = vmatprep.subr.mxu0 0.0
    %2855 = vmatpush1.msra.mxu0 %v175
    %2856 = vmatprep.subr.mxu0 0.0
    %2857 = vmatpush1.msra.mxu0 %v174
    %2858 = vmatprep.subr.mxu0 0.0
    %2859 = vmatpush1.msra.mxu0 %v173
    %2860 = vmatprep.subr.mxu0 0.0
    %2861 = vmatpush1.msra.mxu0 %v172
    %2862 = vmatprep.subr.mxu0 0.0
    %2863 = vmatpush1.msra.mxu0 %v171
    %2864 = vmatprep.subr.mxu0 0.0
    %2865 = vmatpush1.msra.mxu0 %v170
    %2866 = vmatprep.subr.mxu0 0.0
    %2867 = vmatpush2.msra.mxu0 0.0
    %2868 = vmatprep.subr.mxu0 0.0
    %2869 = vmatpush2.msra.mxu0 0.0
    %2870 = vmatprep.subr.mxu0 0.0
    %2871 = vmatpush2.msra.mxu0 0.0
    %2872 = vmatprep.subr.mxu0 0.0
    %2873 = vmatpush2.msra.mxu0 0.0
    %2874 = vmatprep.subr.mxu0 0.0
    %2875 = vmatpush2.msra.mxu0 0.0
    %2876 = vmatprep.subr.mxu0 0.0
    %2877 = vmatpush2.msra.mxu0 0.0
    %2878 = vmatprep.subr.mxu0 0.0
    %2879 = vmatpush2.msra.mxu0 0.0
    %2880 = vmatprep.subr.mxu0 0.0
    %2881 = vmatpush2.msra.mxu0 0.0
    %2882 = vmatprep.subr.mxu0 0.0
    %2883 = vmatpush2.msra.mxu0 0.0
    %2884 = vmatprep.subr.mxu0 0.0
    %2885 = vmatpush2.msra.mxu0 0.0
    %2886 = vmatprep.subr.mxu0 0.0
    %2887 = vmatpush2.msra.mxu0 0.0
    %2888 = vmatprep.subr.mxu0 0.0
    %2889 = vmatpush2.msra.mxu0 0.0
    %2890 = vmatprep.subr.mxu0 0.0
    %2891 = vmatpush2.msra.mxu0 0.0
    %2892 = vmatprep.subr.mxu0 0.0
    %2893 = vmatpush2.msra.mxu0 0.0
    %2894 = vmatprep.subr.mxu0 0.0
    %2895 = vmatpush2.msra.mxu0 0.0
    %2896 = vmatprep.subr.mxu0 0.0
    %2897 = vmatpush2.msra.mxu0 0.0
    %2898 = vmatprep.mubr.f32.mxu0 0.0
    %2899 = vmatmul.mubr.f32.gmra.mxu0 %v2832
    %v2900 = vpop.f32.mrf.mxu0
    %v2901 = vadd.f32 %v2318, %v2900
    %v2902 = vpop.f32.mrf.mxu0
    %2903 = vdwg.mxu0
    %vm2904 = vcmp.gt.f32.partialorder %v2390, 0.0
    %vm2905 = vcmp.gt.f32.partialorder %v2463, 0.0
    %vm2906 = vcmp.gt.f32.partialorder %v2536, 0.0
    %vm2907 = vcmp.gt.f32.partialorder %v2609, 0.0
    %vm2908 = vcmp.gt.f32.partialorder %v2682, 0.0
    %vm2909 = vcmp.gt.f32.partialorder %v2755, 0.0
    %vm2910 = vcmp.gt.f32.partialorder %v2828, 0.0
    %vm2911 = vcmp.gt.f32.partialorder %v2901, 0.0
    %v2912 = vmul.f32 %v2390, 0.01
    %v2913 = vmul.f32 %v2463, 0.01
    %v2914 = vmul.f32 %v2536, 0.01
    %v2915 = vmul.f32 %v2609, 0.01
    %v2916 = vmul.f32 %v2682, 0.01
    %v2917 = vmul.f32 %v2755, 0.01
    %v2918 = vmul.f32 %v2828, 0.01
    %v2919 = vmul.f32 %v2901, 0.01
    %v2920 = vsel %vm2904, %v2390, %v2912
    %v2921 = vsel %vm2905, %v2463, %v2913
    %v2922 = vsel %vm2906, %v2536, %v2914
    %v2923 = vsel %vm2907, %v2609, %v2915
    %v2924 = vsel %vm2908, %v2682, %v2916
    %v2925 = vsel %vm2909, %v2755, %v2917
    %v2926 = vsel %vm2910, %v2828, %v2918
    %v2927 = vsel %vm2911, %v2901, %v2919
    %v2929 = vlaneseq
    %v2930 = vshrl.u32 %v2929, 7
    %v2931 = vsub.s32 0, %v2930
    %v2932 = vrot.slane %v182, %v2931
    %v2934 = vmul.f32 %v2920, %v2932
    %v2935 = vmul.f32 %v2921, %v2932
    %v2936 = vmul.f32 %v2922, %v2932
    %v2937 = vmul.f32 %v2923, %v2932
    %v2938 = vmul.f32 %v2924, %v2932
    %v2939 = vmul.f32 %v2925, %v2932
    %v2940 = vmul.f32 %v2926, %v2932
    %v2941 = vmul.f32 %v2927, %v2932
    %v2942 = vsel %vm1470, %v2934, 0.0
    %2943 = vadd.xlane.f32.xlu0 %v2942
    %v2944 = vpop.xlane.xlu0 %2943
    %v2945 = vsel %vm1470, %v2935, 0.0
    %2946 = vadd.xlane.f32.xlu0 %v2945
    %v2947 = vpop.xlane.xlu0 %2946
    %v2948 = vsel %vm1470, %v2936, 0.0
    %2949 = vadd.xlane.f32.xlu0 %v2948
    %v2950 = vpop.xlane.xlu0 %2949
    %v2951 = vsel %vm1470, %v2937, 0.0
    %2952 = vadd.xlane.f32.xlu0 %v2951
    %v2953 = vpop.xlane.xlu0 %2952
    %v2954 = vsel %vm1470, %v2938, 0.0
    %2955 = vadd.xlane.f32.xlu0 %v2954
    %v2956 = vpop.xlane.xlu0 %2955
    %v2957 = vsel %vm1470, %v2939, 0.0
    %2958 = vadd.xlane.f32.xlu0 %v2957
    %v2959 = vpop.xlane.xlu0 %2958
    %v2960 = vsel %vm1470, %v2940, 0.0
    %2961 = vadd.xlane.f32.xlu0 %v2960
    %v2962 = vpop.xlane.xlu0 %2961
    %v2963 = vsel %vm1470, %v2941, 0.0
    %2964 = vadd.xlane.f32.xlu0 %v2963
    %v2965 = vpop.xlane.xlu0 %2964
    %v2967 = vlaneseq
    %v2968 = vshrl.u32 %v2967, 7
    %v2969 = vsub.s32 0, %v2968
    %v2970 = vrot.slane %v183, %v2969
    %2971 = vset.pattern.permute.xlu0 0
    %2972 = vperm.xlu0 %2971, %v2970
    %v2973 = vpop.permute.xlu0 %2972
    %v2975 = vadd.f32 %v2944, %v2973
    %v2976 = vadd.f32 %v2947, %v2973
    %v2977 = vadd.f32 %v2950, %v2973
    %v2978 = vadd.f32 %v2953, %v2973
    %v2979 = vadd.f32 %v2956, %v2973
    %v2980 = vadd.f32 %v2959, %v2973
    %v2981 = vadd.f32 %v2962, %v2973
    %v2982 = vadd.f32 %v2965, %v2973
    %2984 = vset.pattern.permute.xlu0 0
    %2985 = vperm.xlu0 %2984, %v181
    %v2986 = vpop.permute.xlu0 %2985
    %v2989 = vsel %vm1470, %v180, 0
    %v2992 = vsel %vm1470, %v2920, 0
    %v2995 = vsel %vm1470, %v2921, 0
    %v2998 = vsel %vm1470, %v2922, 0
    %v3001 = vsel %vm1470, %v2923, 0
    %v3004 = vsel %vm1470, %v2924, 0
    %v3007 = vsel %vm1470, %v2925, 0
    %v3010 = vsel %vm1470, %v2926, 0
    %v3013 = vsel %vm1470, %v2927, 0
    %3015 = vmatprep.subr.mxu0 0.0
    %3016 = vmatpush1.xpose.msra.mxu0 0.0
    %3017 = vmatprep.subr.mxu0 0.0
    %3018 = vmatpush1.xpose.msra.mxu0 0.0
    %3019 = vmatprep.subr.mxu0 0.0
    %3020 = vmatpush1.xpose.msra.mxu0 0.0
    %3021 = vmatprep.subr.mxu0 0.0
    %3022 = vmatpush1.xpose.msra.mxu0 0.0
    %3023 = vmatprep.subr.mxu0 0.0
    %3024 = vmatpush1.xpose.msra.mxu0 0.0
    %3025 = vmatprep.subr.mxu0 0.0
    %3026 = vmatpush1.xpose.msra.mxu0 0.0
    %3027 = vmatprep.subr.mxu0 0.0
    %3028 = vmatpush1.xpose.msra.mxu0 0.0
    %3029 = vmatprep.subr.mxu0 0.0
    %3030 = vmatpush1.xpose.msra.mxu0 0.0
    %3031 = vmatprep.subr.mxu0 0.0
    %3032 = vmatpush1.xpose.msra.mxu0 %v3013
    %3033 = vmatprep.subr.mxu0 0.0
    %3034 = vmatpush1.xpose.msra.mxu0 %v3010
    %3035 = vmatprep.subr.mxu0 0.0
    %3036 = vmatpush1.xpose.msra.mxu0 %v3007
    %3037 = vmatprep.subr.mxu0 0.0
    %3038 = vmatpush1.xpose.msra.mxu0 %v3004
    %3039 = vmatprep.subr.mxu0 0.0
    %3040 = vmatpush1.xpose.msra.mxu0 %v3001
    %3041 = vmatprep.subr.mxu0 0.0
    %3042 = vmatpush1.xpose.msra.mxu0 %v2998
    %3043 = vmatprep.subr.mxu0 0.0
    %3044 = vmatpush1.xpose.msra.mxu0 %v2995
    %3045 = vmatprep.subr.mxu0 0.0
    %3046 = vmatpush1.xpose.msra.mxu0 %v2992
    %3047 = vmatprep.subr.mxu0 0.0
    %3048 = vmatpush2.xpose.msra.mxu0 0.0
    %3049 = vmatprep.subr.mxu0 0.0
    %3050 = vmatpush2.xpose.msra.mxu0 0.0
    %3051 = vmatprep.subr.mxu0 0.0
    %3052 = vmatpush2.xpose.msra.mxu0 0.0
    %3053 = vmatprep.subr.mxu0 0.0
    %3054 = vmatpush2.xpose.msra.mxu0 0.0
    %3055 = vmatprep.subr.mxu0 0.0
    %3056 = vmatpush2.xpose.msra.mxu0 0.0
    %3057 = vmatprep.subr.mxu0 0.0
    %3058 = vmatpush2.xpose.msra.mxu0 0.0
    %3059 = vmatprep.subr.mxu0 0.0
    %3060 = vmatpush2.xpose.msra.mxu0 0.0
    %3061 = vmatprep.subr.mxu0 0.0
    %3062 = vmatpush2.xpose.msra.mxu0 0.0
    %3063 = vmatprep.subr.mxu0 0.0
    %3064 = vmatpush2.xpose.msra.mxu0 0.0
    %3065 = vmatprep.subr.mxu0 0.0
    %3066 = vmatpush2.xpose.msra.mxu0 0.0
    %3067 = vmatprep.subr.mxu0 0.0
    %3068 = vmatpush2.xpose.msra.mxu0 0.0
    %3069 = vmatprep.subr.mxu0 0.0
    %3070 = vmatpush2.xpose.msra.mxu0 0.0
    %3071 = vmatprep.subr.mxu0 0.0
    %3072 = vmatpush2.xpose.msra.mxu0 0.0
    %3073 = vmatprep.subr.mxu0 0.0
    %3074 = vmatpush2.xpose.msra.mxu0 0.0
    %3075 = vmatprep.subr.mxu0 0.0
    %3076 = vmatpush2.xpose.msra.mxu0 0.0
    %3077 = vmatprep.subr.mxu0 0.0
    %3078 = vmatpush2.xpose.msra.mxu0 0.0
    %3079 = vmatprep.mubr.f32.mxu0 0.0
    %3080 = vmatmul.mubr.f32.gmra.mxu0 %v2989
    %v3081 = vpop.f32.mrf.mxu0
    %v3082 = vadd.f32 %v2986, %v3081
    %v3083 = vpop.f32.mrf.mxu0
    %3084 = vdwg.mxu0
    %vm3085 = vcmask 517120
    %3086 = vst.msk [vmem:[#allocation10] sm:$0x3] %vm3085, %v1611
    %3087 = vst.msk [vmem:[#allocation11] sm:$0x3] %vm3085, %v3082
    %v3096 = vlaneseq
    %v3097 = vshrl.u32 %v3096, 7
    %v3098 = vsub.s32 %v1801, %v3097
    %v3099 = vrot.slane %v2975, %v3098
    %v3100 = vlaneseq
    %v3101 = vshrl.u32 %v3100, 7
    %v3102 = vsub.s32 %v1801, %v3101
    %v3103 = vrot.slane %v2976, %v3102
    %v3104 = vlaneseq
    %v3105 = vshrl.u32 %v3104, 7
    %v3106 = vsub.s32 %v1801, %v3105
    %v3107 = vrot.slane %v2977, %v3106
    %v3108 = vlaneseq
    %v3109 = vshrl.u32 %v3108, 7
    %v3110 = vsub.s32 %v1801, %v3109
    %v3111 = vrot.slane %v2978, %v3110
    %v3112 = vlaneseq
    %v3113 = vshrl.u32 %v3112, 7
    %v3114 = vsub.s32 %v1801, %v3113
    %v3115 = vrot.slane %v2979, %v3114
    %v3116 = vlaneseq
    %v3117 = vshrl.u32 %v3116, 7
    %v3118 = vsub.s32 %v1801, %v3117
    %v3119 = vrot.slane %v2980, %v3118
    %v3120 = vlaneseq
    %v3121 = vshrl.u32 %v3120, 7
    %v3122 = vsub.s32 %v1801, %v3121
    %v3123 = vrot.slane %v2981, %v3122
    %v3124 = vlaneseq
    %v3125 = vshrl.u32 %v3124, 7
    %v3126 = vsub.s32 %v1801, %v3125
    %v3127 = vrot.slane %v2982, %v3126
    %v3128 = vsel %vm1834, %v3103, %v3099
    %v3129 = vsel %vm1836, %v3107, %v3128
    %v3130 = vsel %vm1838, %v3111, %v3129
    %v3131 = vsel %vm1840, %v3115, %v3130
    %v3132 = vsel %vm1842, %v3119, %v3131
    %v3133 = vsel %vm1844, %v3123, %v3132
    %v3134 = vsel %vm1846, %v3127, %v3133
    %3136 = vst.msk [vmem:[#allocation13] sm:$0xff] %vm374, %v3134
    // Predicated region
    $region98: #{fuckup_gcn_forward.1} parent=1 // pred_check
      _
    $region99: #{fuckup_gcn_forward.1} parent=1 // pred_check_branch
      %3138 = sbr.rel (0) target = $region101
    $region100: #{fuckup_gcn_forward.1} parent=1 // pred_region
      %s3140 = ssub.s32 32, 32
      %3141 = vsyncadd [#allocation6], %s3140
      %s3143 = sshll.u32 [#allocation10], 4
      %s3144 = int_to_ptr.vmem [resolvable:$true] %s3143
      %3146 = dma.vmem_to_hbm [thread:$0]  %s3144, 32, %s21, [#allocation6]
    $region101: #{fuckup_gcn_forward.1} parent=1 // pred_fallthru
      _
    // Predicated region
    $region102: #{fuckup_gcn_forward.1} parent=1 // pred_check
      _
    $region103: #{fuckup_gcn_forward.1} parent=1 // pred_check_branch
      %3148 = sbr.rel (0) target = $region105
    $region104: #{fuckup_gcn_forward.1} parent=1 // pred_region
      %s3150 = ssub.s32 32, 32
      %3151 = vsyncadd [#allocation12], %s3150
      %s3153 = sshll.u32 [#allocation11], 4
      %s3154 = int_to_ptr.vmem [resolvable:$true] %s3153
      %3156 = dma.vmem_to_hbm [thread:$0]  %s3154, 32, %s22, [#allocation12]
    $region105: #{fuckup_gcn_forward.1} parent=1 // pred_fallthru
      _
    // Predicated region
    $region106: #{fuckup_gcn_forward.1} parent=1 // pred_check
      _
    $region107: #{fuckup_gcn_forward.1} parent=1 // pred_check_branch
      %3158 = sbr.rel (0) target = $region109
    $region108: #{fuckup_gcn_forward.1} parent=1 // pred_region
      %s3160 = ssub.s32 128, 128
      %3161 = vsyncadd [#allocation12], %s3160
      %s3163 = sshll.u32 [#allocation13], 4
      %s3164 = int_to_ptr.vmem [resolvable:$true] %s3163
      %3166 = dma.vmem_to_hbm [thread:$0]  %s3164, 128, %s23, [#allocation12]
    $region109: #{fuckup_gcn_forward.1} parent=1 // pred_fallthru
      _
    // Predicated region
    $region110: #{fuckup_gcn_forward.1} parent=1 // pred_check
      _
    $region111: #{fuckup_gcn_forward.1} parent=1 // pred_check_branch
      %3168 = sbr.rel (0) target = $region113
    $region112: #{fuckup_gcn_forward.1} parent=1 // pred_region
      %3169 = dma.done [#allocation6], 32
    $region113: #{fuckup_gcn_forward.1} parent=1 // pred_fallthru
      _
    // Predicated region
    $region114: #{fuckup_gcn_forward.1} parent=1 // pred_check
      _
    $region115: #{fuckup_gcn_forward.1} parent=1 // pred_check_branch
      %3171 = sbr.rel (0) target = $region117
    $region116: #{fuckup_gcn_forward.1} parent=1 // pred_region
      %3172 = dma.done [#allocation12], 32
    $region117: #{fuckup_gcn_forward.1} parent=1 // pred_fallthru
      _
    // Predicated region
    $region118: #{fuckup_gcn_forward.1} parent=1 // pred_check
      _
    $region119: #{fuckup_gcn_forward.1} parent=1 // pred_check_branch
      %3174 = sbr.rel (0) target = $region121
    $region120: #{fuckup_gcn_forward.1} parent=1 // pred_region
      %3175 = dma.done [#allocation12], 128
    $region121: #{fuckup_gcn_forward.1} parent=1 // pred_fallthru
      _
    %3176 = vsyncpa [#allocation5], 1
    %3177 = vsyncpa [#allocation8], 1
    %3178 = vsyncpa [#allocation6], 1
    %3179 = vsyncpa [#allocation12], 1

</llo_original>
